<compile_context>
chip_gen: v6e
topology: v6e:2x2x1
jax: 0.10.0
libtpu: 0.0.40
codegen_flags: <defaults>
</compile_context>

<pallas_src>
import functools

import jax
import jax.numpy as jnp
import numpy as np
from jax.experimental import pallas as pl
from jax.experimental.pallas import tpu as pltpu

VMEM_LIMIT = 32 * 1024 * 1024   # safe on v5e/v6e (128 MiB) and v7x (64 MiB)
KSIZE = 5
HP1, WP1, O1 = 14, 14, 6        # conv1 pooled output (h, w, c)
HP2, WP2, O2 = 5, 5, 16         # conv2 pooled output (h, w, c)
HP1_PAD, HP2_PAD = 16, 8        # pooled-row counts padded to a multiple of 8


# ----------------------------------------------------------------------------
# Kernel 1: fused conv (VALID, stride 1) + bias + relu + 2x2 maxpool (stride 2)
# ----------------------------------------------------------------------------
def _conv_relu_pool_kernel(xr_ref, wexp_ref, bexp_ref, o_ref, *, ksize, hp_pad):
    """Conv + bias + relu + 2x2 maxpool for a tile of TB images.

    xr_ref   : [TB, 2, T, W*C]    row-parity-split input, (w, c) fused in lanes
    wexp_ref : [2, k, W*C, WP*O]  Toeplitz-expanded weights, indexed [q, di]
    bexp_ref : [1, WP*O]          bias tiled over pooled output columns
    o_ref    : [TB*hp_pad, WP*O]  pooled output, rows = (image, pooled row)
    """
    tb = xr_ref.shape[0]
    wc = xr_ref.shape[3]
    m = tb * hp_pad

    # 6 row-shifted views (e = p + di in [0, k]); shared by all 4 pooling
    # quadrants.  hp_pad is a multiple of 8, so flattening (TB, hp_pad) into the
    # matmul M dimension is a layout-preserving relabeling (no data movement).
    views = []
    for e in range(ksize + 1):
        v = xr_ref[:, e % 2, (e // 2):(e // 2) + hp_pad, :]   # [TB, hp_pad, W*C]
        views.append(v.reshape(m, wc))

    wmats = [[wexp_ref[q, di] for di in range(ksize)] for q in range(2)]

    acc = None
    for p in range(2):            # pooling-window row offset
        for q in range(2):        # pooling-window col offset (baked into weights)
            z = None
            for di in range(ksize):
                y = jnp.dot(views[p + di], wmats[q][di],
                            preferred_element_type=jnp.float32)
                z = y if z is None else z + y
            acc = z if acc is None else jnp.maximum(acc, z)

    # bias-add + relu commute with the max over the 2x2 pooling window
    o_ref[...] = jnp.maximum(acc + bexp_ref[...], 0.0).astype(o_ref.dtype)


def conv_relu_pool(xr, wexp, bexp, *, hp_pad, block_b):
    """xr: [B, 2, T, W*C] -> pooled relu(conv) as [B*hp_pad, WP*O]."""
    B = xr.shape[0]
    T, WC = xr.shape[2], xr.shape[3]
    JO = wexp.shape[3]
    kernel = functools.partial(_conv_relu_pool_kernel, ksize=KSIZE, hp_pad=hp_pad)
    return pl.pallas_call(
        kernel,
        out_shape=jax.ShapeDtypeStruct((B * hp_pad, JO), jnp.float32),
        grid=(pl.cdiv(B, block_b),),
        in_specs=[
            pl.BlockSpec((block_b, 2, T, WC), lambda i: (i, 0, 0, 0)),
            pl.BlockSpec(tuple(wexp.shape), lambda i: (0, 0, 0, 0)),
            pl.BlockSpec((1, JO), lambda i: (0, 0)),
        ],
        out_specs=pl.BlockSpec((block_b * hp_pad, JO), lambda i: (i, 0)),
        compiler_params=pltpu.CompilerParams(
            dimension_semantics=("parallel",),
            vmem_limit_bytes=VMEM_LIMIT),
    )(xr, wexp, bexp)


# ----------------------------------------------------------------------------
# Kernel 2: fused FC head  fc1 -> relu -> fc2 -> relu -> fc3, packed output
# ----------------------------------------------------------------------------
def _fc_head_kernel(x_ref, w1_ref, b1_ref, w2_ref, b2_ref, w3_ref, b3_ref,
                    out_ref, *, nc, f2, pad_to):
    x = x_ref[...]
    h1 = jnp.maximum(
        jnp.dot(x, w1_ref[...], preferred_element_type=jnp.float32) + b1_ref[...], 0.0)
    h2 = jnp.maximum(
        jnp.dot(h1, w2_ref[...], preferred_element_type=jnp.float32) + b2_ref[...], 0.0)
    logits = jnp.dot(h2, w3_ref[...], preferred_element_type=jnp.float32) + b3_ref[...]
    pieces = [logits, h2]
    pad = pad_to - nc - f2
    if pad:
        pieces.append(jnp.zeros((x.shape[0], pad), jnp.float32))
    # single lane-dense (multiple-of-128) packed store: [logits | feature | 0-pad]
    out_ref[...] = jnp.concatenate(pieces, axis=-1).astype(out_ref.dtype)


def fc_head(x, w1, b1, w2, b2, w3, b3, *, block_m):
    B, K1 = x.shape
    F1, F2, NC = w1.shape[1], w2.shape[1], w3.shape[1]
    pad_to = ((NC + F2 + 127) // 128) * 128
    row = lambda i: (i, 0)
    full = lambda i: (0, 0)
    kernel = functools.partial(_fc_head_kernel, nc=NC, f2=F2, pad_to=pad_to)
    packed = pl.pallas_call(
        kernel,
        out_shape=jax.ShapeDtypeStruct((B, pad_to), jnp.float32),
        grid=(pl.cdiv(B, block_m),),
        in_specs=[pl.BlockSpec((block_m, K1), row),
                  pl.BlockSpec((K1, F1), full), pl.BlockSpec((1, F1), full),
                  pl.BlockSpec((F1, F2), full), pl.BlockSpec((1, F2), full),
                  pl.BlockSpec((F2, NC), full), pl.BlockSpec((1, NC), full)],
        out_specs=pl.BlockSpec((block_m, pad_to), row),
        compiler_params=pltpu.CompilerParams(
            dimension_semantics=("parallel",),
            vmem_limit_bytes=VMEM_LIMIT),
    )(x, w1, b1.reshape(1, F1), w2, b2.reshape(1, F2), w3, b3.reshape(1, NC))
    return packed[:, :NC], packed[:, NC:NC + F2]


# ----------------------------------------------------------------------------
# Tile pickers (>= 2 grid steps when possible for v7x's 2 TensorCores)
# ----------------------------------------------------------------------------
def _conv_batch_tile(B, max_tile=32):
    return max(1, min(max_tile, pl.cdiv(B, 2), B))


def _fc_batch_tile(B, max_tile=256):
    if B <= 8:
        return B                       # block equals the full batch dim (allowed)
    return max(8, min(max_tile, (B // 2) // 8 * 8))


# ----------------------------------------------------------------------------
# XLA-side glue (tiny, free-ish): row padding + row-parity split
# ----------------------------------------------------------------------------
def _row_parity_stack(x3d, h_pad):
    """[B, H, W*C] -> [B, 2, h_pad//2, W*C]: zero-pad rows, split by row parity."""
    B, H, WC = x3d.shape
    x3d = jnp.pad(x3d, ((0, 0), (0, h_pad - H), (0, 0)))
    return jnp.stack([x3d[:, 0::2, :], x3d[:, 1::2, :]], axis=1)


# ----------------------------------------------------------------------------
# Parameters (PyTorch-convention shapes) + one-time kernel-layout prep
# ----------------------------------------------------------------------------
def init_params(num_classes=10):
    key = jax.random.PRNGKey(0)
    ks = jax.random.split(key, 10)

    def w(k, shape, fan_in):
        return jax.random.normal(k, shape, jnp.float32) / jnp.sqrt(fan_in)

    return {
        "conv1_w": w(ks[0], (6, 3, 5, 5), 3 * 25),
        "conv1_b": w(ks[1], (6,), 3 * 25),
        "conv2_w": w(ks[2], (16, 6, 5, 5), 6 * 25),
        "conv2_b": w(ks[3], (16,), 6 * 25),
        "fc1_w": w(ks[4], (120, 400), 400),   # [out, in] like nn.Linear
        "fc1_b": w(ks[5], (120,), 400),
        "fc2_w": w(ks[6], (84, 120), 120),
        "fc2_b": w(ks[7], (84,), 120),
        "fc3_w": w(ks[8], (num_classes, 84), 84),
        "fc3_b": w(ks[9], (num_classes,), 84),
    }


def _expand_conv_weight(w_ockk, in_w, out_w):
    """[O, C, k, k] (torch layout) -> [2, k, in_w*C, out_w*O] Toeplitz weights.

    m[q, di, w*C + c, j*O + o] = w[o, c, di, w - (2j + q)] when the kernel column
    dj = w - 2j - q lies in [0, k); zero otherwise.  Contracting a (w, c)-fused
    input row against m[q, di] evaluates, for all pooled output columns j at
    once, the conv at image column 2j+q and row tap di.
    """
    w = np.asarray(w_ockk, np.float32)
    o_ch, c_ch, k, _ = w.shape
    m = np.zeros((2, k, in_w * c_ch, out_w * o_ch), np.float32)
    for q in range(2):
        for di in range(k):
            for j in range(out_w):
                for dj in range(k):
                    win = 2 * j + q + dj
                    m[q, di, win * c_ch:(win + 1) * c_ch,
                      j * o_ch:(j + 1) * o_ch] = w[:, :, di, dj].T
    return jnp.asarray(m)


def _pad_permute_fc1(fc1_w):
    """torch fc1 [120, 400] ((c,h,w) flatten) -> [HP2_PAD*WP2*O2, 120] = [640, 120].

    Rows follow the conv2-kernel output order (i, j, o) with i padded to HP2_PAD;
    rows for padded i >= 5 are zero, so the FC kernel consumes the padded
    [B, 640] activation directly (no slice / relayout pass, 640 = 5 lane tiles).
    """
    w = np.asarray(fc1_w, np.float32)
    f_out = w.shape[0]
    m = np.zeros((HP2_PAD * WP2 * O2, f_out), np.float32)
    for i in range(HP2):
        for j in range(WP2):
            for o in range(O2):
                m[i * (WP2 * O2) + j * O2 + o, :] = w[:, o * (HP2 * WP2) + i * WP2 + j]
    return jnp.asarray(m)


def prepare_params(p):
    return {
        "w1exp": _expand_conv_weight(p["conv1_w"], in_w=32, out_w=WP1),
        "b1exp": jnp.tile(p["conv1_b"], WP1).reshape(1, WP1 * O1),
        "w2exp": _expand_conv_weight(p["conv2_w"], in_w=WP1, out_w=WP2),
        "b2exp": jnp.tile(p["conv2_b"], WP2).reshape(1, WP2 * O2),
        "fc1p": _pad_permute_fc1(p["fc1_w"]),
        "fc1_b": p["fc1_b"],
        "fc2t": p["fc2_w"].T,
        "fc2_b": p["fc2_b"],
        "fc3t": p["fc3_w"].T,
        "fc3_b": p["fc3_b"],
    }


# ----------------------------------------------------------------------------
# Forward pass (mirrors CNN_torch.forward)
# ----------------------------------------------------------------------------
def cnn_forward(x_nchw, kp, return_features=False):
    B, C, H, W = x_nchw.shape
    assert (C, H, W) == (3, 32, 32), "CNN_torch expects 3x32x32 inputs"
    tb = _conv_batch_tile(B)

    # conv1: NHWC with (w, c) fused in lanes, row-parity split (H padded to 36)
    x = jnp.transpose(x_nchw, (0, 2, 3, 1)).reshape(B, H, W * C)
    xr1 = _row_parity_stack(x, h_pad=2 * HP1_PAD + 4)                 # [B,2,18,96]
    o1 = conv_relu_pool(xr1, kp["w1exp"], kp["b1exp"],
                        hp_pad=HP1_PAD, block_b=tb)                   # [B*16, 84]

    # conv2: pooled1 valid rows, row-parity split (H padded to 20)
    p1 = o1.reshape(B, HP1_PAD, WP1 * O1)[:, :HP1, :]                 # [B,14,84]
    xr2 = _row_parity_stack(p1, h_pad=2 * HP2_PAD + 4)                # [B,2,10,84]
    o2 = conv_relu_pool(xr2, kp["w2exp"], kp["b2exp"],
                        hp_pad=HP2_PAD, block_b=tb)                   # [B*8, 80]

    # fc head: free reshape to [B, 640]; fc1 weights pre-permuted/zero-padded
    xfc = o2.reshape(B, HP2_PAD * WP2 * O2)                           # [B, 640]
    logits, feature = fc_head(xfc, kp["fc1p"], kp["fc1_b"],
                              kp["fc2t"], kp["fc2_b"],
                              kp["fc3t"], kp["fc3_b"],
                              block_m=_fc_batch_tile(B))
    return (logits, feature) if return_features else logits


# ----------------------------------------------------------------------------
# Pure-JAX reference of the PyTorch module (for correctness check only)
# ----------------------------------------------------------------------------
def reference_forward(x_nchw, p):
    x = jnp.transpose(x_nchw, (0, 2, 3, 1))

    def conv_relu(x, w, b):
        wt = jnp.transpose(w, (2, 3, 1, 0))      # OIHW -> HWIO
        y = jax.lax.conv_general_dilated(
            x, wt, window_strides=(1, 1), padding="VALID",
            dimension_numbers=("NHWC", "HWIO", "NHWC"))
        return jax.nn.relu(y + b)

    def pool(x):
        return jax.lax.reduce_window(x, -jnp.inf, jax.lax.max,
                                     (1, 2, 2, 1), (1, 2, 2, 1), "VALID")

    x = pool(conv_relu(x, p["conv1_w"], p["conv1_b"]))
    x = pool(conv_relu(x, p["conv2_w"], p["conv2_b"]))
    x = jnp.transpose(x, (0, 3, 1, 2)).reshape(x.shape[0], -1)   # torch flatten order
    h1 = jax.nn.relu(x @ p["fc1_w"].T + p["fc1_b"])
    h2 = jax.nn.relu(h1 @ p["fc2_w"].T + p["fc2_b"])
    logits = h2 @ p["fc3_w"].T + p["fc3_b"]
    return logits, h2


# ----------------------------------------------------------------------------
if __name__ == "__main__":
    num_classes = 10
    torch_params = init_params(num_classes=num_classes)
    params = prepare_params(torch_params)

    x = jax.random.normal(jax.random.PRNGKey(0), (8, 3, 32, 32), jnp.float32)

    fwd = jax.jit(functools.partial(cnn_forward, return_features=True))
    logits, feats = fwd(x, params)
    jax.block_until_ready((logits, feats))

    assert logits.shape == (8, num_classes), logits.shape
    assert feats.shape == (8, 84), feats.shape
    assert bool(jnp.all(jnp.isfinite(logits)))
    assert bool(jnp.all(jnp.isfinite(feats)))

    # numerical parity with the PyTorch-module semantics
    ref_logits, ref_feats = jax.jit(reference_forward)(x, torch_params)
    np.testing.assert_allclose(np.asarray(logits), np.asarray(ref_logits),
                               rtol=2e-3, atol=2e-3)
    np.testing.assert_allclose(np.asarray(feats), np.asarray(ref_feats),
                               rtol=2e-3, atol=2e-3)
    print("KERNEL_OK")
</pallas_src>

<mosaic_0001>
module attributes {stable_mosaic.version = 11 : i64} {
  func.func @_conv_relu_pool_kernel(%arg0: i32, %arg1: memref<4x2x18x96xf32, #tpu.memory_space<vmem>>, %arg2: memref<2x5x96x84xf32, #tpu.memory_space<vmem>>, %arg3: memref<1x84xf32, #tpu.memory_space<vmem>>, %arg4: memref<64x84xf32, #tpu.memory_space<vmem>>) attributes {dimension_semantics = [#tpu.dimension_semantics<parallel>], iteration_bounds = array<i64: 2>, scalar_prefetch = 0 : i64, scratch_operands = 0 : i64, tpu.core_type = #tpu.core_type<tc>, window_params = [{transform_indices = @transform_0, window_bounds = array<i64: 4, 2, 18, 96>}, {pipeline_mode = #tpu.pipeline_mode<synchronous>, transform_indices = @transform_1, window_bounds = array<i64: 2, 5, 96, 84>}, {pipeline_mode = #tpu.pipeline_mode<synchronous>, transform_indices = @transform_2, window_bounds = array<i64: 1, 84>}, {transform_indices = @transform_3, window_bounds = array<i64: 64, 84>}]} {
    %c0 = arith.constant 0 : index
    %c0_0 = arith.constant 0 : index
    %c0_1 = arith.constant 0 : index
    %c0_2 = arith.constant 0 : index
    %0 = vector.load %arg1[%c0, %c0_0, %c0_1, %c0_2] : memref<4x2x18x96xf32, #tpu.memory_space<vmem>>, vector<4x1x16x96xf32>
    %1 = vector.shape_cast %0 : vector<4x1x16x96xf32> to vector<4x16x96xf32>
    %2 = vector.shape_cast %1 : vector<4x16x96xf32> to vector<64x96xf32>
    %c0_3 = arith.constant 0 : index
    %c1 = arith.constant 1 : index
    %c0_4 = arith.constant 0 : index
    %c0_5 = arith.constant 0 : index
    %3 = vector.load %arg1[%c0_3, %c1, %c0_4, %c0_5] : memref<4x2x18x96xf32, #tpu.memory_space<vmem>>, vector<4x1x16x96xf32>
    %4 = vector.shape_cast %3 : vector<4x1x16x96xf32> to vector<4x16x96xf32>
    %5 = vector.shape_cast %4 : vector<4x16x96xf32> to vector<64x96xf32>
    %c0_6 = arith.constant 0 : index
    %c0_7 = arith.constant 0 : index
    %c1_8 = arith.constant 1 : index
    %c0_9 = arith.constant 0 : index
    %6 = vector.load %arg1[%c0_6, %c0_7, %c1_8, %c0_9] : memref<4x2x18x96xf32, #tpu.memory_space<vmem>>, vector<4x1x16x96xf32>
    %7 = vector.shape_cast %6 : vector<4x1x16x96xf32> to vector<4x16x96xf32>
    %8 = vector.shape_cast %7 : vector<4x16x96xf32> to vector<64x96xf32>
    %c0_10 = arith.constant 0 : index
    %c1_11 = arith.constant 1 : index
    %c1_12 = arith.constant 1 : index
    %c0_13 = arith.constant 0 : index
    %9 = vector.load %arg1[%c0_10, %c1_11, %c1_12, %c0_13] : memref<4x2x18x96xf32, #tpu.memory_space<vmem>>, vector<4x1x16x96xf32>
    %10 = vector.shape_cast %9 : vector<4x1x16x96xf32> to vector<4x16x96xf32>
    %11 = vector.shape_cast %10 : vector<4x16x96xf32> to vector<64x96xf32>
    %c0_14 = arith.constant 0 : index
    %c0_15 = arith.constant 0 : index
    %c2 = arith.constant 2 : index
    %c0_16 = arith.constant 0 : index
    %12 = vector.load %arg1[%c0_14, %c0_15, %c2, %c0_16] : memref<4x2x18x96xf32, #tpu.memory_space<vmem>>, vector<4x1x16x96xf32>
    %13 = vector.shape_cast %12 : vector<4x1x16x96xf32> to vector<4x16x96xf32>
    %14 = vector.shape_cast %13 : vector<4x16x96xf32> to vector<64x96xf32>
    %c0_17 = arith.constant 0 : index
    %c1_18 = arith.constant 1 : index
    %c2_19 = arith.constant 2 : index
    %c0_20 = arith.constant 0 : index
    %15 = vector.load %arg1[%c0_17, %c1_18, %c2_19, %c0_20] : memref<4x2x18x96xf32, #tpu.memory_space<vmem>>, vector<4x1x16x96xf32>
    %16 = vector.shape_cast %15 : vector<4x1x16x96xf32> to vector<4x16x96xf32>
    %17 = vector.shape_cast %16 : vector<4x16x96xf32> to vector<64x96xf32>
    %c0_21 = arith.constant 0 : index
    %c0_22 = arith.constant 0 : index
    %c0_23 = arith.constant 0 : index
    %c0_24 = arith.constant 0 : index
    %18 = vector.load %arg2[%c0_21, %c0_22, %c0_23, %c0_24] : memref<2x5x96x84xf32, #tpu.memory_space<vmem>>, vector<1x1x96x84xf32>
    %19 = vector.shape_cast %18 : vector<1x1x96x84xf32> to vector<96x84xf32>
    %c0_25 = arith.constant 0 : index
    %c1_26 = arith.constant 1 : index
    %c0_27 = arith.constant 0 : index
    %c0_28 = arith.constant 0 : index
    %20 = vector.load %arg2[%c0_25, %c1_26, %c0_27, %c0_28] : memref<2x5x96x84xf32, #tpu.memory_space<vmem>>, vector<1x1x96x84xf32>
    %21 = vector.shape_cast %20 : vector<1x1x96x84xf32> to vector<96x84xf32>
    %c0_29 = arith.constant 0 : index
    %c2_30 = arith.constant 2 : index
    %c0_31 = arith.constant 0 : index
    %c0_32 = arith.constant 0 : index
    %22 = vector.load %arg2[%c0_29, %c2_30, %c0_31, %c0_32] : memref<2x5x96x84xf32, #tpu.memory_space<vmem>>, vector<1x1x96x84xf32>
    %23 = vector.shape_cast %22 : vector<1x1x96x84xf32> to vector<96x84xf32>
    %c0_33 = arith.constant 0 : index
    %c3 = arith.constant 3 : index
    %c0_34 = arith.constant 0 : index
    %c0_35 = arith.constant 0 : index
    %24 = vector.load %arg2[%c0_33, %c3, %c0_34, %c0_35] : memref<2x5x96x84xf32, #tpu.memory_space<vmem>>, vector<1x1x96x84xf32>
    %25 = vector.shape_cast %24 : vector<1x1x96x84xf32> to vector<96x84xf32>
    %c0_36 = arith.constant 0 : index
    %c4 = arith.constant 4 : index
    %c0_37 = arith.constant 0 : index
    %c0_38 = arith.constant 0 : index
    %26 = vector.load %arg2[%c0_36, %c4, %c0_37, %c0_38] : memref<2x5x96x84xf32, #tpu.memory_space<vmem>>, vector<1x1x96x84xf32>
    %27 = vector.shape_cast %26 : vector<1x1x96x84xf32> to vector<96x84xf32>
    %c1_39 = arith.constant 1 : index
    %c0_40 = arith.constant 0 : index
    %c0_41 = arith.constant 0 : index
    %c0_42 = arith.constant 0 : index
    %28 = vector.load %arg2[%c1_39, %c0_40, %c0_41, %c0_42] : memref<2x5x96x84xf32, #tpu.memory_space<vmem>>, vector<1x1x96x84xf32>
    %29 = vector.shape_cast %28 : vector<1x1x96x84xf32> to vector<96x84xf32>
    %c1_43 = arith.constant 1 : index
    %c1_44 = arith.constant 1 : index
    %c0_45 = arith.constant 0 : index
    %c0_46 = arith.constant 0 : index
    %30 = vector.load %arg2[%c1_43, %c1_44, %c0_45, %c0_46] : memref<2x5x96x84xf32, #tpu.memory_space<vmem>>, vector<1x1x96x84xf32>
    %31 = vector.shape_cast %30 : vector<1x1x96x84xf32> to vector<96x84xf32>
    %c1_47 = arith.constant 1 : index
    %c2_48 = arith.constant 2 : index
    %c0_49 = arith.constant 0 : index
    %c0_50 = arith.constant 0 : index
    %32 = vector.load %arg2[%c1_47, %c2_48, %c0_49, %c0_50] : memref<2x5x96x84xf32, #tpu.memory_space<vmem>>, vector<1x1x96x84xf32>
    %33 = vector.shape_cast %32 : vector<1x1x96x84xf32> to vector<96x84xf32>
    %c1_51 = arith.constant 1 : index
    %c3_52 = arith.constant 3 : index
    %c0_53 = arith.constant 0 : index
    %c0_54 = arith.constant 0 : index
    %34 = vector.load %arg2[%c1_51, %c3_52, %c0_53, %c0_54] : memref<2x5x96x84xf32, #tpu.memory_space<vmem>>, vector<1x1x96x84xf32>
    %35 = vector.shape_cast %34 : vector<1x1x96x84xf32> to vector<96x84xf32>
    %c1_55 = arith.constant 1 : index
    %c4_56 = arith.constant 4 : index
    %c0_57 = arith.constant 0 : index
    %c0_58 = arith.constant 0 : index
    %36 = vector.load %arg2[%c1_55, %c4_56, %c0_57, %c0_58] : memref<2x5x96x84xf32, #tpu.memory_space<vmem>>, vector<1x1x96x84xf32>
    %37 = vector.shape_cast %36 : vector<1x1x96x84xf32> to vector<96x84xf32>
    %cst = arith.constant dense<0.000000e+00> : vector<64x84xf32>
    %38 = tpu.matmul %2, %19, %cst {dimension_numbers = #tpu.dot_dimension_numbers<[1], [0], [0], [1], [0, 0, 1, 1], [], []>} : vector<64x96xf32>, vector<96x84xf32>, vector<64x84xf32> -> vector<64x84xf32>
    %cst_59 = arith.constant dense<0.000000e+00> : vector<64x84xf32>
    %39 = tpu.matmul %5, %21, %cst_59 {dimension_numbers = #tpu.dot_dimension_numbers<[1], [0], [0], [1], [0, 0, 1, 1], [], []>} : vector<64x96xf32>, vector<96x84xf32>, vector<64x84xf32> -> vector<64x84xf32>
    %40 = arith.addf %38, %39 : vector<64x84xf32>
    %cst_60 = arith.constant dense<0.000000e+00> : vector<64x84xf32>
    %41 = tpu.matmul %8, %23, %cst_60 {dimension_numbers = #tpu.dot_dimension_numbers<[1], [0], [0], [1], [0, 0, 1, 1], [], []>} : vector<64x96xf32>, vector<96x84xf32>, vector<64x84xf32> -> vector<64x84xf32>
    %42 = arith.addf %40, %41 : vector<64x84xf32>
    %cst_61 = arith.constant dense<0.000000e+00> : vector<64x84xf32>
    %43 = tpu.matmul %11, %25, %cst_61 {dimension_numbers = #tpu.dot_dimension_numbers<[1], [0], [0], [1], [0, 0, 1, 1], [], []>} : vector<64x96xf32>, vector<96x84xf32>, vector<64x84xf32> -> vector<64x84xf32>
    %44 = arith.addf %42, %43 : vector<64x84xf32>
    %cst_62 = arith.constant dense<0.000000e+00> : vector<64x84xf32>
    %45 = tpu.matmul %14, %27, %cst_62 {dimension_numbers = #tpu.dot_dimension_numbers<[1], [0], [0], [1], [0, 0, 1, 1], [], []>} : vector<64x96xf32>, vector<96x84xf32>, vector<64x84xf32> -> vector<64x84xf32>
    %46 = arith.addf %44, %45 : vector<64x84xf32>
    %cst_63 = arith.constant dense<0.000000e+00> : vector<64x84xf32>
    %47 = tpu.matmul %2, %29, %cst_63 {dimension_numbers = #tpu.dot_dimension_numbers<[1], [0], [0], [1], [0, 0, 1, 1], [], []>} : vector<64x96xf32>, vector<96x84xf32>, vector<64x84xf32> -> vector<64x84xf32>
    %cst_64 = arith.constant dense<0.000000e+00> : vector<64x84xf32>
    %48 = tpu.matmul %5, %31, %cst_64 {dimension_numbers = #tpu.dot_dimension_numbers<[1], [0], [0], [1], [0, 0, 1, 1], [], []>} : vector<64x96xf32>, vector<96x84xf32>, vector<64x84xf32> -> vector<64x84xf32>
    %49 = arith.addf %47, %48 : vector<64x84xf32>
    %cst_65 = arith.constant dense<0.000000e+00> : vector<64x84xf32>
    %50 = tpu.matmul %8, %33, %cst_65 {dimension_numbers = #tpu.dot_dimension_numbers<[1], [0], [0], [1], [0, 0, 1, 1], [], []>} : vector<64x96xf32>, vector<96x84xf32>, vector<64x84xf32> -> vector<64x84xf32>
    %51 = arith.addf %49, %50 : vector<64x84xf32>
    %cst_66 = arith.constant dense<0.000000e+00> : vector<64x84xf32>
    %52 = tpu.matmul %11, %35, %cst_66 {dimension_numbers = #tpu.dot_dimension_numbers<[1], [0], [0], [1], [0, 0, 1, 1], [], []>} : vector<64x96xf32>, vector<96x84xf32>, vector<64x84xf32> -> vector<64x84xf32>
    %53 = arith.addf %51, %52 : vector<64x84xf32>
    %cst_67 = arith.constant dense<0.000000e+00> : vector<64x84xf32>
    %54 = tpu.matmul %14, %37, %cst_67 {dimension_numbers = #tpu.dot_dimension_numbers<[1], [0], [0], [1], [0, 0, 1, 1], [], []>} : vector<64x96xf32>, vector<96x84xf32>, vector<64x84xf32> -> vector<64x84xf32>
    %55 = arith.addf %53, %54 : vector<64x84xf32>
    %56 = arith.maximumf %46, %55 : vector<64x84xf32>
    %cst_68 = arith.constant dense<0.000000e+00> : vector<64x84xf32>
    %57 = tpu.matmul %5, %19, %cst_68 {dimension_numbers = #tpu.dot_dimension_numbers<[1], [0], [0], [1], [0, 0, 1, 1], [], []>} : vector<64x96xf32>, vector<96x84xf32>, vector<64x84xf32> -> vector<64x84xf32>
    %cst_69 = arith.constant dense<0.000000e+00> : vector<64x84xf32>
    %58 = tpu.matmul %8, %21, %cst_69 {dimension_numbers = #tpu.dot_dimension_numbers<[1], [0], [0], [1], [0, 0, 1, 1], [], []>} : vector<64x96xf32>, vector<96x84xf32>, vector<64x84xf32> -> vector<64x84xf32>
    %59 = arith.addf %57, %58 : vector<64x84xf32>
    %cst_70 = arith.constant dense<0.000000e+00> : vector<64x84xf32>
    %60 = tpu.matmul %11, %23, %cst_70 {dimension_numbers = #tpu.dot_dimension_numbers<[1], [0], [0], [1], [0, 0, 1, 1], [], []>} : vector<64x96xf32>, vector<96x84xf32>, vector<64x84xf32> -> vector<64x84xf32>
    %61 = arith.addf %59, %60 : vector<64x84xf32>
    %cst_71 = arith.constant dense<0.000000e+00> : vector<64x84xf32>
    %62 = tpu.matmul %14, %25, %cst_71 {dimension_numbers = #tpu.dot_dimension_numbers<[1], [0], [0], [1], [0, 0, 1, 1], [], []>} : vector<64x96xf32>, vector<96x84xf32>, vector<64x84xf32> -> vector<64x84xf32>
    %63 = arith.addf %61, %62 : vector<64x84xf32>
    %cst_72 = arith.constant dense<0.000000e+00> : vector<64x84xf32>
    %64 = tpu.matmul %17, %27, %cst_72 {dimension_numbers = #tpu.dot_dimension_numbers<[1], [0], [0], [1], [0, 0, 1, 1], [], []>} : vector<64x96xf32>, vector<96x84xf32>, vector<64x84xf32> -> vector<64x84xf32>
    %65 = arith.addf %63, %64 : vector<64x84xf32>
    %66 = arith.maximumf %56, %65 : vector<64x84xf32>
    %cst_73 = arith.constant dense<0.000000e+00> : vector<64x84xf32>
    %67 = tpu.matmul %5, %29, %cst_73 {dimension_numbers = #tpu.dot_dimension_numbers<[1], [0], [0], [1], [0, 0, 1, 1], [], []>} : vector<64x96xf32>, vector<96x84xf32>, vector<64x84xf32> -> vector<64x84xf32>
    %cst_74 = arith.constant dense<0.000000e+00> : vector<64x84xf32>
    %68 = tpu.matmul %8, %31, %cst_74 {dimension_numbers = #tpu.dot_dimension_numbers<[1], [0], [0], [1], [0, 0, 1, 1], [], []>} : vector<64x96xf32>, vector<96x84xf32>, vector<64x84xf32> -> vector<64x84xf32>
    %69 = arith.addf %67, %68 : vector<64x84xf32>
    %cst_75 = arith.constant dense<0.000000e+00> : vector<64x84xf32>
    %70 = tpu.matmul %11, %33, %cst_75 {dimension_numbers = #tpu.dot_dimension_numbers<[1], [0], [0], [1], [0, 0, 1, 1], [], []>} : vector<64x96xf32>, vector<96x84xf32>, vector<64x84xf32> -> vector<64x84xf32>
    %71 = arith.addf %69, %70 : vector<64x84xf32>
    %cst_76 = arith.constant dense<0.000000e+00> : vector<64x84xf32>
    %72 = tpu.matmul %14, %35, %cst_76 {dimension_numbers = #tpu.dot_dimension_numbers<[1], [0], [0], [1], [0, 0, 1, 1], [], []>} : vector<64x96xf32>, vector<96x84xf32>, vector<64x84xf32> -> vector<64x84xf32>
    %73 = arith.addf %71, %72 : vector<64x84xf32>
    %cst_77 = arith.constant dense<0.000000e+00> : vector<64x84xf32>
    %74 = tpu.matmul %17, %37, %cst_77 {dimension_numbers = #tpu.dot_dimension_numbers<[1], [0], [0], [1], [0, 0, 1, 1], [], []>} : vector<64x96xf32>, vector<96x84xf32>, vector<64x84xf32> -> vector<64x84xf32>
    %75 = arith.addf %73, %74 : vector<64x84xf32>
    %76 = arith.maximumf %66, %75 : vector<64x84xf32>
    %c0_78 = arith.constant 0 : index
    %c0_79 = arith.constant 0 : index
    %77 = vector.load %arg3[%c0_78, %c0_79] : memref<1x84xf32, #tpu.memory_space<vmem>>, vector<1x84xf32>
    %78 = vector.broadcast %77 : vector<1x84xf32> to vector<64x84xf32>
    %79 = arith.addf %76, %78 : vector<64x84xf32>
    %cst_80 = arith.constant 0.000000e+00 : f32
    %80 = vector.broadcast %cst_80 : f32 to vector<64x84xf32>
    %81 = arith.maximumf %79, %80 : vector<64x84xf32>
    %c0_81 = arith.constant 0 : index
    %c0_82 = arith.constant 0 : index
    %82 = vector.load %arg4[%c0_81, %c0_82] : memref<64x84xf32, #tpu.memory_space<vmem>>, vector<64x84xf32>
    tpu.vector_store %arg4[%c0_81, %c0_82], %81 {strides = array<i32>} : memref<64x84xf32, #tpu.memory_space<vmem>>, vector<64x84xf32>,
    return
  }
  func.func @transform_0(%arg0: i32) -> (i32, i32, i32, i32) {
    %c0_i32 = arith.constant 0 : i32
    %c0_i32_0 = arith.constant 0 : i32
    %c0_i32_1 = arith.constant 0 : i32
    %c0_i32_2 = arith.constant 0 : i32
    return %arg0, %c0_i32, %c0_i32_0, %c0_i32_1 : i32, i32, i32, i32
  }
  func.func @transform_1(%arg0: i32) -> (i32, i32, i32, i32) {
    %c0_i32 = arith.constant 0 : i32
    %c0_i32_0 = arith.constant 0 : i32
    %c0_i32_1 = arith.constant 0 : i32
    %c0_i32_2 = arith.constant 0 : i32
    %c0_i32_3 = arith.constant 0 : i32
    return %c0_i32, %c0_i32_0, %c0_i32_1, %c0_i32_2 : i32, i32, i32, i32
  }
  func.func @transform_2(%arg0: i32) -> (i32, i32) {
    %c0_i32 = arith.constant 0 : i32
    %c0_i32_0 = arith.constant 0 : i32
    %c0_i32_1 = arith.constant 0 : i32
    return %c0_i32, %c0_i32_0 : i32, i32
  }
  func.func @transform_3(%arg0: i32) -> (i32, i32) {
    %c0_i32 = arith.constant 0 : i32
    %c0_i32_0 = arith.constant 0 : i32
    return %arg0, %c0_i32 : i32, i32
  }
}

module attributes {stable_mosaic.version = 11 : i64} {
  func.func @_conv_relu_pool_kernel(%arg0: i32, %arg1: memref<4x2x10x84xf32, #tpu.memory_space<vmem>>, %arg2: memref<2x5x84x80xf32, #tpu.memory_space<vmem>>, %arg3: memref<1x80xf32, #tpu.memory_space<vmem>>, %arg4: memref<32x80xf32, #tpu.memory_space<vmem>>) attributes {dimension_semantics = [#tpu.dimension_semantics<parallel>], iteration_bounds = array<i64: 2>, scalar_prefetch = 0 : i64, scratch_operands = 0 : i64, tpu.core_type = #tpu.core_type<tc>, window_params = [{transform_indices = @transform_0, window_bounds = array<i64: 4, 2, 10, 84>}, {pipeline_mode = #tpu.pipeline_mode<synchronous>, transform_indices = @transform_1, window_bounds = array<i64: 2, 5, 84, 80>}, {pipeline_mode = #tpu.pipeline_mode<synchronous>, transform_indices = @transform_2, window_bounds = array<i64: 1, 80>}, {transform_indices = @transform_3, window_bounds = array<i64: 32, 80>}]} {
    %c0 = arith.constant 0 : index
    %c0_0 = arith.constant 0 : index
    %c0_1 = arith.constant 0 : index
    %c0_2 = arith.constant 0 : index
    %0 = vector.load %arg1[%c0, %c0_0, %c0_1, %c0_2] : memref<4x2x10x84xf32, #tpu.memory_space<vmem>>, vector<4x1x8x84xf32>
    %1 = vector.shape_cast %0 : vector<4x1x8x84xf32> to vector<4x8x84xf32>
    %2 = vector.shape_cast %1 : vector<4x8x84xf32> to vector<32x84xf32>
    %c0_3 = arith.constant 0 : index
    %c1 = arith.constant 1 : index
    %c0_4 = arith.constant 0 : index
    %c0_5 = arith.constant 0 : index
    %3 = vector.load %arg1[%c0_3, %c1, %c0_4, %c0_5] : memref<4x2x10x84xf32, #tpu.memory_space<vmem>>, vector<4x1x8x84xf32>
    %4 = vector.shape_cast %3 : vector<4x1x8x84xf32> to vector<4x8x84xf32>
    %5 = vector.shape_cast %4 : vector<4x8x84xf32> to vector<32x84xf32>
    %c0_6 = arith.constant 0 : index
    %c0_7 = arith.constant 0 : index
    %c1_8 = arith.constant 1 : index
    %c0_9 = arith.constant 0 : index
    %6 = vector.load %arg1[%c0_6, %c0_7, %c1_8, %c0_9] : memref<4x2x10x84xf32, #tpu.memory_space<vmem>>, vector<4x1x8x84xf32>
    %7 = vector.shape_cast %6 : vector<4x1x8x84xf32> to vector<4x8x84xf32>
    %8 = vector.shape_cast %7 : vector<4x8x84xf32> to vector<32x84xf32>
    %c0_10 = arith.constant 0 : index
    %c1_11 = arith.constant 1 : index
    %c1_12 = arith.constant 1 : index
    %c0_13 = arith.constant 0 : index
    %9 = vector.load %arg1[%c0_10, %c1_11, %c1_12, %c0_13] : memref<4x2x10x84xf32, #tpu.memory_space<vmem>>, vector<4x1x8x84xf32>
    %10 = vector.shape_cast %9 : vector<4x1x8x84xf32> to vector<4x8x84xf32>
    %11 = vector.shape_cast %10 : vector<4x8x84xf32> to vector<32x84xf32>
    %c0_14 = arith.constant 0 : index
    %c0_15 = arith.constant 0 : index
    %c2 = arith.constant 2 : index
    %c0_16 = arith.constant 0 : index
    %12 = vector.load %arg1[%c0_14, %c0_15, %c2, %c0_16] : memref<4x2x10x84xf32, #tpu.memory_space<vmem>>, vector<4x1x8x84xf32>
    %13 = vector.shape_cast %12 : vector<4x1x8x84xf32> to vector<4x8x84xf32>
    %14 = vector.shape_cast %13 : vector<4x8x84xf32> to vector<32x84xf32>
    %c0_17 = arith.constant 0 : index
    %c1_18 = arith.constant 1 : index
    %c2_19 = arith.constant 2 : index
    %c0_20 = arith.constant 0 : index
    %15 = vector.load %arg1[%c0_17, %c1_18, %c2_19, %c0_20] : memref<4x2x10x84xf32, #tpu.memory_space<vmem>>, vector<4x1x8x84xf32>
    %16 = vector.shape_cast %15 : vector<4x1x8x84xf32> to vector<4x8x84xf32>
    %17 = vector.shape_cast %16 : vector<4x8x84xf32> to vector<32x84xf32>
    %c0_21 = arith.constant 0 : index
    %c0_22 = arith.constant 0 : index
    %c0_23 = arith.constant 0 : index
    %c0_24 = arith.constant 0 : index
    %18 = vector.load %arg2[%c0_21, %c0_22, %c0_23, %c0_24] : memref<2x5x84x80xf32, #tpu.memory_space<vmem>>, vector<1x1x84x80xf32>
    %19 = vector.shape_cast %18 : vector<1x1x84x80xf32> to vector<84x80xf32>
    %c0_25 = arith.constant 0 : index
    %c1_26 = arith.constant 1 : index
    %c0_27 = arith.constant 0 : index
    %c0_28 = arith.constant 0 : index
    %20 = vector.load %arg2[%c0_25, %c1_26, %c0_27, %c0_28] : memref<2x5x84x80xf32, #tpu.memory_space<vmem>>, vector<1x1x84x80xf32>
    %21 = vector.shape_cast %20 : vector<1x1x84x80xf32> to vector<84x80xf32>
    %c0_29 = arith.constant 0 : index
    %c2_30 = arith.constant 2 : index
    %c0_31 = arith.constant 0 : index
    %c0_32 = arith.constant 0 : index
    %22 = vector.load %arg2[%c0_29, %c2_30, %c0_31, %c0_32] : memref<2x5x84x80xf32, #tpu.memory_space<vmem>>, vector<1x1x84x80xf32>
    %23 = vector.shape_cast %22 : vector<1x1x84x80xf32> to vector<84x80xf32>
    %c0_33 = arith.constant 0 : index
    %c3 = arith.constant 3 : index
    %c0_34 = arith.constant 0 : index
    %c0_35 = arith.constant 0 : index
    %24 = vector.load %arg2[%c0_33, %c3, %c0_34, %c0_35] : memref<2x5x84x80xf32, #tpu.memory_space<vmem>>, vector<1x1x84x80xf32>
    %25 = vector.shape_cast %24 : vector<1x1x84x80xf32> to vector<84x80xf32>
    %c0_36 = arith.constant 0 : index
    %c4 = arith.constant 4 : index
    %c0_37 = arith.constant 0 : index
    %c0_38 = arith.constant 0 : index
    %26 = vector.load %arg2[%c0_36, %c4, %c0_37, %c0_38] : memref<2x5x84x80xf32, #tpu.memory_space<vmem>>, vector<1x1x84x80xf32>
    %27 = vector.shape_cast %26 : vector<1x1x84x80xf32> to vector<84x80xf32>
    %c1_39 = arith.constant 1 : index
    %c0_40 = arith.constant 0 : index
    %c0_41 = arith.constant 0 : index
    %c0_42 = arith.constant 0 : index
    %28 = vector.load %arg2[%c1_39, %c0_40, %c0_41, %c0_42] : memref<2x5x84x80xf32, #tpu.memory_space<vmem>>, vector<1x1x84x80xf32>
    %29 = vector.shape_cast %28 : vector<1x1x84x80xf32> to vector<84x80xf32>
    %c1_43 = arith.constant 1 : index
    %c1_44 = arith.constant 1 : index
    %c0_45 = arith.constant 0 : index
    %c0_46 = arith.constant 0 : index
    %30 = vector.load %arg2[%c1_43, %c1_44, %c0_45, %c0_46] : memref<2x5x84x80xf32, #tpu.memory_space<vmem>>, vector<1x1x84x80xf32>
    %31 = vector.shape_cast %30 : vector<1x1x84x80xf32> to vector<84x80xf32>
    %c1_47 = arith.constant 1 : index
    %c2_48 = arith.constant 2 : index
    %c0_49 = arith.constant 0 : index
    %c0_50 = arith.constant 0 : index
    %32 = vector.load %arg2[%c1_47, %c2_48, %c0_49, %c0_50] : memref<2x5x84x80xf32, #tpu.memory_space<vmem>>, vector<1x1x84x80xf32>
    %33 = vector.shape_cast %32 : vector<1x1x84x80xf32> to vector<84x80xf32>
    %c1_51 = arith.constant 1 : index
    %c3_52 = arith.constant 3 : index
    %c0_53 = arith.constant 0 : index
    %c0_54 = arith.constant 0 : index
    %34 = vector.load %arg2[%c1_51, %c3_52, %c0_53, %c0_54] : memref<2x5x84x80xf32, #tpu.memory_space<vmem>>, vector<1x1x84x80xf32>
    %35 = vector.shape_cast %34 : vector<1x1x84x80xf32> to vector<84x80xf32>
    %c1_55 = arith.constant 1 : index
    %c4_56 = arith.constant 4 : index
    %c0_57 = arith.constant 0 : index
    %c0_58 = arith.constant 0 : index
    %36 = vector.load %arg2[%c1_55, %c4_56, %c0_57, %c0_58] : memref<2x5x84x80xf32, #tpu.memory_space<vmem>>, vector<1x1x84x80xf32>
    %37 = vector.shape_cast %36 : vector<1x1x84x80xf32> to vector<84x80xf32>
    %cst = arith.constant dense<0.000000e+00> : vector<32x80xf32>
    %38 = tpu.matmul %2, %19, %cst {dimension_numbers = #tpu.dot_dimension_numbers<[1], [0], [0], [1], [0, 0, 1, 1], [], []>} : vector<32x84xf32>, vector<84x80xf32>, vector<32x80xf32> -> vector<32x80xf32>
    %cst_59 = arith.constant dense<0.000000e+00> : vector<32x80xf32>
    %39 = tpu.matmul %5, %21, %cst_59 {dimension_numbers = #tpu.dot_dimension_numbers<[1], [0], [0], [1], [0, 0, 1, 1], [], []>} : vector<32x84xf32>, vector<84x80xf32>, vector<32x80xf32> -> vector<32x80xf32>
    %40 = arith.addf %38, %39 : vector<32x80xf32>
    %cst_60 = arith.constant dense<0.000000e+00> : vector<32x80xf32>
    %41 = tpu.matmul %8, %23, %cst_60 {dimension_numbers = #tpu.dot_dimension_numbers<[1], [0], [0], [1], [0, 0, 1, 1], [], []>} : vector<32x84xf32>, vector<84x80xf32>, vector<32x80xf32> -> vector<32x80xf32>
    %42 = arith.addf %40, %41 : vector<32x80xf32>
    %cst_61 = arith.constant dense<0.000000e+00> : vector<32x80xf32>
    %43 = tpu.matmul %11, %25, %cst_61 {dimension_numbers = #tpu.dot_dimension_numbers<[1], [0], [0], [1], [0, 0, 1, 1], [], []>} : vector<32x84xf32>, vector<84x80xf32>, vector<32x80xf32> -> vector<32x80xf32>
    %44 = arith.addf %42, %43 : vector<32x80xf32>
    %cst_62 = arith.constant dense<0.000000e+00> : vector<32x80xf32>
    %45 = tpu.matmul %14, %27, %cst_62 {dimension_numbers = #tpu.dot_dimension_numbers<[1], [0], [0], [1], [0, 0, 1, 1], [], []>} : vector<32x84xf32>, vector<84x80xf32>, vector<32x80xf32> -> vector<32x80xf32>
    %46 = arith.addf %44, %45 : vector<32x80xf32>
    %cst_63 = arith.constant dense<0.000000e+00> : vector<32x80xf32>
    %47 = tpu.matmul %2, %29, %cst_63 {dimension_numbers = #tpu.dot_dimension_numbers<[1], [0], [0], [1], [0, 0, 1, 1], [], []>} : vector<32x84xf32>, vector<84x80xf32>, vector<32x80xf32> -> vector<32x80xf32>
    %cst_64 = arith.constant dense<0.000000e+00> : vector<32x80xf32>
    %48 = tpu.matmul %5, %31, %cst_64 {dimension_numbers = #tpu.dot_dimension_numbers<[1], [0], [0], [1], [0, 0, 1, 1], [], []>} : vector<32x84xf32>, vector<84x80xf32>, vector<32x80xf32> -> vector<32x80xf32>
    %49 = arith.addf %47, %48 : vector<32x80xf32>
    %cst_65 = arith.constant dense<0.000000e+00> : vector<32x80xf32>
    %50 = tpu.matmul %8, %33, %cst_65 {dimension_numbers = #tpu.dot_dimension_numbers<[1], [0], [0], [1], [0, 0, 1, 1], [], []>} : vector<32x84xf32>, vector<84x80xf32>, vector<32x80xf32> -> vector<32x80xf32>
    %51 = arith.addf %49, %50 : vector<32x80xf32>
    %cst_66 = arith.constant dense<0.000000e+00> : vector<32x80xf32>
    %52 = tpu.matmul %11, %35, %cst_66 {dimension_numbers = #tpu.dot_dimension_numbers<[1], [0], [0], [1], [0, 0, 1, 1], [], []>} : vector<32x84xf32>, vector<84x80xf32>, vector<32x80xf32> -> vector<32x80xf32>
    %53 = arith.addf %51, %52 : vector<32x80xf32>
    %cst_67 = arith.constant dense<0.000000e+00> : vector<32x80xf32>
    %54 = tpu.matmul %14, %37, %cst_67 {dimension_numbers = #tpu.dot_dimension_numbers<[1], [0], [0], [1], [0, 0, 1, 1], [], []>} : vector<32x84xf32>, vector<84x80xf32>, vector<32x80xf32> -> vector<32x80xf32>
    %55 = arith.addf %53, %54 : vector<32x80xf32>
    %56 = arith.maximumf %46, %55 : vector<32x80xf32>
    %cst_68 = arith.constant dense<0.000000e+00> : vector<32x80xf32>
    %57 = tpu.matmul %5, %19, %cst_68 {dimension_numbers = #tpu.dot_dimension_numbers<[1], [0], [0], [1], [0, 0, 1, 1], [], []>} : vector<32x84xf32>, vector<84x80xf32>, vector<32x80xf32> -> vector<32x80xf32>
    %cst_69 = arith.constant dense<0.000000e+00> : vector<32x80xf32>
    %58 = tpu.matmul %8, %21, %cst_69 {dimension_numbers = #tpu.dot_dimension_numbers<[1], [0], [0], [1], [0, 0, 1, 1], [], []>} : vector<32x84xf32>, vector<84x80xf32>, vector<32x80xf32> -> vector<32x80xf32>
    %59 = arith.addf %57, %58 : vector<32x80xf32>
    %cst_70 = arith.constant dense<0.000000e+00> : vector<32x80xf32>
    %60 = tpu.matmul %11, %23, %cst_70 {dimension_numbers = #tpu.dot_dimension_numbers<[1], [0], [0], [1], [0, 0, 1, 1], [], []>} : vector<32x84xf32>, vector<84x80xf32>, vector<32x80xf32> -> vector<32x80xf32>
    %61 = arith.addf %59, %60 : vector<32x80xf32>
    %cst_71 = arith.constant dense<0.000000e+00> : vector<32x80xf32>
    %62 = tpu.matmul %14, %25, %cst_71 {dimension_numbers = #tpu.dot_dimension_numbers<[1], [0], [0], [1], [0, 0, 1, 1], [], []>} : vector<32x84xf32>, vector<84x80xf32>, vector<32x80xf32> -> vector<32x80xf32>
    %63 = arith.addf %61, %62 : vector<32x80xf32>
    %cst_72 = arith.constant dense<0.000000e+00> : vector<32x80xf32>
    %64 = tpu.matmul %17, %27, %cst_72 {dimension_numbers = #tpu.dot_dimension_numbers<[1], [0], [0], [1], [0, 0, 1, 1], [], []>} : vector<32x84xf32>, vector<84x80xf32>, vector<32x80xf32> -> vector<32x80xf32>
    %65 = arith.addf %63, %64 : vector<32x80xf32>
    %66 = arith.maximumf %56, %65 : vector<32x80xf32>
    %cst_73 = arith.constant dense<0.000000e+00> : vector<32x80xf32>
    %67 = tpu.matmul %5, %29, %cst_73 {dimension_numbers = #tpu.dot_dimension_numbers<[1], [0], [0], [1], [0, 0, 1, 1], [], []>} : vector<32x84xf32>, vector<84x80xf32>, vector<32x80xf32> -> vector<32x80xf32>
    %cst_74 = arith.constant dense<0.000000e+00> : vector<32x80xf32>
    %68 = tpu.matmul %8, %31, %cst_74 {dimension_numbers = #tpu.dot_dimension_numbers<[1], [0], [0], [1], [0, 0, 1, 1], [], []>} : vector<32x84xf32>, vector<84x80xf32>, vector<32x80xf32> -> vector<32x80xf32>
    %69 = arith.addf %67, %68 : vector<32x80xf32>
    %cst_75 = arith.constant dense<0.000000e+00> : vector<32x80xf32>
    %70 = tpu.matmul %11, %33, %cst_75 {dimension_numbers = #tpu.dot_dimension_numbers<[1], [0], [0], [1], [0, 0, 1, 1], [], []>} : vector<32x84xf32>, vector<84x80xf32>, vector<32x80xf32> -> vector<32x80xf32>
    %71 = arith.addf %69, %70 : vector<32x80xf32>
    %cst_76 = arith.constant dense<0.000000e+00> : vector<32x80xf32>
    %72 = tpu.matmul %14, %35, %cst_76 {dimension_numbers = #tpu.dot_dimension_numbers<[1], [0], [0], [1], [0, 0, 1, 1], [], []>} : vector<32x84xf32>, vector<84x80xf32>, vector<32x80xf32> -> vector<32x80xf32>
    %73 = arith.addf %71, %72 : vector<32x80xf32>
    %cst_77 = arith.constant dense<0.000000e+00> : vector<32x80xf32>
    %74 = tpu.matmul %17, %37, %cst_77 {dimension_numbers = #tpu.dot_dimension_numbers<[1], [0], [0], [1], [0, 0, 1, 1], [], []>} : vector<32x84xf32>, vector<84x80xf32>, vector<32x80xf32> -> vector<32x80xf32>
    %75 = arith.addf %73, %74 : vector<32x80xf32>
    %76 = arith.maximumf %66, %75 : vector<32x80xf32>
    %c0_78 = arith.constant 0 : index
    %c0_79 = arith.constant 0 : index
    %77 = vector.load %arg3[%c0_78, %c0_79] : memref<1x80xf32, #tpu.memory_space<vmem>>, vector<1x80xf32>
    %78 = vector.broadcast %77 : vector<1x80xf32> to vector<32x80xf32>
    %79 = arith.addf %76, %78 : vector<32x80xf32>
    %cst_80 = arith.constant 0.000000e+00 : f32
    %80 = vector.broadcast %cst_80 : f32 to vector<32x80xf32>
    %81 = arith.maximumf %79, %80 : vector<32x80xf32>
    %c0_81 = arith.constant 0 : index
    %c0_82 = arith.constant 0 : index
    %82 = vector.load %arg4[%c0_81, %c0_82] : memref<32x80xf32, #tpu.memory_space<vmem>>, vector<32x80xf32>
    tpu.vector_store %arg4[%c0_81, %c0_82], %81 {strides = array<i32>} : memref<32x80xf32, #tpu.memory_space<vmem>>, vector<32x80xf32>,
    return
  }
  func.func @transform_0(%arg0: i32) -> (i32, i32, i32, i32) {
    %c0_i32 = arith.constant 0 : i32
    %c0_i32_0 = arith.constant 0 : i32
    %c0_i32_1 = arith.constant 0 : i32
    %c0_i32_2 = arith.constant 0 : i32
    return %arg0, %c0_i32, %c0_i32_0, %c0_i32_1 : i32, i32, i32, i32
  }
  func.func @transform_1(%arg0: i32) -> (i32, i32, i32, i32) {
    %c0_i32 = arith.constant 0 : i32
    %c0_i32_0 = arith.constant 0 : i32
    %c0_i32_1 = arith.constant 0 : i32
    %c0_i32_2 = arith.constant 0 : i32
    %c0_i32_3 = arith.constant 0 : i32
    return %c0_i32, %c0_i32_0, %c0_i32_1, %c0_i32_2 : i32, i32, i32, i32
  }
  func.func @transform_2(%arg0: i32) -> (i32, i32) {
    %c0_i32 = arith.constant 0 : i32
    %c0_i32_0 = arith.constant 0 : i32
    %c0_i32_1 = arith.constant 0 : i32
    return %c0_i32, %c0_i32_0 : i32, i32
  }
  func.func @transform_3(%arg0: i32) -> (i32, i32) {
    %c0_i32 = arith.constant 0 : i32
    %c0_i32_0 = arith.constant 0 : i32
    return %arg0, %c0_i32 : i32, i32
  }
}

module attributes {stable_mosaic.version = 11 : i64} {
  func.func @_fc_head_kernel(%arg0: i32, %arg1: memref<8x640xf32, #tpu.memory_space<vmem>>, %arg2: memref<640x120xf32, #tpu.memory_space<vmem>>, %arg3: memref<1x120xf32, #tpu.memory_space<vmem>>, %arg4: memref<120x84xf32, #tpu.memory_space<vmem>>, %arg5: memref<1x84xf32, #tpu.memory_space<vmem>>, %arg6: memref<84x10xf32, #tpu.memory_space<vmem>>, %arg7: memref<1x10xf32, #tpu.memory_space<vmem>>, %arg8: memref<8x128xf32, #tpu.memory_space<vmem>>) attributes {dimension_semantics = [#tpu.dimension_semantics<parallel>], iteration_bounds = array<i64: 1>, scalar_prefetch = 0 : i64, scratch_operands = 0 : i64, tpu.core_type = #tpu.core_type<tc>, window_params = [{transform_indices = @transform_0, window_bounds = array<i64: 8, 640>}, {pipeline_mode = #tpu.pipeline_mode<synchronous>, transform_indices = @transform_1, window_bounds = array<i64: 640, 120>}, {pipeline_mode = #tpu.pipeline_mode<synchronous>, transform_indices = @transform_2, window_bounds = array<i64: 1, 120>}, {pipeline_mode = #tpu.pipeline_mode<synchronous>, transform_indices = @transform_3, window_bounds = array<i64: 120, 84>}, {pipeline_mode = #tpu.pipeline_mode<synchronous>, transform_indices = @transform_4, window_bounds = array<i64: 1, 84>}, {pipeline_mode = #tpu.pipeline_mode<synchronous>, transform_indices = @transform_5, window_bounds = array<i64: 84, 10>}, {pipeline_mode = #tpu.pipeline_mode<synchronous>, transform_indices = @transform_6, window_bounds = array<i64: 1, 10>}, {transform_indices = @transform_7, window_bounds = array<i64: 8, 128>}]} {
    %c0 = arith.constant 0 : index
    %c0_0 = arith.constant 0 : index
    %0 = vector.load %arg1[%c0, %c0_0] : memref<8x640xf32, #tpu.memory_space<vmem>>, vector<8x640xf32>
    %c0_1 = arith.constant 0 : index
    %c0_2 = arith.constant 0 : index
    %1 = vector.load %arg2[%c0_1, %c0_2] : memref<640x120xf32, #tpu.memory_space<vmem>>, vector<640x120xf32>
    %cst = arith.constant dense<0.000000e+00> : vector<8x120xf32>
    %2 = tpu.matmul %0, %1, %cst {dimension_numbers = #tpu.dot_dimension_numbers<[1], [0], [0], [1], [0, 0, 1, 1], [], []>} : vector<8x640xf32>, vector<640x120xf32>, vector<8x120xf32> -> vector<8x120xf32>
    %c0_3 = arith.constant 0 : index
    %c0_4 = arith.constant 0 : index
    %3 = vector.load %arg3[%c0_3, %c0_4] : memref<1x120xf32, #tpu.memory_space<vmem>>, vector<1x120xf32>
    %4 = vector.broadcast %3 : vector<1x120xf32> to vector<8x120xf32>
    %5 = arith.addf %2, %4 : vector<8x120xf32>
    %cst_5 = arith.constant 0.000000e+00 : f32
    %6 = vector.broadcast %cst_5 : f32 to vector<8x120xf32>
    %7 = arith.maximumf %5, %6 : vector<8x120xf32>
    %c0_6 = arith.constant 0 : index
    %c0_7 = arith.constant 0 : index
    %8 = vector.load %arg4[%c0_6, %c0_7] : memref<120x84xf32, #tpu.memory_space<vmem>>, vector<120x84xf32>
    %cst_8 = arith.constant dense<0.000000e+00> : vector<8x84xf32>
    %9 = tpu.matmul %7, %8, %cst_8 {dimension_numbers = #tpu.dot_dimension_numbers<[1], [0], [0], [1], [0, 0, 1, 1], [], []>} : vector<8x120xf32>, vector<120x84xf32>, vector<8x84xf32> -> vector<8x84xf32>
    %c0_9 = arith.constant 0 : index
    %c0_10 = arith.constant 0 : index
    %10 = vector.load %arg5[%c0_9, %c0_10] : memref<1x84xf32, #tpu.memory_space<vmem>>, vector<1x84xf32>
    %11 = vector.broadcast %10 : vector<1x84xf32> to vector<8x84xf32>
    %12 = arith.addf %9, %11 : vector<8x84xf32>
    %cst_11 = arith.constant 0.000000e+00 : f32
    %13 = vector.broadcast %cst_11 : f32 to vector<8x84xf32>
    %14 = arith.maximumf %12, %13 : vector<8x84xf32>
    %c0_12 = arith.constant 0 : index
    %c0_13 = arith.constant 0 : index
    %15 = vector.load %arg6[%c0_12, %c0_13] : memref<84x10xf32, #tpu.memory_space<vmem>>, vector<84x10xf32>
    %cst_14 = arith.constant dense<0.000000e+00> : vector<8x10xf32>
    %16 = tpu.matmul %14, %15, %cst_14 {dimension_numbers = #tpu.dot_dimension_numbers<[1], [0], [0], [1], [0, 0, 1, 1], [], []>} : vector<8x84xf32>, vector<84x10xf32>, vector<8x10xf32> -> vector<8x10xf32>
    %c0_15 = arith.constant 0 : index
    %c0_16 = arith.constant 0 : index
    %17 = vector.load %arg7[%c0_15, %c0_16] : memref<1x10xf32, #tpu.memory_space<vmem>>, vector<1x10xf32>
    %18 = vector.broadcast %17 : vector<1x10xf32> to vector<8x10xf32>
    %19 = arith.addf %16, %18 : vector<8x10xf32>
    %cst_17 = arith.constant 0.000000e+00 : f32
    %20 = vector.broadcast %cst_17 : f32 to vector<8x34xf32>
    %21 = tpu.concatenate %19, %14, %20 in 1 : vector<8x10xf32>, vector<8x84xf32>, vector<8x34xf32> -> vector<8x128xf32>
    %c0_18 = arith.constant 0 : index
    %c0_19 = arith.constant 0 : index
    %22 = vector.load %arg8[%c0_18, %c0_19] : memref<8x128xf32, #tpu.memory_space<vmem>>, vector<8x128xf32>
    tpu.vector_store %arg8[%c0_18, %c0_19], %21 {strides = array<i32>} : memref<8x128xf32, #tpu.memory_space<vmem>>, vector<8x128xf32>,
    return
  }
  func.func @transform_0(%arg0: i32) -> (i32, i32) {
    %c0_i32 = arith.constant 0 : i32
    %c0_i32_0 = arith.constant 0 : i32
    return %arg0, %c0_i32 : i32, i32
  }
  func.func @transform_1(%arg0: i32) -> (i32, i32) {
    %c0_i32 = arith.constant 0 : i32
    %c0_i32_0 = arith.constant 0 : i32
    %c0_i32_1 = arith.constant 0 : i32
    return %c0_i32, %c0_i32_0 : i32, i32
  }
  func.func @transform_2(%arg0: i32) -> (i32, i32) {
    %c0_i32 = arith.constant 0 : i32
    %c0_i32_0 = arith.constant 0 : i32
    %c0_i32_1 = arith.constant 0 : i32
    return %c0_i32, %c0_i32_0 : i32, i32
  }
  func.func @transform_3(%arg0: i32) -> (i32, i32) {
    %c0_i32 = arith.constant 0 : i32
    %c0_i32_0 = arith.constant 0 : i32
    %c0_i32_1 = arith.constant 0 : i32
    return %c0_i32, %c0_i32_0 : i32, i32
  }
  func.func @transform_4(%arg0: i32) -> (i32, i32) {
    %c0_i32 = arith.constant 0 : i32
    %c0_i32_0 = arith.constant 0 : i32
    %c0_i32_1 = arith.constant 0 : i32
    return %c0_i32, %c0_i32_0 : i32, i32
  }
  func.func @transform_5(%arg0: i32) -> (i32, i32) {
    %c0_i32 = arith.constant 0 : i32
    %c0_i32_0 = arith.constant 0 : i32
    %c0_i32_1 = arith.constant 0 : i32
    return %c0_i32, %c0_i32_0 : i32, i32
  }
  func.func @transform_6(%arg0: i32) -> (i32, i32) {
    %c0_i32 = arith.constant 0 : i32
    %c0_i32_0 = arith.constant 0 : i32
    %c0_i32_1 = arith.constant 0 : i32
    return %c0_i32, %c0_i32_0 : i32, i32
  }
  func.func @transform_7(%arg0: i32) -> (i32, i32) {
    %c0_i32 = arith.constant 0 : i32
    %c0_i32_0 = arith.constant 0 : i32
    return %arg0, %c0_i32 : i32, i32
  }
}

</mosaic_0001>

<llo_original>
// kernel: cnn_forward.4
$region0: #{cnn_forward.4}
  #allocation0 [shape = 'u32[]', space=smem, size = 0x4, offset = 0x4, fixed_abs, tag = 'smem constant byte address 0x4 - core index']
  #allocation1 [shape = 'u32[144,128]{1,0:T(1,128)}', space=vmem, size = 0x12000, scoped, tag = 'internal scratch']
  %s0 = inlined_call_operand.vmem [shape: f32[8,2,10,84], index: 0, kind: input, shape index: {}]
  %s1 = inlined_call_operand.vmem [shape: f32[2,5,84,80], index: 1, kind: input, shape index: {}]
  %s2 = inlined_call_operand.vmem [shape: f32[1,80], index: 2, kind: input, shape index: {}]
  %s3 = inlined_call_operand.vmem [shape: f32[64,80], index: 3, kind: output, shape index: {}]
  %s4 = sld [smem:[#allocation0]]
  $region45: #{cnn_forward.4} parent=0
    _
  %s6 = ssub.s32 1, %s4
  %s7 = scalar_select 0, %s6, %s4
  loop: start=0, step=1, limit=4
  $region2: #{cnn_forward.4} parent=0 // loop_pre_header
    _
  $region3: #{cnn_forward.4} parent=0 // loop_header
    %s9 = sphi 0, %s13
    %p10 = scmp.ge.s32.totalorder %s9, 4
    %s19 = sphi 0, %s21
    %s22 = sphi 0, %s19
    %s23 = sphi 0, %s22
    %s39 = sphi 0, %s23
    %s43 = sphi 0, %s43
    %s45 = sphi 0, %s43
    %s46 = sphi 0, %s45
    %s60 = sphi 0, %s46
    %s64 = sphi 0, %s64
    %s66 = sphi 0, %s64
    %s67 = sphi 0, %s66
    %s81 = sphi 0, %s67
    %s87 = sphi 0, %s89
    %s90 = sphi 0, %s87
    %s91 = sphi 0, %s90
    %s107 = sphi 0, %s91
  $region4: #{cnn_forward.4} parent=0 // loop_header_branch
    %12 = sbr.rel (%p10) target = $region8
  $region5: #{cnn_forward.4} parent=0 // loop_body
    %s14 = ssub.s32 %s9, 1
    %s15 = ssub.s32 %s9, 2
    %s16 = sadd.s32 %s9, 1
    %s17 = ssub.s32 %s9, %s16
    %p18 = scmp.eq.s32.totalorder %s17, 0
    %s20 = sadd.s32 %s19, 1
    %s21 = scalar_select %p18, %s19, %s20
    %p24 = pneg %p18
    %p25 = scmp.eq.s32.totalorder %s9, 1
    %p26 = por %p24, %p25
    %p27 = scmp.ne.s32.totalorder %s19, %s22
    %p28 = scmp.eq.s32.totalorder %s9, 0
    %p29 = por %p27, %p28
    %p30 = scmp.ne.s32.totalorder %s19, %s22
    %p31 = scmp.eq.s32.totalorder %s14, 1
    %p32 = por %p30, %p31
    %p33 = scmp.ne.s32.totalorder %s22, %s23
    %p34 = scmp.eq.s32.totalorder %s14, 0
    %p35 = por %p33, %p34
    %p36 = scmp.ne.s32.totalorder %s22, %s23
    %p37 = scmp.eq.s32.totalorder %s15, 1
    %p38 = por %p36, %p37
    %p40 = scmp.ne.s32.totalorder %s23, %s39
    %p41 = scmp.eq.s32.totalorder %s15, 0
    %p42 = por %p40, %p41
    %s44 = sadd.s32 %s43, 1
    %p47 = scmp.eq.s32.totalorder %s9, 1
    %p48 = scmp.ne.s32.totalorder %s43, %s45
    %p49 = scmp.eq.s32.totalorder %s9, 0
    %p50 = por %p48, %p49
    %p51 = scmp.ne.s32.totalorder %s43, %s45
    %p52 = scmp.eq.s32.totalorder %s14, 1
    %p53 = por %p51, %p52
    %p54 = scmp.ne.s32.totalorder %s45, %s46
    %p55 = scmp.eq.s32.totalorder %s14, 0
    %p56 = por %p54, %p55
    %p57 = scmp.ne.s32.totalorder %s45, %s46
    %p58 = scmp.eq.s32.totalorder %s15, 1
    %p59 = por %p57, %p58
    %p61 = scmp.ne.s32.totalorder %s46, %s60
    %p62 = scmp.eq.s32.totalorder %s15, 0
    %p63 = por %p61, %p62
    %s65 = sadd.s32 %s64, 1
    %p68 = scmp.eq.s32.totalorder %s9, 1
    %p69 = scmp.ne.s32.totalorder %s64, %s66
    %p70 = scmp.eq.s32.totalorder %s9, 0
    %p71 = por %p69, %p70
    %p72 = scmp.ne.s32.totalorder %s64, %s66
    %p73 = scmp.eq.s32.totalorder %s14, 1
    %p74 = por %p72, %p73
    %p75 = scmp.ne.s32.totalorder %s66, %s67
    %p76 = scmp.eq.s32.totalorder %s14, 0
    %p77 = por %p75, %p76
    %p78 = scmp.ne.s32.totalorder %s66, %s67
    %p79 = scmp.eq.s32.totalorder %s15, 1
    %p80 = por %p78, %p79
    %p82 = scmp.ne.s32.totalorder %s67, %s81
    %p83 = scmp.eq.s32.totalorder %s15, 0
    %p84 = por %p82, %p83
    %s85 = ssub.s32 %s9, %s16
    %p86 = scmp.eq.s32.totalorder %s85, 0
    %s88 = sadd.s32 %s87, 1
    %s89 = scalar_select %p86, %s87, %s88
    %p92 = pneg %p86
    %p93 = scmp.eq.s32.totalorder %s9, 1
    %p94 = por %p92, %p93
    %p95 = scmp.ne.s32.totalorder %s87, %s90
    %p96 = scmp.eq.s32.totalorder %s9, 0
    %p97 = por %p95, %p96
    %p98 = scmp.ne.s32.totalorder %s87, %s90
    %p99 = scmp.eq.s32.totalorder %s14, 1
    %p100 = por %p98, %p99
    %p101 = scmp.ne.s32.totalorder %s90, %s91
    %p102 = scmp.eq.s32.totalorder %s14, 0
    %p103 = por %p101, %p102
    %p104 = scmp.ne.s32.totalorder %s90, %s91
    %p105 = scmp.eq.s32.totalorder %s15, 1
    %p106 = por %p104, %p105
    %p108 = scmp.ne.s32.totalorder %s91, %s107
    %p109 = scmp.eq.s32.totalorder %s15, 0
    %p110 = por %p108, %p109
    %p111 = scmp.le.s32.totalorder 1, %s9
    %p112 = scmp.lt.s32.totalorder %s9, 3
    %p113 = pnand %p111, %p112
    %p114 = pneg %p113
    // Predicated region
    $region9: #{cnn_forward.4} parent=5 // pred_check
      _
    $region10: #{cnn_forward.4} parent=5 // pred_check_branch
      %116 = sbr.rel (%p113) target = $region12
    $region11: #{cnn_forward.4} parent=5 // pred_region
      %s117 = ssub.s32 %s9, 1
      // Predicated region
      $region13: #{cnn_forward.4} parent=11 // pred_check
        %p118 = pneg %p56
      $region14: #{cnn_forward.4} parent=11 // pred_check_branch
        %120 = sbr.rel (%p118) target = $region16
      $region15: #{cnn_forward.4} parent=11 // pred_region
        _
      $region16: #{cnn_forward.4} parent=11 // pred_fallthru
        _
      // Predicated region
      $region17: #{cnn_forward.4} parent=11 // pred_check
        %p121 = pneg %p77
      $region18: #{cnn_forward.4} parent=11 // pred_check_branch
        %123 = sbr.rel (%p121) target = $region20
      $region19: #{cnn_forward.4} parent=11 // pred_region
        _
      $region20: #{cnn_forward.4} parent=11 // pred_fallthru
        _
    $region12: #{cnn_forward.4} parent=5 // pred_fallthru
      _
    %p124 = scmp.lt.s32.totalorder %s9, 2
    // Predicated region
    $region21: #{cnn_forward.4} parent=5 // pred_check
      %p125 = pneg %p124
    $region22: #{cnn_forward.4} parent=5 // pred_check_branch
      %127 = sbr.rel (%p125) target = $region24
    $region23: #{cnn_forward.4} parent=5 // pred_region
      // Predicated region
      $region25: #{cnn_forward.4} parent=23 // pred_check
        %p128 = pneg %p29
      $region26: #{cnn_forward.4} parent=23 // pred_check_branch
        %130 = sbr.rel (%p128) target = $region28
      $region27: #{cnn_forward.4} parent=23 // pred_region
        %s131 = smul.u32 4, %s9
        %p132 = scmp.lt.s32.totalorder %s131, 7
        %s133 = scalar_select %p132, %s131, 7
        %s134 = smul.addr %s133, 4
        %s135 = smul.addr %s134, 8
        %s136 = scalar_lea.vmem %s0, %s135
        %s137 = smul.u32 4, %s9
      $region28: #{cnn_forward.4} parent=23 // pred_fallthru
        _
    $region24: #{cnn_forward.4} parent=5 // pred_fallthru
      _
    %p138 = scmp.le.s32.totalorder 1, %s9
    %p139 = scmp.lt.s32.totalorder %s9, 3
    %p140 = pnand %p138, %p139
    %p141 = pneg %p140
    // Predicated region
    $region29: #{cnn_forward.4} parent=5 // pred_check
      _
    $region30: #{cnn_forward.4} parent=5 // pred_check_branch
      %143 = sbr.rel (%p140) target = $region32
    $region31: #{cnn_forward.4} parent=5 // pred_region
      %s144 = ssub.s32 %s9, 1
      %s145 = smul.u32 4, %s14
      %p146 = scmp.lt.s32.totalorder %s145, 7
      %s147 = scalar_select %p146, %s145, 7
      %s148 = smul.addr %s147, 4
      %s149 = smul.addr %s148, 8
      %s150 = scalar_lea.vmem %s0, %s149
      %p151 = pneg %p35
      %p152 = pneg %p32
      %p153 = pneg %p56
      %p154 = pneg %p53
      %p155 = pneg %p77
      %p156 = pneg %p74
      %p157 = pneg %p103
      %p158 = pneg %p100
      %s159 = smul.u32 4, %s14
      %p160 = scmp.lt.s32.totalorder %s159, 7
      %s161 = scalar_select %p160, %s159, 7
      %s162 = smul.addr %s161, 8
      %s163 = scalar_lea.vmem %s3, %s162
      %s164 = smul.u32 4, %s14
      %p165 = scmp.lt.s32.totalorder %s164, 7
      %s166 = scalar_select %p165, %s164, 7
      %s167 = smul.addr %s166, 4
      %s168 = smul.addr %s167, 8
      %s169 = scalar_lea.vmem %s0, %s168
      %s170 = smul.u32 4, %s14
      %s171 = smul.u32 4, %s14
      %p172 = scmp.lt.s32.totalorder %s171, 7
      %s173 = scalar_select %p172, %s171, 7
      %s174 = smul.addr %s173, 8
      %s175 = scalar_lea.vmem %s3, %s174
      %s176 = smul.u32 4, %s14
      %v177 = vld [vmem:[%s169] sm:$0xff]
      %v178 = vld [vmem:[%s169 + $0x20] sm:$0xff]
      %v179 = vld [vmem:[%s169 + $0x40] sm:$0xff]
      %v180 = vld [vmem:[%s169 + $0x60] sm:$0xff]
      %s181 = scalar_lea.vmem %s169, 16
      %v182 = vld [vmem:[%s181] sm:$0xff]
      %v183 = vld [vmem:[%s181 + $0x20] sm:$0xff]
      %v184 = vld [vmem:[%s181 + $0x40] sm:$0xff]
      %v185 = vld [vmem:[%s181 + $0x60] sm:$0xff]
      %v186 = vld [vmem:[%s169 + $0x1] sm:$0xff]
      %v187 = vld [vmem:[%s169 + $0x21] sm:$0xff]
      %v188 = vld [vmem:[%s169 + $0x41] sm:$0xff]
      %v189 = vld [vmem:[%s169 + $0x61] sm:$0xff]
      %v190 = vld [vmem:[%s181 + $0x1] sm:$0xff]
      %v191 = vld [vmem:[%s181 + $0x21] sm:$0xff]
      %v192 = vld [vmem:[%s181 + $0x41] sm:$0xff]
      %v193 = vld [vmem:[%s181 + $0x61] sm:$0xff]
      %v194 = vld [vmem:[%s169 + $0x2] sm:$0xff]
      %v195 = vld [vmem:[%s169 + $0x22] sm:$0xff]
      %v196 = vld [vmem:[%s169 + $0x42] sm:$0xff]
      %v197 = vld [vmem:[%s169 + $0x62] sm:$0xff]
      %v198 = vld [vmem:[%s181 + $0x2] sm:$0xff]
      %v199 = vld [vmem:[%s181 + $0x22] sm:$0xff]
      %v200 = vld [vmem:[%s181 + $0x42] sm:$0xff]
      %v201 = vld [vmem:[%s181 + $0x62] sm:$0xff]
      %v202 = vld [vmem:[%s1] sm:$0xff]
      %v203 = vld [vmem:[%s1 + $0x8] sm:$0xff]
      %v204 = vld [vmem:[%s1 + $0x10] sm:$0xff]
      %v205 = vld [vmem:[%s1 + $0x18] sm:$0xff]
      %v206 = vld [vmem:[%s1 + $0x20] sm:$0xff]
      %v207 = vld [vmem:[%s1 + $0x28] sm:$0xff]
      %v208 = vld [vmem:[%s1 + $0x30] sm:$0xff]
      %v209 = vld [vmem:[%s1 + $0x38] sm:$0xff]
      %v210 = vld [vmem:[%s1 + $0x40] sm:$0xff]
      %v211 = vld [vmem:[%s1 + $0x48] sm:$0xff]
      %v212 = vld [vmem:[%s1 + $0x50] sm:$0xf]
      %s213 = scalar_lea.vmem %s1, 88
      %v214 = vld [vmem:[%s213] sm:$0xff]
      %v215 = vld [vmem:[%s213 + $0x8] sm:$0xff]
      %v216 = vld [vmem:[%s213 + $0x10] sm:$0xff]
      %v217 = vld [vmem:[%s213 + $0x18] sm:$0xff]
      %v218 = vld [vmem:[%s213 + $0x20] sm:$0xff]
      %v219 = vld [vmem:[%s213 + $0x28] sm:$0xff]
      %v220 = vld [vmem:[%s213 + $0x30] sm:$0xff]
      %v221 = vld [vmem:[%s213 + $0x38] sm:$0xff]
      %v222 = vld [vmem:[%s213 + $0x40] sm:$0xff]
      %v223 = vld [vmem:[%s213 + $0x48] sm:$0xff]
      %v224 = vld [vmem:[%s213 + $0x50] sm:$0xf]
      %s225 = scalar_lea.vmem %s1, 176
      %v226 = vld [vmem:[%s225] sm:$0xff]
      %v227 = vld [vmem:[%s225 + $0x8] sm:$0xff]
      %v228 = vld [vmem:[%s225 + $0x10] sm:$0xff]
      %v229 = vld [vmem:[%s225 + $0x18] sm:$0xff]
      %v230 = vld [vmem:[%s225 + $0x20] sm:$0xff]
      %v231 = vld [vmem:[%s225 + $0x28] sm:$0xff]
      %v232 = vld [vmem:[%s225 + $0x30] sm:$0xff]
      %v233 = vld [vmem:[%s225 + $0x38] sm:$0xff]
      %v234 = vld [vmem:[%s225 + $0x40] sm:$0xff]
      %v235 = vld [vmem:[%s225 + $0x48] sm:$0xff]
      %v236 = vld [vmem:[%s225 + $0x50] sm:$0xf]
      %s237 = scalar_lea.vmem %s1, 264
      %v238 = vld [vmem:[%s237] sm:$0xff]
      %v239 = vld [vmem:[%s237 + $0x8] sm:$0xff]
      %v240 = vld [vmem:[%s237 + $0x10] sm:$0xff]
      %v241 = vld [vmem:[%s237 + $0x18] sm:$0xff]
      %v242 = vld [vmem:[%s237 + $0x20] sm:$0xff]
      %v243 = vld [vmem:[%s237 + $0x28] sm:$0xff]
      %v244 = vld [vmem:[%s237 + $0x30] sm:$0xff]
      %v245 = vld [vmem:[%s237 + $0x38] sm:$0xff]
      %v246 = vld [vmem:[%s237 + $0x40] sm:$0xff]
      %v247 = vld [vmem:[%s237 + $0x48] sm:$0xff]
      %v248 = vld [vmem:[%s237 + $0x50] sm:$0xf]
      %s249 = scalar_lea.vmem %s1, 352
      %v250 = vld [vmem:[%s249] sm:$0xff]
      %v251 = vld [vmem:[%s249 + $0x8] sm:$0xff]
      %v252 = vld [vmem:[%s249 + $0x10] sm:$0xff]
      %v253 = vld [vmem:[%s249 + $0x18] sm:$0xff]
      %v254 = vld [vmem:[%s249 + $0x20] sm:$0xff]
      %v255 = vld [vmem:[%s249 + $0x28] sm:$0xff]
      %v256 = vld [vmem:[%s249 + $0x30] sm:$0xff]
      %v257 = vld [vmem:[%s249 + $0x38] sm:$0xff]
      %v258 = vld [vmem:[%s249 + $0x40] sm:$0xff]
      %v259 = vld [vmem:[%s249 + $0x48] sm:$0xff]
      %v260 = vld [vmem:[%s249 + $0x50] sm:$0xf]
      %s261 = scalar_lea.vmem %s1, 440
      %v262 = vld [vmem:[%s261] sm:$0xff]
      %v263 = vld [vmem:[%s261 + $0x8] sm:$0xff]
      %v264 = vld [vmem:[%s261 + $0x10] sm:$0xff]
      %v265 = vld [vmem:[%s261 + $0x18] sm:$0xff]
      %v266 = vld [vmem:[%s261 + $0x20] sm:$0xff]
      %v267 = vld [vmem:[%s261 + $0x28] sm:$0xff]
      %v268 = vld [vmem:[%s261 + $0x30] sm:$0xff]
      %v269 = vld [vmem:[%s261 + $0x38] sm:$0xff]
      %v270 = vld [vmem:[%s261 + $0x40] sm:$0xff]
      %v271 = vld [vmem:[%s261 + $0x48] sm:$0xff]
      %v272 = vld [vmem:[%s261 + $0x50] sm:$0xf]
      %s273 = scalar_lea.vmem %s1, 528
      %v274 = vld [vmem:[%s273] sm:$0xff]
      %v275 = vld [vmem:[%s273 + $0x8] sm:$0xff]
      %v276 = vld [vmem:[%s273 + $0x10] sm:$0xff]
      %v277 = vld [vmem:[%s273 + $0x18] sm:$0xff]
      %v278 = vld [vmem:[%s273 + $0x20] sm:$0xff]
      %v279 = vld [vmem:[%s273 + $0x28] sm:$0xff]
      %v280 = vld [vmem:[%s273 + $0x30] sm:$0xff]
      %v281 = vld [vmem:[%s273 + $0x38] sm:$0xff]
      %v282 = vld [vmem:[%s273 + $0x40] sm:$0xff]
      %v283 = vld [vmem:[%s273 + $0x48] sm:$0xff]
      %v284 = vld [vmem:[%s273 + $0x50] sm:$0xf]
      %s285 = scalar_lea.vmem %s1, 616
      %v286 = vld [vmem:[%s285] sm:$0xff]
      %v287 = vld [vmem:[%s285 + $0x8] sm:$0xff]
      %v288 = vld [vmem:[%s285 + $0x10] sm:$0xff]
      %v289 = vld [vmem:[%s285 + $0x18] sm:$0xff]
      %v290 = vld [vmem:[%s285 + $0x20] sm:$0xff]
      %v291 = vld [vmem:[%s285 + $0x28] sm:$0xff]
      %v292 = vld [vmem:[%s285 + $0x30] sm:$0xff]
      %v293 = vld [vmem:[%s285 + $0x38] sm:$0xff]
      %v294 = vld [vmem:[%s285 + $0x40] sm:$0xff]
      %v295 = vld [vmem:[%s285 + $0x48] sm:$0xff]
      %v296 = vld [vmem:[%s285 + $0x50] sm:$0xf]
      %s297 = scalar_lea.vmem %s1, 704
      %v298 = vld [vmem:[%s297] sm:$0xff]
      %v299 = vld [vmem:[%s297 + $0x8] sm:$0xff]
      %v300 = vld [vmem:[%s297 + $0x10] sm:$0xff]
      %v301 = vld [vmem:[%s297 + $0x18] sm:$0xff]
      %v302 = vld [vmem:[%s297 + $0x20] sm:$0xff]
      %v303 = vld [vmem:[%s297 + $0x28] sm:$0xff]
      %v304 = vld [vmem:[%s297 + $0x30] sm:$0xff]
      %v305 = vld [vmem:[%s297 + $0x38] sm:$0xff]
      %v306 = vld [vmem:[%s297 + $0x40] sm:$0xff]
      %v307 = vld [vmem:[%s297 + $0x48] sm:$0xff]
      %v308 = vld [vmem:[%s297 + $0x50] sm:$0xf]
      %s309 = scalar_lea.vmem %s1, 792
      %v310 = vld [vmem:[%s309] sm:$0xff]
      %v311 = vld [vmem:[%s309 + $0x8] sm:$0xff]
      %v312 = vld [vmem:[%s309 + $0x10] sm:$0xff]
      %v313 = vld [vmem:[%s309 + $0x18] sm:$0xff]
      %v314 = vld [vmem:[%s309 + $0x20] sm:$0xff]
      %v315 = vld [vmem:[%s309 + $0x28] sm:$0xff]
      %v316 = vld [vmem:[%s309 + $0x30] sm:$0xff]
      %v317 = vld [vmem:[%s309 + $0x38] sm:$0xff]
      %v318 = vld [vmem:[%s309 + $0x40] sm:$0xff]
      %v319 = vld [vmem:[%s309 + $0x48] sm:$0xff]
      %v320 = vld [vmem:[%s309 + $0x50] sm:$0xf]
      %vm321 = vcmask 687104
      %v323 = vsel %vm321, %v182, 0
      %v326 = vsel %vm321, %v183, 0
      %v329 = vsel %vm321, %v184, 0
      %v332 = vsel %vm321, %v185, 0
      %vm334 = vcmask 1043456
      %v336 = vsel %vm334, %v224, 0
      %338 = vmatprep.subr.mxu0 0.0
      %339 = vmatpush1.msra.mxu0 0.0
      %340 = vmatprep.subr.mxu0 0.0
      %341 = vmatpush1.msra.mxu0 0.0
      %342 = vmatprep.subr.mxu0 0.0
      %343 = vmatpush1.msra.mxu0 0.0
      %344 = vmatprep.subr.mxu0 0.0
      %345 = vmatpush1.msra.mxu0 0.0
      %346 = vmatprep.subr.mxu0 0.0
      %347 = vmatpush1.msra.mxu0 0.0
      %348 = vmatprep.subr.mxu0 0.0
      %349 = vmatpush1.msra.mxu0 %v336
      %350 = vmatprep.subr.mxu0 0.0
      %351 = vmatpush1.msra.mxu0 %v223
      %352 = vmatprep.subr.mxu0 0.0
      %353 = vmatpush1.msra.mxu0 %v222
      %354 = vmatprep.subr.mxu0 0.0
      %355 = vmatpush1.msra.mxu0 %v221
      %356 = vmatprep.subr.mxu0 0.0
      %357 = vmatpush1.msra.mxu0 %v220
      %358 = vmatprep.subr.mxu0 0.0
      %359 = vmatpush1.msra.mxu0 %v219
      %360 = vmatprep.subr.mxu0 0.0
      %361 = vmatpush1.msra.mxu0 %v218
      %362 = vmatprep.subr.mxu0 0.0
      %363 = vmatpush1.msra.mxu0 %v217
      %364 = vmatprep.subr.mxu0 0.0
      %365 = vmatpush1.msra.mxu0 %v216
      %366 = vmatprep.subr.mxu0 0.0
      %367 = vmatpush1.msra.mxu0 %v215
      %368 = vmatprep.subr.mxu0 0.0
      %369 = vmatpush1.msra.mxu0 %v214
      %370 = vmatprep.subr.mxu0 0.0
      %371 = vmatpush2.msra.mxu0 0.0
      %372 = vmatprep.subr.mxu0 0.0
      %373 = vmatpush2.msra.mxu0 0.0
      %374 = vmatprep.subr.mxu0 0.0
      %375 = vmatpush2.msra.mxu0 0.0
      %376 = vmatprep.subr.mxu0 0.0
      %377 = vmatpush2.msra.mxu0 0.0
      %378 = vmatprep.subr.mxu0 0.0
      %379 = vmatpush2.msra.mxu0 0.0
      %380 = vmatprep.subr.mxu0 0.0
      %381 = vmatpush2.msra.mxu0 0.0
      %382 = vmatprep.subr.mxu0 0.0
      %383 = vmatpush2.msra.mxu0 0.0
      %384 = vmatprep.subr.mxu0 0.0
      %385 = vmatpush2.msra.mxu0 0.0
      %386 = vmatprep.subr.mxu0 0.0
      %387 = vmatpush2.msra.mxu0 0.0
      %388 = vmatprep.subr.mxu0 0.0
      %389 = vmatpush2.msra.mxu0 0.0
      %390 = vmatprep.subr.mxu0 0.0
      %391 = vmatpush2.msra.mxu0 0.0
      %392 = vmatprep.subr.mxu0 0.0
      %393 = vmatpush2.msra.mxu0 0.0
      %394 = vmatprep.subr.mxu0 0.0
      %395 = vmatpush2.msra.mxu0 0.0
      %396 = vmatprep.subr.mxu0 0.0
      %397 = vmatpush2.msra.mxu0 0.0
      %398 = vmatprep.subr.mxu0 0.0
      %399 = vmatpush2.msra.mxu0 0.0
      %400 = vmatprep.subr.mxu0 0.0
      %401 = vmatpush2.msra.mxu0 0.0
      %402 = vmatprep.mubr.f32.mxu0 0.0
      %403 = vmatmul.mubr.f32.gmra.mxu0 %v323
      %v404 = vpop.f32.mrf.mxu0
      %v405 = vadd.f32 0.0, %v404
      %v406 = vpop.f32.mrf.mxu0
      %407 = vmatprep.mubr.f32.mxu0 0.0
      %408 = vmatmul.mubr.f32.gmra.mxu0 %v326
      %v409 = vpop.f32.mrf.mxu0
      %v410 = vadd.f32 0.0, %v409
      %v411 = vpop.f32.mrf.mxu0
      %412 = vmatprep.mubr.f32.mxu0 0.0
      %413 = vmatmul.mubr.f32.gmra.mxu0 %v329
      %v414 = vpop.f32.mrf.mxu0
      %v415 = vadd.f32 0.0, %v414
      %v416 = vpop.f32.mrf.mxu0
      %417 = vmatprep.mubr.f32.mxu0 0.0
      %418 = vmatmul.mubr.f32.gmra.mxu0 %v332
      %v419 = vpop.f32.mrf.mxu0
      %v420 = vadd.f32 0.0, %v419
      %v421 = vpop.f32.mrf.mxu0
      %422 = vdwg.mxu0
      %v424 = vsel %vm321, %v177, 0
      %v427 = vsel %vm321, %v178, 0
      %v430 = vsel %vm321, %v179, 0
      %v433 = vsel %vm321, %v180, 0
      %v436 = vsel %vm334, %v212, 0
      %438 = vmatprep.subr.mxu0 0.0
      %439 = vmatpush1.msra.mxu0 0.0
      %440 = vmatprep.subr.mxu0 0.0
      %441 = vmatpush1.msra.mxu0 0.0
      %442 = vmatprep.subr.mxu0 0.0
      %443 = vmatpush1.msra.mxu0 0.0
      %444 = vmatprep.subr.mxu0 0.0
      %445 = vmatpush1.msra.mxu0 0.0
      %446 = vmatprep.subr.mxu0 0.0
      %447 = vmatpush1.msra.mxu0 0.0
      %448 = vmatprep.subr.mxu0 0.0
      %449 = vmatpush1.msra.mxu0 %v436
      %450 = vmatprep.subr.mxu0 0.0
      %451 = vmatpush1.msra.mxu0 %v211
      %452 = vmatprep.subr.mxu0 0.0
      %453 = vmatpush1.msra.mxu0 %v210
      %454 = vmatprep.subr.mxu0 0.0
      %455 = vmatpush1.msra.mxu0 %v209
      %456 = vmatprep.subr.mxu0 0.0
      %457 = vmatpush1.msra.mxu0 %v208
      %458 = vmatprep.subr.mxu0 0.0
      %459 = vmatpush1.msra.mxu0 %v207
      %460 = vmatprep.subr.mxu0 0.0
      %461 = vmatpush1.msra.mxu0 %v206
      %462 = vmatprep.subr.mxu0 0.0
      %463 = vmatpush1.msra.mxu0 %v205
      %464 = vmatprep.subr.mxu0 0.0
      %465 = vmatpush1.msra.mxu0 %v204
      %466 = vmatprep.subr.mxu0 0.0
      %467 = vmatpush1.msra.mxu0 %v203
      %468 = vmatprep.subr.mxu0 0.0
      %469 = vmatpush1.msra.mxu0 %v202
      %470 = vmatprep.subr.mxu0 0.0
      %471 = vmatpush2.msra.mxu0 0.0
      %472 = vmatprep.subr.mxu0 0.0
      %473 = vmatpush2.msra.mxu0 0.0
      %474 = vmatprep.subr.mxu0 0.0
      %475 = vmatpush2.msra.mxu0 0.0
      %476 = vmatprep.subr.mxu0 0.0
      %477 = vmatpush2.msra.mxu0 0.0
      %478 = vmatprep.subr.mxu0 0.0
      %479 = vmatpush2.msra.mxu0 0.0
      %480 = vmatprep.subr.mxu0 0.0
      %481 = vmatpush2.msra.mxu0 0.0
      %482 = vmatprep.subr.mxu0 0.0
      %483 = vmatpush2.msra.mxu0 0.0
      %484 = vmatprep.subr.mxu0 0.0
      %485 = vmatpush2.msra.mxu0 0.0
      %486 = vmatprep.subr.mxu0 0.0
      %487 = vmatpush2.msra.mxu0 0.0
      %488 = vmatprep.subr.mxu0 0.0
      %489 = vmatpush2.msra.mxu0 0.0
      %490 = vmatprep.subr.mxu0 0.0
      %491 = vmatpush2.msra.mxu0 0.0
      %492 = vmatprep.subr.mxu0 0.0
      %493 = vmatpush2.msra.mxu0 0.0
      %494 = vmatprep.subr.mxu0 0.0
      %495 = vmatpush2.msra.mxu0 0.0
      %496 = vmatprep.subr.mxu0 0.0
      %497 = vmatpush2.msra.mxu0 0.0
      %498 = vmatprep.subr.mxu0 0.0
      %499 = vmatpush2.msra.mxu0 0.0
      %500 = vmatprep.subr.mxu0 0.0
      %501 = vmatpush2.msra.mxu0 0.0
      %502 = vmatprep.mubr.f32.mxu0 0.0
      %503 = vmatmul.mubr.f32.gmra.mxu0 %v424
      %v504 = vpop.f32.mrf.mxu0
      %v505 = vadd.f32 %v405, %v504
      %v506 = vpop.f32.mrf.mxu0
      %507 = vmatprep.mubr.f32.mxu0 0.0
      %508 = vmatmul.mubr.f32.gmra.mxu0 %v427
      %v509 = vpop.f32.mrf.mxu0
      %v510 = vadd.f32 %v410, %v509
      %v511 = vpop.f32.mrf.mxu0
      %512 = vmatprep.mubr.f32.mxu0 0.0
      %513 = vmatmul.mubr.f32.gmra.mxu0 %v430
      %v514 = vpop.f32.mrf.mxu0
      %v515 = vadd.f32 %v415, %v514
      %v516 = vpop.f32.mrf.mxu0
      %517 = vmatprep.mubr.f32.mxu0 0.0
      %518 = vmatmul.mubr.f32.gmra.mxu0 %v433
      %v519 = vpop.f32.mrf.mxu0
      %v520 = vadd.f32 %v420, %v519
      %v521 = vpop.f32.mrf.mxu0
      %522 = vdwg.mxu0
      %v524 = vsel %vm321, %v186, 0
      %v527 = vsel %vm321, %v187, 0
      %v530 = vsel %vm321, %v188, 0
      %v533 = vsel %vm321, %v189, 0
      %v536 = vsel %vm334, %v236, 0
      %538 = vmatprep.subr.mxu0 0.0
      %539 = vmatpush1.msra.mxu0 0.0
      %540 = vmatprep.subr.mxu0 0.0
      %541 = vmatpush1.msra.mxu0 0.0
      %542 = vmatprep.subr.mxu0 0.0
      %543 = vmatpush1.msra.mxu0 0.0
      %544 = vmatprep.subr.mxu0 0.0
      %545 = vmatpush1.msra.mxu0 0.0
      %546 = vmatprep.subr.mxu0 0.0
      %547 = vmatpush1.msra.mxu0 0.0
      %548 = vmatprep.subr.mxu0 0.0
      %549 = vmatpush1.msra.mxu0 %v536
      %550 = vmatprep.subr.mxu0 0.0
      %551 = vmatpush1.msra.mxu0 %v235
      %552 = vmatprep.subr.mxu0 0.0
      %553 = vmatpush1.msra.mxu0 %v234
      %554 = vmatprep.subr.mxu0 0.0
      %555 = vmatpush1.msra.mxu0 %v233
      %556 = vmatprep.subr.mxu0 0.0
      %557 = vmatpush1.msra.mxu0 %v232
      %558 = vmatprep.subr.mxu0 0.0
      %559 = vmatpush1.msra.mxu0 %v231
      %560 = vmatprep.subr.mxu0 0.0
      %561 = vmatpush1.msra.mxu0 %v230
      %562 = vmatprep.subr.mxu0 0.0
      %563 = vmatpush1.msra.mxu0 %v229
      %564 = vmatprep.subr.mxu0 0.0
      %565 = vmatpush1.msra.mxu0 %v228
      %566 = vmatprep.subr.mxu0 0.0
      %567 = vmatpush1.msra.mxu0 %v227
      %568 = vmatprep.subr.mxu0 0.0
      %569 = vmatpush1.msra.mxu0 %v226
      %570 = vmatprep.subr.mxu0 0.0
      %571 = vmatpush2.msra.mxu0 0.0
      %572 = vmatprep.subr.mxu0 0.0
      %573 = vmatpush2.msra.mxu0 0.0
      %574 = vmatprep.subr.mxu0 0.0
      %575 = vmatpush2.msra.mxu0 0.0
      %576 = vmatprep.subr.mxu0 0.0
      %577 = vmatpush2.msra.mxu0 0.0
      %578 = vmatprep.subr.mxu0 0.0
      %579 = vmatpush2.msra.mxu0 0.0
      %580 = vmatprep.subr.mxu0 0.0
      %581 = vmatpush2.msra.mxu0 0.0
      %582 = vmatprep.subr.mxu0 0.0
      %583 = vmatpush2.msra.mxu0 0.0
      %584 = vmatprep.subr.mxu0 0.0
      %585 = vmatpush2.msra.mxu0 0.0
      %586 = vmatprep.subr.mxu0 0.0
      %587 = vmatpush2.msra.mxu0 0.0
      %588 = vmatprep.subr.mxu0 0.0
      %589 = vmatpush2.msra.mxu0 0.0
      %590 = vmatprep.subr.mxu0 0.0
      %591 = vmatpush2.msra.mxu0 0.0
      %592 = vmatprep.subr.mxu0 0.0
      %593 = vmatpush2.msra.mxu0 0.0
      %594 = vmatprep.subr.mxu0 0.0
      %595 = vmatpush2.msra.mxu0 0.0
      %596 = vmatprep.subr.mxu0 0.0
      %597 = vmatpush2.msra.mxu0 0.0
      %598 = vmatprep.subr.mxu0 0.0
      %599 = vmatpush2.msra.mxu0 0.0
      %600 = vmatprep.subr.mxu0 0.0
      %601 = vmatpush2.msra.mxu0 0.0
      %602 = vmatprep.mubr.f32.mxu0 0.0
      %603 = vmatmul.mubr.f32.gmra.mxu0 %v524
      %v604 = vpop.f32.mrf.mxu0
      %v605 = vadd.f32 0.0, %v604
      %v606 = vpop.f32.mrf.mxu0
      %607 = vmatprep.mubr.f32.mxu0 0.0
      %608 = vmatmul.mubr.f32.gmra.mxu0 %v527
      %v609 = vpop.f32.mrf.mxu0
      %v610 = vadd.f32 0.0, %v609
      %v611 = vpop.f32.mrf.mxu0
      %612 = vmatprep.mubr.f32.mxu0 0.0
      %613 = vmatmul.mubr.f32.gmra.mxu0 %v530
      %v614 = vpop.f32.mrf.mxu0
      %v615 = vadd.f32 0.0, %v614
      %v616 = vpop.f32.mrf.mxu0
      %617 = vmatprep.mubr.f32.mxu0 0.0
      %618 = vmatmul.mubr.f32.gmra.mxu0 %v533
      %v619 = vpop.f32.mrf.mxu0
      %v620 = vadd.f32 0.0, %v619
      %v621 = vpop.f32.mrf.mxu0
      %622 = vdwg.mxu0
      %v623 = vadd.f32 %v505, %v605
      %v624 = vadd.f32 %v510, %v610
      %v625 = vadd.f32 %v515, %v615
      %v626 = vadd.f32 %v520, %v620
      %v628 = vsel %vm321, %v190, 0
      %v631 = vsel %vm321, %v191, 0
      %v634 = vsel %vm321, %v192, 0
      %v637 = vsel %vm321, %v193, 0
      %v640 = vsel %vm334, %v248, 0
      %642 = vmatprep.subr.mxu0 0.0
      %643 = vmatpush1.msra.mxu0 0.0
      %644 = vmatprep.subr.mxu0 0.0
      %645 = vmatpush1.msra.mxu0 0.0
      %646 = vmatprep.subr.mxu0 0.0
      %647 = vmatpush1.msra.mxu0 0.0
      %648 = vmatprep.subr.mxu0 0.0
      %649 = vmatpush1.msra.mxu0 0.0
      %650 = vmatprep.subr.mxu0 0.0
      %651 = vmatpush1.msra.mxu0 0.0
      %652 = vmatprep.subr.mxu0 0.0
      %653 = vmatpush1.msra.mxu0 %v640
      %654 = vmatprep.subr.mxu0 0.0
      %655 = vmatpush1.msra.mxu0 %v247
      %656 = vmatprep.subr.mxu0 0.0
      %657 = vmatpush1.msra.mxu0 %v246
      %658 = vmatprep.subr.mxu0 0.0
      %659 = vmatpush1.msra.mxu0 %v245
      %660 = vmatprep.subr.mxu0 0.0
      %661 = vmatpush1.msra.mxu0 %v244
      %662 = vmatprep.subr.mxu0 0.0
      %663 = vmatpush1.msra.mxu0 %v243
      %664 = vmatprep.subr.mxu0 0.0
      %665 = vmatpush1.msra.mxu0 %v242
      %666 = vmatprep.subr.mxu0 0.0
      %667 = vmatpush1.msra.mxu0 %v241
      %668 = vmatprep.subr.mxu0 0.0
      %669 = vmatpush1.msra.mxu0 %v240
      %670 = vmatprep.subr.mxu0 0.0
      %671 = vmatpush1.msra.mxu0 %v239
      %672 = vmatprep.subr.mxu0 0.0
      %673 = vmatpush1.msra.mxu0 %v238
      %674 = vmatprep.subr.mxu0 0.0
      %675 = vmatpush2.msra.mxu0 0.0
      %676 = vmatprep.subr.mxu0 0.0
      %677 = vmatpush2.msra.mxu0 0.0
      %678 = vmatprep.subr.mxu0 0.0
      %679 = vmatpush2.msra.mxu0 0.0
      %680 = vmatprep.subr.mxu0 0.0
      %681 = vmatpush2.msra.mxu0 0.0
      %682 = vmatprep.subr.mxu0 0.0
      %683 = vmatpush2.msra.mxu0 0.0
      %684 = vmatprep.subr.mxu0 0.0
      %685 = vmatpush2.msra.mxu0 0.0
      %686 = vmatprep.subr.mxu0 0.0
      %687 = vmatpush2.msra.mxu0 0.0
      %688 = vmatprep.subr.mxu0 0.0
      %689 = vmatpush2.msra.mxu0 0.0
      %690 = vmatprep.subr.mxu0 0.0
      %691 = vmatpush2.msra.mxu0 0.0
      %692 = vmatprep.subr.mxu0 0.0
      %693 = vmatpush2.msra.mxu0 0.0
      %694 = vmatprep.subr.mxu0 0.0
      %695 = vmatpush2.msra.mxu0 0.0
      %696 = vmatprep.subr.mxu0 0.0
      %697 = vmatpush2.msra.mxu0 0.0
      %698 = vmatprep.subr.mxu0 0.0
      %699 = vmatpush2.msra.mxu0 0.0
      %700 = vmatprep.subr.mxu0 0.0
      %701 = vmatpush2.msra.mxu0 0.0
      %702 = vmatprep.subr.mxu0 0.0
      %703 = vmatpush2.msra.mxu0 0.0
      %704 = vmatprep.subr.mxu0 0.0
      %705 = vmatpush2.msra.mxu0 0.0
      %706 = vmatprep.mubr.f32.mxu0 0.0
      %707 = vmatmul.mubr.f32.gmra.mxu0 %v628
      %v708 = vpop.f32.mrf.mxu0
      %v709 = vadd.f32 0.0, %v708
      %v710 = vpop.f32.mrf.mxu0
      %711 = vmatprep.mubr.f32.mxu0 0.0
      %712 = vmatmul.mubr.f32.gmra.mxu0 %v631
      %v713 = vpop.f32.mrf.mxu0
      %v714 = vadd.f32 0.0, %v713
      %v715 = vpop.f32.mrf.mxu0
      %716 = vmatprep.mubr.f32.mxu0 0.0
      %717 = vmatmul.mubr.f32.gmra.mxu0 %v634
      %v718 = vpop.f32.mrf.mxu0
      %v719 = vadd.f32 0.0, %v718
      %v720 = vpop.f32.mrf.mxu0
      %721 = vmatprep.mubr.f32.mxu0 0.0
      %722 = vmatmul.mubr.f32.gmra.mxu0 %v637
      %v723 = vpop.f32.mrf.mxu0
      %v724 = vadd.f32 0.0, %v723
      %v725 = vpop.f32.mrf.mxu0
      %726 = vdwg.mxu0
      %v727 = vadd.f32 %v623, %v709
      %v728 = vadd.f32 %v624, %v714
      %v729 = vadd.f32 %v625, %v719
      %v730 = vadd.f32 %v626, %v724
      %v732 = vsel %vm321, %v194, 0
      %v735 = vsel %vm321, %v195, 0
      %v738 = vsel %vm321, %v196, 0
      %v741 = vsel %vm321, %v197, 0
      %v744 = vsel %vm334, %v260, 0
      %746 = vmatprep.subr.mxu0 0.0
      %747 = vmatpush1.msra.mxu0 0.0
      %748 = vmatprep.subr.mxu0 0.0
      %749 = vmatpush1.msra.mxu0 0.0
      %750 = vmatprep.subr.mxu0 0.0
      %751 = vmatpush1.msra.mxu0 0.0
      %752 = vmatprep.subr.mxu0 0.0
      %753 = vmatpush1.msra.mxu0 0.0
      %754 = vmatprep.subr.mxu0 0.0
      %755 = vmatpush1.msra.mxu0 0.0
      %756 = vmatprep.subr.mxu0 0.0
      %757 = vmatpush1.msra.mxu0 %v744
      %758 = vmatprep.subr.mxu0 0.0
      %759 = vmatpush1.msra.mxu0 %v259
      %760 = vmatprep.subr.mxu0 0.0
      %761 = vmatpush1.msra.mxu0 %v258
      %762 = vmatprep.subr.mxu0 0.0
      %763 = vmatpush1.msra.mxu0 %v257
      %764 = vmatprep.subr.mxu0 0.0
      %765 = vmatpush1.msra.mxu0 %v256
      %766 = vmatprep.subr.mxu0 0.0
      %767 = vmatpush1.msra.mxu0 %v255
      %768 = vmatprep.subr.mxu0 0.0
      %769 = vmatpush1.msra.mxu0 %v254
      %770 = vmatprep.subr.mxu0 0.0
      %771 = vmatpush1.msra.mxu0 %v253
      %772 = vmatprep.subr.mxu0 0.0
      %773 = vmatpush1.msra.mxu0 %v252
      %774 = vmatprep.subr.mxu0 0.0
      %775 = vmatpush1.msra.mxu0 %v251
      %776 = vmatprep.subr.mxu0 0.0
      %777 = vmatpush1.msra.mxu0 %v250
      %778 = vmatprep.subr.mxu0 0.0
      %779 = vmatpush2.msra.mxu0 0.0
      %780 = vmatprep.subr.mxu0 0.0
      %781 = vmatpush2.msra.mxu0 0.0
      %782 = vmatprep.subr.mxu0 0.0
      %783 = vmatpush2.msra.mxu0 0.0
      %784 = vmatprep.subr.mxu0 0.0
      %785 = vmatpush2.msra.mxu0 0.0
      %786 = vmatprep.subr.mxu0 0.0
      %787 = vmatpush2.msra.mxu0 0.0
      %788 = vmatprep.subr.mxu0 0.0
      %789 = vmatpush2.msra.mxu0 0.0
      %790 = vmatprep.subr.mxu0 0.0
      %791 = vmatpush2.msra.mxu0 0.0
      %792 = vmatprep.subr.mxu0 0.0
      %793 = vmatpush2.msra.mxu0 0.0
      %794 = vmatprep.subr.mxu0 0.0
      %795 = vmatpush2.msra.mxu0 0.0
      %796 = vmatprep.subr.mxu0 0.0
      %797 = vmatpush2.msra.mxu0 0.0
      %798 = vmatprep.subr.mxu0 0.0
      %799 = vmatpush2.msra.mxu0 0.0
      %800 = vmatprep.subr.mxu0 0.0
      %801 = vmatpush2.msra.mxu0 0.0
      %802 = vmatprep.subr.mxu0 0.0
      %803 = vmatpush2.msra.mxu0 0.0
      %804 = vmatprep.subr.mxu0 0.0
      %805 = vmatpush2.msra.mxu0 0.0
      %806 = vmatprep.subr.mxu0 0.0
      %807 = vmatpush2.msra.mxu0 0.0
      %808 = vmatprep.subr.mxu0 0.0
      %809 = vmatpush2.msra.mxu0 0.0
      %810 = vmatprep.mubr.f32.mxu0 0.0
      %811 = vmatmul.mubr.f32.gmra.mxu0 %v732
      %v812 = vpop.f32.mrf.mxu0
      %v813 = vadd.f32 0.0, %v812
      %v814 = vpop.f32.mrf.mxu0
      %815 = vmatprep.mubr.f32.mxu0 0.0
      %816 = vmatmul.mubr.f32.gmra.mxu0 %v735
      %v817 = vpop.f32.mrf.mxu0
      %v818 = vadd.f32 0.0, %v817
      %v819 = vpop.f32.mrf.mxu0
      %820 = vmatprep.mubr.f32.mxu0 0.0
      %821 = vmatmul.mubr.f32.gmra.mxu0 %v738
      %v822 = vpop.f32.mrf.mxu0
      %v823 = vadd.f32 0.0, %v822
      %v824 = vpop.f32.mrf.mxu0
      %825 = vmatprep.mubr.f32.mxu0 0.0
      %826 = vmatmul.mubr.f32.gmra.mxu0 %v741
      %v827 = vpop.f32.mrf.mxu0
      %v828 = vadd.f32 0.0, %v827
      %v829 = vpop.f32.mrf.mxu0
      %830 = vdwg.mxu0
      %v831 = vadd.f32 %v727, %v813
      %v832 = vadd.f32 %v728, %v818
      %v833 = vadd.f32 %v729, %v823
      %v834 = vadd.f32 %v730, %v828
      %v836 = vsel %vm334, %v284, 0
      %838 = vmatprep.subr.mxu0 0.0
      %839 = vmatpush1.msra.mxu0 0.0
      %840 = vmatprep.subr.mxu0 0.0
      %841 = vmatpush1.msra.mxu0 0.0
      %842 = vmatprep.subr.mxu0 0.0
      %843 = vmatpush1.msra.mxu0 0.0
      %844 = vmatprep.subr.mxu0 0.0
      %845 = vmatpush1.msra.mxu0 0.0
      %846 = vmatprep.subr.mxu0 0.0
      %847 = vmatpush1.msra.mxu0 0.0
      %848 = vmatprep.subr.mxu0 0.0
      %849 = vmatpush1.msra.mxu0 %v836
      %850 = vmatprep.subr.mxu0 0.0
      %851 = vmatpush1.msra.mxu0 %v283
      %852 = vmatprep.subr.mxu0 0.0
      %853 = vmatpush1.msra.mxu0 %v282
      %854 = vmatprep.subr.mxu0 0.0
      %855 = vmatpush1.msra.mxu0 %v281
      %856 = vmatprep.subr.mxu0 0.0
      %857 = vmatpush1.msra.mxu0 %v280
      %858 = vmatprep.subr.mxu0 0.0
      %859 = vmatpush1.msra.mxu0 %v279
      %860 = vmatprep.subr.mxu0 0.0
      %861 = vmatpush1.msra.mxu0 %v278
      %862 = vmatprep.subr.mxu0 0.0
      %863 = vmatpush1.msra.mxu0 %v277
      %864 = vmatprep.subr.mxu0 0.0
      %865 = vmatpush1.msra.mxu0 %v276
      %866 = vmatprep.subr.mxu0 0.0
      %867 = vmatpush1.msra.mxu0 %v275
      %868 = vmatprep.subr.mxu0 0.0
      %869 = vmatpush1.msra.mxu0 %v274
      %870 = vmatprep.subr.mxu0 0.0
      %871 = vmatpush2.msra.mxu0 0.0
      %872 = vmatprep.subr.mxu0 0.0
      %873 = vmatpush2.msra.mxu0 0.0
      %874 = vmatprep.subr.mxu0 0.0
      %875 = vmatpush2.msra.mxu0 0.0
      %876 = vmatprep.subr.mxu0 0.0
      %877 = vmatpush2.msra.mxu0 0.0
      %878 = vmatprep.subr.mxu0 0.0
      %879 = vmatpush2.msra.mxu0 0.0
      %880 = vmatprep.subr.mxu0 0.0
      %881 = vmatpush2.msra.mxu0 0.0
      %882 = vmatprep.subr.mxu0 0.0
      %883 = vmatpush2.msra.mxu0 0.0
      %884 = vmatprep.subr.mxu0 0.0
      %885 = vmatpush2.msra.mxu0 0.0
      %886 = vmatprep.subr.mxu0 0.0
      %887 = vmatpush2.msra.mxu0 0.0
      %888 = vmatprep.subr.mxu0 0.0
      %889 = vmatpush2.msra.mxu0 0.0
      %890 = vmatprep.subr.mxu0 0.0
      %891 = vmatpush2.msra.mxu0 0.0
      %892 = vmatprep.subr.mxu0 0.0
      %893 = vmatpush2.msra.mxu0 0.0
      %894 = vmatprep.subr.mxu0 0.0
      %895 = vmatpush2.msra.mxu0 0.0
      %896 = vmatprep.subr.mxu0 0.0
      %897 = vmatpush2.msra.mxu0 0.0
      %898 = vmatprep.subr.mxu0 0.0
      %899 = vmatpush2.msra.mxu0 0.0
      %900 = vmatprep.subr.mxu0 0.0
      %901 = vmatpush2.msra.mxu0 0.0
      %902 = vmatprep.mubr.f32.mxu0 0.0
      %903 = vmatmul.mubr.f32.gmra.mxu0 %v323
      %v904 = vpop.f32.mrf.mxu0
      %v905 = vadd.f32 0.0, %v904
      %v906 = vpop.f32.mrf.mxu0
      %907 = vmatprep.mubr.f32.mxu0 0.0
      %908 = vmatmul.mubr.f32.gmra.mxu0 %v326
      %v909 = vpop.f32.mrf.mxu0
      %v910 = vadd.f32 0.0, %v909
      %v911 = vpop.f32.mrf.mxu0
      %912 = vmatprep.mubr.f32.mxu0 0.0
      %913 = vmatmul.mubr.f32.gmra.mxu0 %v329
      %v914 = vpop.f32.mrf.mxu0
      %v915 = vadd.f32 0.0, %v914
      %v916 = vpop.f32.mrf.mxu0
      %917 = vmatprep.mubr.f32.mxu0 0.0
      %918 = vmatmul.mubr.f32.gmra.mxu0 %v332
      %v919 = vpop.f32.mrf.mxu0
      %v920 = vadd.f32 0.0, %v919
      %v921 = vpop.f32.mrf.mxu0
      %922 = vdwg.mxu0
      %v924 = vsel %vm334, %v272, 0
      %926 = vmatprep.subr.mxu0 0.0
      %927 = vmatpush1.msra.mxu0 0.0
      %928 = vmatprep.subr.mxu0 0.0
      %929 = vmatpush1.msra.mxu0 0.0
      %930 = vmatprep.subr.mxu0 0.0
      %931 = vmatpush1.msra.mxu0 0.0
      %932 = vmatprep.subr.mxu0 0.0
      %933 = vmatpush1.msra.mxu0 0.0
      %934 = vmatprep.subr.mxu0 0.0
      %935 = vmatpush1.msra.mxu0 0.0
      %936 = vmatprep.subr.mxu0 0.0
      %937 = vmatpush1.msra.mxu0 %v924
      %938 = vmatprep.subr.mxu0 0.0
      %939 = vmatpush1.msra.mxu0 %v271
      %940 = vmatprep.subr.mxu0 0.0
      %941 = vmatpush1.msra.mxu0 %v270
      %942 = vmatprep.subr.mxu0 0.0
      %943 = vmatpush1.msra.mxu0 %v269
      %944 = vmatprep.subr.mxu0 0.0
      %945 = vmatpush1.msra.mxu0 %v268
      %946 = vmatprep.subr.mxu0 0.0
      %947 = vmatpush1.msra.mxu0 %v267
      %948 = vmatprep.subr.mxu0 0.0
      %949 = vmatpush1.msra.mxu0 %v266
      %950 = vmatprep.subr.mxu0 0.0
      %951 = vmatpush1.msra.mxu0 %v265
      %952 = vmatprep.subr.mxu0 0.0
      %953 = vmatpush1.msra.mxu0 %v264
      %954 = vmatprep.subr.mxu0 0.0
      %955 = vmatpush1.msra.mxu0 %v263
      %956 = vmatprep.subr.mxu0 0.0
      %957 = vmatpush1.msra.mxu0 %v262
      %958 = vmatprep.subr.mxu0 0.0
      %959 = vmatpush2.msra.mxu0 0.0
      %960 = vmatprep.subr.mxu0 0.0
      %961 = vmatpush2.msra.mxu0 0.0
      %962 = vmatprep.subr.mxu0 0.0
      %963 = vmatpush2.msra.mxu0 0.0
      %964 = vmatprep.subr.mxu0 0.0
      %965 = vmatpush2.msra.mxu0 0.0
      %966 = vmatprep.subr.mxu0 0.0
      %967 = vmatpush2.msra.mxu0 0.0
      %968 = vmatprep.subr.mxu0 0.0
      %969 = vmatpush2.msra.mxu0 0.0
      %970 = vmatprep.subr.mxu0 0.0
      %971 = vmatpush2.msra.mxu0 0.0
      %972 = vmatprep.subr.mxu0 0.0
      %973 = vmatpush2.msra.mxu0 0.0
      %974 = vmatprep.subr.mxu0 0.0
      %975 = vmatpush2.msra.mxu0 0.0
      %976 = vmatprep.subr.mxu0 0.0
      %977 = vmatpush2.msra.mxu0 0.0
      %978 = vmatprep.subr.mxu0 0.0
      %979 = vmatpush2.msra.mxu0 0.0
      %980 = vmatprep.subr.mxu0 0.0
      %981 = vmatpush2.msra.mxu0 0.0
      %982 = vmatprep.subr.mxu0 0.0
      %983 = vmatpush2.msra.mxu0 0.0
      %984 = vmatprep.subr.mxu0 0.0
      %985 = vmatpush2.msra.mxu0 0.0
      %986 = vmatprep.subr.mxu0 0.0
      %987 = vmatpush2.msra.mxu0 0.0
      %988 = vmatprep.subr.mxu0 0.0
      %989 = vmatpush2.msra.mxu0 0.0
      %990 = vmatprep.mubr.f32.mxu0 0.0
      %991 = vmatmul.mubr.f32.gmra.mxu0 %v424
      %v992 = vpop.f32.mrf.mxu0
      %v993 = vadd.f32 %v905, %v992
      %v994 = vpop.f32.mrf.mxu0
      %995 = vmatprep.mubr.f32.mxu0 0.0
      %996 = vmatmul.mubr.f32.gmra.mxu0 %v427
      %v997 = vpop.f32.mrf.mxu0
      %v998 = vadd.f32 %v910, %v997
      %v999 = vpop.f32.mrf.mxu0
      %1000 = vmatprep.mubr.f32.mxu0 0.0
      %1001 = vmatmul.mubr.f32.gmra.mxu0 %v430
      %v1002 = vpop.f32.mrf.mxu0
      %v1003 = vadd.f32 %v915, %v1002
      %v1004 = vpop.f32.mrf.mxu0
      %1005 = vmatprep.mubr.f32.mxu0 0.0
      %1006 = vmatmul.mubr.f32.gmra.mxu0 %v433
      %v1007 = vpop.f32.mrf.mxu0
      %v1008 = vadd.f32 %v920, %v1007
      %v1009 = vpop.f32.mrf.mxu0
      %1010 = vdwg.mxu0
      %v1012 = vsel %vm334, %v296, 0
      %1014 = vmatprep.subr.mxu0 0.0
      %1015 = vmatpush1.msra.mxu0 0.0
      %1016 = vmatprep.subr.mxu0 0.0
      %1017 = vmatpush1.msra.mxu0 0.0
      %1018 = vmatprep.subr.mxu0 0.0
      %1019 = vmatpush1.msra.mxu0 0.0
      %1020 = vmatprep.subr.mxu0 0.0
      %1021 = vmatpush1.msra.mxu0 0.0
      %1022 = vmatprep.subr.mxu0 0.0
      %1023 = vmatpush1.msra.mxu0 0.0
      %1024 = vmatprep.subr.mxu0 0.0
      %1025 = vmatpush1.msra.mxu0 %v1012
      %1026 = vmatprep.subr.mxu0 0.0
      %1027 = vmatpush1.msra.mxu0 %v295
      %1028 = vmatprep.subr.mxu0 0.0
      %1029 = vmatpush1.msra.mxu0 %v294
      %1030 = vmatprep.subr.mxu0 0.0
      %1031 = vmatpush1.msra.mxu0 %v293
      %1032 = vmatprep.subr.mxu0 0.0
      %1033 = vmatpush1.msra.mxu0 %v292
      %1034 = vmatprep.subr.mxu0 0.0
      %1035 = vmatpush1.msra.mxu0 %v291
      %1036 = vmatprep.subr.mxu0 0.0
      %1037 = vmatpush1.msra.mxu0 %v290
      %1038 = vmatprep.subr.mxu0 0.0
      %1039 = vmatpush1.msra.mxu0 %v289
      %1040 = vmatprep.subr.mxu0 0.0
      %1041 = vmatpush1.msra.mxu0 %v288
      %1042 = vmatprep.subr.mxu0 0.0
      %1043 = vmatpush1.msra.mxu0 %v287
      %1044 = vmatprep.subr.mxu0 0.0
      %1045 = vmatpush1.msra.mxu0 %v286
      %1046 = vmatprep.subr.mxu0 0.0
      %1047 = vmatpush2.msra.mxu0 0.0
      %1048 = vmatprep.subr.mxu0 0.0
      %1049 = vmatpush2.msra.mxu0 0.0
      %1050 = vmatprep.subr.mxu0 0.0
      %1051 = vmatpush2.msra.mxu0 0.0
      %1052 = vmatprep.subr.mxu0 0.0
      %1053 = vmatpush2.msra.mxu0 0.0
      %1054 = vmatprep.subr.mxu0 0.0
      %1055 = vmatpush2.msra.mxu0 0.0
      %1056 = vmatprep.subr.mxu0 0.0
      %1057 = vmatpush2.msra.mxu0 0.0
      %1058 = vmatprep.subr.mxu0 0.0
      %1059 = vmatpush2.msra.mxu0 0.0
      %1060 = vmatprep.subr.mxu0 0.0
      %1061 = vmatpush2.msra.mxu0 0.0
      %1062 = vmatprep.subr.mxu0 0.0
      %1063 = vmatpush2.msra.mxu0 0.0
      %1064 = vmatprep.subr.mxu0 0.0
      %1065 = vmatpush2.msra.mxu0 0.0
      %1066 = vmatprep.subr.mxu0 0.0
      %1067 = vmatpush2.msra.mxu0 0.0
      %1068 = vmatprep.subr.mxu0 0.0
      %1069 = vmatpush2.msra.mxu0 0.0
      %1070 = vmatprep.subr.mxu0 0.0
      %1071 = vmatpush2.msra.mxu0 0.0
      %1072 = vmatprep.subr.mxu0 0.0
      %1073 = vmatpush2.msra.mxu0 0.0
      %1074 = vmatprep.subr.mxu0 0.0
      %1075 = vmatpush2.msra.mxu0 0.0
      %1076 = vmatprep.subr.mxu0 0.0
      %1077 = vmatpush2.msra.mxu0 0.0
      %1078 = vmatprep.mubr.f32.mxu0 0.0
      %1079 = vmatmul.mubr.f32.gmra.mxu0 %v524
      %v1080 = vpop.f32.mrf.mxu0
      %v1081 = vadd.f32 0.0, %v1080
      %v1082 = vpop.f32.mrf.mxu0
      %1083 = vmatprep.mubr.f32.mxu0 0.0
      %1084 = vmatmul.mubr.f32.gmra.mxu0 %v527
      %v1085 = vpop.f32.mrf.mxu0
      %v1086 = vadd.f32 0.0, %v1085
      %v1087 = vpop.f32.mrf.mxu0
      %1088 = vmatprep.mubr.f32.mxu0 0.0
      %1089 = vmatmul.mubr.f32.gmra.mxu0 %v530
      %v1090 = vpop.f32.mrf.mxu0
      %v1091 = vadd.f32 0.0, %v1090
      %v1092 = vpop.f32.mrf.mxu0
      %1093 = vmatprep.mubr.f32.mxu0 0.0
      %1094 = vmatmul.mubr.f32.gmra.mxu0 %v533
      %v1095 = vpop.f32.mrf.mxu0
      %v1096 = vadd.f32 0.0, %v1095
      %v1097 = vpop.f32.mrf.mxu0
      %1098 = vdwg.mxu0
      %v1099 = vadd.f32 %v993, %v1081
      %v1100 = vadd.f32 %v998, %v1086
      %v1101 = vadd.f32 %v1003, %v1091
      %v1102 = vadd.f32 %v1008, %v1096
      %v1104 = vsel %vm334, %v308, 0
      %1106 = vmatprep.subr.mxu0 0.0
      %1107 = vmatpush1.msra.mxu0 0.0
      %1108 = vmatprep.subr.mxu0 0.0
      %1109 = vmatpush1.msra.mxu0 0.0
      %1110 = vmatprep.subr.mxu0 0.0
      %1111 = vmatpush1.msra.mxu0 0.0
      %1112 = vmatprep.subr.mxu0 0.0
      %1113 = vmatpush1.msra.mxu0 0.0
      %1114 = vmatprep.subr.mxu0 0.0
      %1115 = vmatpush1.msra.mxu0 0.0
      %1116 = vmatprep.subr.mxu0 0.0
      %1117 = vmatpush1.msra.mxu0 %v1104
      %1118 = vmatprep.subr.mxu0 0.0
      %1119 = vmatpush1.msra.mxu0 %v307
      %1120 = vmatprep.subr.mxu0 0.0
      %1121 = vmatpush1.msra.mxu0 %v306
      %1122 = vmatprep.subr.mxu0 0.0
      %1123 = vmatpush1.msra.mxu0 %v305
      %1124 = vmatprep.subr.mxu0 0.0
      %1125 = vmatpush1.msra.mxu0 %v304
      %1126 = vmatprep.subr.mxu0 0.0
      %1127 = vmatpush1.msra.mxu0 %v303
      %1128 = vmatprep.subr.mxu0 0.0
      %1129 = vmatpush1.msra.mxu0 %v302
      %1130 = vmatprep.subr.mxu0 0.0
      %1131 = vmatpush1.msra.mxu0 %v301
      %1132 = vmatprep.subr.mxu0 0.0
      %1133 = vmatpush1.msra.mxu0 %v300
      %1134 = vmatprep.subr.mxu0 0.0
      %1135 = vmatpush1.msra.mxu0 %v299
      %1136 = vmatprep.subr.mxu0 0.0
      %1137 = vmatpush1.msra.mxu0 %v298
      %1138 = vmatprep.subr.mxu0 0.0
      %1139 = vmatpush2.msra.mxu0 0.0
      %1140 = vmatprep.subr.mxu0 0.0
      %1141 = vmatpush2.msra.mxu0 0.0
      %1142 = vmatprep.subr.mxu0 0.0
      %1143 = vmatpush2.msra.mxu0 0.0
      %1144 = vmatprep.subr.mxu0 0.0
      %1145 = vmatpush2.msra.mxu0 0.0
      %1146 = vmatprep.subr.mxu0 0.0
      %1147 = vmatpush2.msra.mxu0 0.0
      %1148 = vmatprep.subr.mxu0 0.0
      %1149 = vmatpush2.msra.mxu0 0.0
      %1150 = vmatprep.subr.mxu0 0.0
      %1151 = vmatpush2.msra.mxu0 0.0
      %1152 = vmatprep.subr.mxu0 0.0
      %1153 = vmatpush2.msra.mxu0 0.0
      %1154 = vmatprep.subr.mxu0 0.0
      %1155 = vmatpush2.msra.mxu0 0.0
      %1156 = vmatprep.subr.mxu0 0.0
      %1157 = vmatpush2.msra.mxu0 0.0
      %1158 = vmatprep.subr.mxu0 0.0
      %1159 = vmatpush2.msra.mxu0 0.0
      %1160 = vmatprep.subr.mxu0 0.0
      %1161 = vmatpush2.msra.mxu0 0.0
      %1162 = vmatprep.subr.mxu0 0.0
      %1163 = vmatpush2.msra.mxu0 0.0
      %1164 = vmatprep.subr.mxu0 0.0
      %1165 = vmatpush2.msra.mxu0 0.0
      %1166 = vmatprep.subr.mxu0 0.0
      %1167 = vmatpush2.msra.mxu0 0.0
      %1168 = vmatprep.subr.mxu0 0.0
      %1169 = vmatpush2.msra.mxu0 0.0
      %1170 = vmatprep.mubr.f32.mxu0 0.0
      %1171 = vmatmul.mubr.f32.gmra.mxu0 %v628
      %v1172 = vpop.f32.mrf.mxu0
      %v1173 = vadd.f32 0.0, %v1172
      %v1174 = vpop.f32.mrf.mxu0
      %1175 = vmatprep.mubr.f32.mxu0 0.0
      %1176 = vmatmul.mubr.f32.gmra.mxu0 %v631
      %v1177 = vpop.f32.mrf.mxu0
      %v1178 = vadd.f32 0.0, %v1177
      %v1179 = vpop.f32.mrf.mxu0
      %1180 = vmatprep.mubr.f32.mxu0 0.0
      %1181 = vmatmul.mubr.f32.gmra.mxu0 %v634
      %v1182 = vpop.f32.mrf.mxu0
      %v1183 = vadd.f32 0.0, %v1182
      %v1184 = vpop.f32.mrf.mxu0
      %1185 = vmatprep.mubr.f32.mxu0 0.0
      %1186 = vmatmul.mubr.f32.gmra.mxu0 %v637
      %v1187 = vpop.f32.mrf.mxu0
      %v1188 = vadd.f32 0.0, %v1187
      %v1189 = vpop.f32.mrf.mxu0
      %1190 = vdwg.mxu0
      %v1191 = vadd.f32 %v1099, %v1173
      %v1192 = vadd.f32 %v1100, %v1178
      %v1193 = vadd.f32 %v1101, %v1183
      %v1194 = vadd.f32 %v1102, %v1188
      %v1196 = vsel %vm334, %v320, 0
      %1198 = vmatprep.subr.mxu0 0.0
      %1199 = vmatpush1.msra.mxu0 0.0
      %1200 = vmatprep.subr.mxu0 0.0
      %1201 = vmatpush1.msra.mxu0 0.0
      %1202 = vmatprep.subr.mxu0 0.0
      %1203 = vmatpush1.msra.mxu0 0.0
      %1204 = vmatprep.subr.mxu0 0.0
      %1205 = vmatpush1.msra.mxu0 0.0
      %1206 = vmatprep.subr.mxu0 0.0
      %1207 = vmatpush1.msra.mxu0 0.0
      %1208 = vmatprep.subr.mxu0 0.0
      %1209 = vmatpush1.msra.mxu0 %v1196
      %1210 = vmatprep.subr.mxu0 0.0
      %1211 = vmatpush1.msra.mxu0 %v319
      %1212 = vmatprep.subr.mxu0 0.0
      %1213 = vmatpush1.msra.mxu0 %v318
      %1214 = vmatprep.subr.mxu0 0.0
      %1215 = vmatpush1.msra.mxu0 %v317
      %1216 = vmatprep.subr.mxu0 0.0
      %1217 = vmatpush1.msra.mxu0 %v316
      %1218 = vmatprep.subr.mxu0 0.0
      %1219 = vmatpush1.msra.mxu0 %v315
      %1220 = vmatprep.subr.mxu0 0.0
      %1221 = vmatpush1.msra.mxu0 %v314
      %1222 = vmatprep.subr.mxu0 0.0
      %1223 = vmatpush1.msra.mxu0 %v313
      %1224 = vmatprep.subr.mxu0 0.0
      %1225 = vmatpush1.msra.mxu0 %v312
      %1226 = vmatprep.subr.mxu0 0.0
      %1227 = vmatpush1.msra.mxu0 %v311
      %1228 = vmatprep.subr.mxu0 0.0
      %1229 = vmatpush1.msra.mxu0 %v310
      %1230 = vmatprep.subr.mxu0 0.0
      %1231 = vmatpush2.msra.mxu0 0.0
      %1232 = vmatprep.subr.mxu0 0.0
      %1233 = vmatpush2.msra.mxu0 0.0
      %1234 = vmatprep.subr.mxu0 0.0
      %1235 = vmatpush2.msra.mxu0 0.0
      %1236 = vmatprep.subr.mxu0 0.0
      %1237 = vmatpush2.msra.mxu0 0.0
      %1238 = vmatprep.subr.mxu0 0.0
      %1239 = vmatpush2.msra.mxu0 0.0
      %1240 = vmatprep.subr.mxu0 0.0
      %1241 = vmatpush2.msra.mxu0 0.0
      %1242 = vmatprep.subr.mxu0 0.0
      %1243 = vmatpush2.msra.mxu0 0.0
      %1244 = vmatprep.subr.mxu0 0.0
      %1245 = vmatpush2.msra.mxu0 0.0
      %1246 = vmatprep.subr.mxu0 0.0
      %1247 = vmatpush2.msra.mxu0 0.0
      %1248 = vmatprep.subr.mxu0 0.0
      %1249 = vmatpush2.msra.mxu0 0.0
      %1250 = vmatprep.subr.mxu0 0.0
      %1251 = vmatpush2.msra.mxu0 0.0
      %1252 = vmatprep.subr.mxu0 0.0
      %1253 = vmatpush2.msra.mxu0 0.0
      %1254 = vmatprep.subr.mxu0 0.0
      %1255 = vmatpush2.msra.mxu0 0.0
      %1256 = vmatprep.subr.mxu0 0.0
      %1257 = vmatpush2.msra.mxu0 0.0
      %1258 = vmatprep.subr.mxu0 0.0
      %1259 = vmatpush2.msra.mxu0 0.0
      %1260 = vmatprep.subr.mxu0 0.0
      %1261 = vmatpush2.msra.mxu0 0.0
      %1262 = vmatprep.mubr.f32.mxu0 0.0
      %1263 = vmatmul.mubr.f32.gmra.mxu0 %v732
      %v1264 = vpop.f32.mrf.mxu0
      %v1265 = vadd.f32 0.0, %v1264
      %v1266 = vpop.f32.mrf.mxu0
      %1267 = vmatprep.mubr.f32.mxu0 0.0
      %1268 = vmatmul.mubr.f32.gmra.mxu0 %v735
      %v1269 = vpop.f32.mrf.mxu0
      %v1270 = vadd.f32 0.0, %v1269
      %v1271 = vpop.f32.mrf.mxu0
      %1272 = vmatprep.mubr.f32.mxu0 0.0
      %1273 = vmatmul.mubr.f32.gmra.mxu0 %v738
      %v1274 = vpop.f32.mrf.mxu0
      %v1275 = vadd.f32 0.0, %v1274
      %v1276 = vpop.f32.mrf.mxu0
      %1277 = vmatprep.mubr.f32.mxu0 0.0
      %1278 = vmatmul.mubr.f32.gmra.mxu0 %v741
      %v1279 = vpop.f32.mrf.mxu0
      %v1280 = vadd.f32 0.0, %v1279
      %v1281 = vpop.f32.mrf.mxu0
      %1282 = vdwg.mxu0
      %v1283 = vadd.f32 %v1191, %v1265
      %v1284 = vadd.f32 %v1192, %v1270
      %v1285 = vadd.f32 %v1193, %v1275
      %v1286 = vadd.f32 %v1194, %v1280
      %v1287 = vmax.f32 %v831, %v1283
      %v1288 = vmax.f32 %v832, %v1284
      %v1289 = vmax.f32 %v833, %v1285
      %v1290 = vmax.f32 %v834, %v1286
      %1291 = vmatprep.subr.mxu0 0.0
      %1292 = vmatpush1.msra.mxu0 0.0
      %1293 = vmatprep.subr.mxu0 0.0
      %1294 = vmatpush1.msra.mxu0 0.0
      %1295 = vmatprep.subr.mxu0 0.0
      %1296 = vmatpush1.msra.mxu0 0.0
      %1297 = vmatprep.subr.mxu0 0.0
      %1298 = vmatpush1.msra.mxu0 0.0
      %1299 = vmatprep.subr.mxu0 0.0
      %1300 = vmatpush1.msra.mxu0 0.0
      %1301 = vmatprep.subr.mxu0 0.0
      %1302 = vmatpush1.msra.mxu0 %v336
      %1303 = vmatprep.subr.mxu0 0.0
      %1304 = vmatpush1.msra.mxu0 %v223
      %1305 = vmatprep.subr.mxu0 0.0
      %1306 = vmatpush1.msra.mxu0 %v222
      %1307 = vmatprep.subr.mxu0 0.0
      %1308 = vmatpush1.msra.mxu0 %v221
      %1309 = vmatprep.subr.mxu0 0.0
      %1310 = vmatpush1.msra.mxu0 %v220
      %1311 = vmatprep.subr.mxu0 0.0
      %1312 = vmatpush1.msra.mxu0 %v219
      %1313 = vmatprep.subr.mxu0 0.0
      %1314 = vmatpush1.msra.mxu0 %v218
      %1315 = vmatprep.subr.mxu0 0.0
      %1316 = vmatpush1.msra.mxu0 %v217
      %1317 = vmatprep.subr.mxu0 0.0
      %1318 = vmatpush1.msra.mxu0 %v216
      %1319 = vmatprep.subr.mxu0 0.0
      %1320 = vmatpush1.msra.mxu0 %v215
      %1321 = vmatprep.subr.mxu0 0.0
      %1322 = vmatpush1.msra.mxu0 %v214
      %1323 = vmatprep.subr.mxu0 0.0
      %1324 = vmatpush2.msra.mxu0 0.0
      %1325 = vmatprep.subr.mxu0 0.0
      %1326 = vmatpush2.msra.mxu0 0.0
      %1327 = vmatprep.subr.mxu0 0.0
      %1328 = vmatpush2.msra.mxu0 0.0
      %1329 = vmatprep.subr.mxu0 0.0
      %1330 = vmatpush2.msra.mxu0 0.0
      %1331 = vmatprep.subr.mxu0 0.0
      %1332 = vmatpush2.msra.mxu0 0.0
      %1333 = vmatprep.subr.mxu0 0.0
      %1334 = vmatpush2.msra.mxu0 0.0
      %1335 = vmatprep.subr.mxu0 0.0
      %1336 = vmatpush2.msra.mxu0 0.0
      %1337 = vmatprep.subr.mxu0 0.0
      %1338 = vmatpush2.msra.mxu0 0.0
      %1339 = vmatprep.subr.mxu0 0.0
      %1340 = vmatpush2.msra.mxu0 0.0
      %1341 = vmatprep.subr.mxu0 0.0
      %1342 = vmatpush2.msra.mxu0 0.0
      %1343 = vmatprep.subr.mxu0 0.0
      %1344 = vmatpush2.msra.mxu0 0.0
      %1345 = vmatprep.subr.mxu0 0.0
      %1346 = vmatpush2.msra.mxu0 0.0
      %1347 = vmatprep.subr.mxu0 0.0
      %1348 = vmatpush2.msra.mxu0 0.0
      %1349 = vmatprep.subr.mxu0 0.0
      %1350 = vmatpush2.msra.mxu0 0.0
      %1351 = vmatprep.subr.mxu0 0.0
      %1352 = vmatpush2.msra.mxu0 0.0
      %1353 = vmatprep.subr.mxu0 0.0
      %1354 = vmatpush2.msra.mxu0 0.0
      %1355 = vmatprep.mubr.f32.mxu0 0.0
      %1356 = vmatmul.mubr.f32.gmra.mxu0 %v524
      %v1357 = vpop.f32.mrf.mxu0
      %v1358 = vadd.f32 0.0, %v1357
      %v1359 = vpop.f32.mrf.mxu0
      %1360 = vmatprep.mubr.f32.mxu0 0.0
      %1361 = vmatmul.mubr.f32.gmra.mxu0 %v527
      %v1362 = vpop.f32.mrf.mxu0
      %v1363 = vadd.f32 0.0, %v1362
      %v1364 = vpop.f32.mrf.mxu0
      %1365 = vmatprep.mubr.f32.mxu0 0.0
      %1366 = vmatmul.mubr.f32.gmra.mxu0 %v530
      %v1367 = vpop.f32.mrf.mxu0
      %v1368 = vadd.f32 0.0, %v1367
      %v1369 = vpop.f32.mrf.mxu0
      %1370 = vmatprep.mubr.f32.mxu0 0.0
      %1371 = vmatmul.mubr.f32.gmra.mxu0 %v533
      %v1372 = vpop.f32.mrf.mxu0
      %v1373 = vadd.f32 0.0, %v1372
      %v1374 = vpop.f32.mrf.mxu0
      %1375 = vdwg.mxu0
      %1376 = vmatprep.subr.mxu0 0.0
      %1377 = vmatpush1.msra.mxu0 0.0
      %1378 = vmatprep.subr.mxu0 0.0
      %1379 = vmatpush1.msra.mxu0 0.0
      %1380 = vmatprep.subr.mxu0 0.0
      %1381 = vmatpush1.msra.mxu0 0.0
      %1382 = vmatprep.subr.mxu0 0.0
      %1383 = vmatpush1.msra.mxu0 0.0
      %1384 = vmatprep.subr.mxu0 0.0
      %1385 = vmatpush1.msra.mxu0 0.0
      %1386 = vmatprep.subr.mxu0 0.0
      %1387 = vmatpush1.msra.mxu0 %v436
      %1388 = vmatprep.subr.mxu0 0.0
      %1389 = vmatpush1.msra.mxu0 %v211
      %1390 = vmatprep.subr.mxu0 0.0
      %1391 = vmatpush1.msra.mxu0 %v210
      %1392 = vmatprep.subr.mxu0 0.0
      %1393 = vmatpush1.msra.mxu0 %v209
      %1394 = vmatprep.subr.mxu0 0.0
      %1395 = vmatpush1.msra.mxu0 %v208
      %1396 = vmatprep.subr.mxu0 0.0
      %1397 = vmatpush1.msra.mxu0 %v207
      %1398 = vmatprep.subr.mxu0 0.0
      %1399 = vmatpush1.msra.mxu0 %v206
      %1400 = vmatprep.subr.mxu0 0.0
      %1401 = vmatpush1.msra.mxu0 %v205
      %1402 = vmatprep.subr.mxu0 0.0
      %1403 = vmatpush1.msra.mxu0 %v204
      %1404 = vmatprep.subr.mxu0 0.0
      %1405 = vmatpush1.msra.mxu0 %v203
      %1406 = vmatprep.subr.mxu0 0.0
      %1407 = vmatpush1.msra.mxu0 %v202
      %1408 = vmatprep.subr.mxu0 0.0
      %1409 = vmatpush2.msra.mxu0 0.0
      %1410 = vmatprep.subr.mxu0 0.0
      %1411 = vmatpush2.msra.mxu0 0.0
      %1412 = vmatprep.subr.mxu0 0.0
      %1413 = vmatpush2.msra.mxu0 0.0
      %1414 = vmatprep.subr.mxu0 0.0
      %1415 = vmatpush2.msra.mxu0 0.0
      %1416 = vmatprep.subr.mxu0 0.0
      %1417 = vmatpush2.msra.mxu0 0.0
      %1418 = vmatprep.subr.mxu0 0.0
      %1419 = vmatpush2.msra.mxu0 0.0
      %1420 = vmatprep.subr.mxu0 0.0
      %1421 = vmatpush2.msra.mxu0 0.0
      %1422 = vmatprep.subr.mxu0 0.0
      %1423 = vmatpush2.msra.mxu0 0.0
      %1424 = vmatprep.subr.mxu0 0.0
      %1425 = vmatpush2.msra.mxu0 0.0
      %1426 = vmatprep.subr.mxu0 0.0
      %1427 = vmatpush2.msra.mxu0 0.0
      %1428 = vmatprep.subr.mxu0 0.0
      %1429 = vmatpush2.msra.mxu0 0.0
      %1430 = vmatprep.subr.mxu0 0.0
      %1431 = vmatpush2.msra.mxu0 0.0
      %1432 = vmatprep.subr.mxu0 0.0
      %1433 = vmatpush2.msra.mxu0 0.0
      %1434 = vmatprep.subr.mxu0 0.0
      %1435 = vmatpush2.msra.mxu0 0.0
      %1436 = vmatprep.subr.mxu0 0.0
      %1437 = vmatpush2.msra.mxu0 0.0
      %1438 = vmatprep.subr.mxu0 0.0
      %1439 = vmatpush2.msra.mxu0 0.0
      %1440 = vmatprep.mubr.f32.mxu0 0.0
      %1441 = vmatmul.mubr.f32.gmra.mxu0 %v323
      %v1442 = vpop.f32.mrf.mxu0
      %v1443 = vadd.f32 %v1358, %v1442
      %v1444 = vpop.f32.mrf.mxu0
      %1445 = vmatprep.mubr.f32.mxu0 0.0
      %1446 = vmatmul.mubr.f32.gmra.mxu0 %v326
      %v1447 = vpop.f32.mrf.mxu0
      %v1448 = vadd.f32 %v1363, %v1447
      %v1449 = vpop.f32.mrf.mxu0
      %1450 = vmatprep.mubr.f32.mxu0 0.0
      %1451 = vmatmul.mubr.f32.gmra.mxu0 %v329
      %v1452 = vpop.f32.mrf.mxu0
      %v1453 = vadd.f32 %v1368, %v1452
      %v1454 = vpop.f32.mrf.mxu0
      %1455 = vmatprep.mubr.f32.mxu0 0.0
      %1456 = vmatmul.mubr.f32.gmra.mxu0 %v332
      %v1457 = vpop.f32.mrf.mxu0
      %v1458 = vadd.f32 %v1373, %v1457
      %v1459 = vpop.f32.mrf.mxu0
      %1460 = vdwg.mxu0
      %1461 = vmatprep.subr.mxu0 0.0
      %1462 = vmatpush1.msra.mxu0 0.0
      %1463 = vmatprep.subr.mxu0 0.0
      %1464 = vmatpush1.msra.mxu0 0.0
      %1465 = vmatprep.subr.mxu0 0.0
      %1466 = vmatpush1.msra.mxu0 0.0
      %1467 = vmatprep.subr.mxu0 0.0
      %1468 = vmatpush1.msra.mxu0 0.0
      %1469 = vmatprep.subr.mxu0 0.0
      %1470 = vmatpush1.msra.mxu0 0.0
      %1471 = vmatprep.subr.mxu0 0.0
      %1472 = vmatpush1.msra.mxu0 %v536
      %1473 = vmatprep.subr.mxu0 0.0
      %1474 = vmatpush1.msra.mxu0 %v235
      %1475 = vmatprep.subr.mxu0 0.0
      %1476 = vmatpush1.msra.mxu0 %v234
      %1477 = vmatprep.subr.mxu0 0.0
      %1478 = vmatpush1.msra.mxu0 %v233
      %1479 = vmatprep.subr.mxu0 0.0
      %1480 = vmatpush1.msra.mxu0 %v232
      %1481 = vmatprep.subr.mxu0 0.0
      %1482 = vmatpush1.msra.mxu0 %v231
      %1483 = vmatprep.subr.mxu0 0.0
      %1484 = vmatpush1.msra.mxu0 %v230
      %1485 = vmatprep.subr.mxu0 0.0
      %1486 = vmatpush1.msra.mxu0 %v229
      %1487 = vmatprep.subr.mxu0 0.0
      %1488 = vmatpush1.msra.mxu0 %v228
      %1489 = vmatprep.subr.mxu0 0.0
      %1490 = vmatpush1.msra.mxu0 %v227
      %1491 = vmatprep.subr.mxu0 0.0
      %1492 = vmatpush1.msra.mxu0 %v226
      %1493 = vmatprep.subr.mxu0 0.0
      %1494 = vmatpush2.msra.mxu0 0.0
      %1495 = vmatprep.subr.mxu0 0.0
      %1496 = vmatpush2.msra.mxu0 0.0
      %1497 = vmatprep.subr.mxu0 0.0
      %1498 = vmatpush2.msra.mxu0 0.0
      %1499 = vmatprep.subr.mxu0 0.0
      %1500 = vmatpush2.msra.mxu0 0.0
      %1501 = vmatprep.subr.mxu0 0.0
      %1502 = vmatpush2.msra.mxu0 0.0
      %1503 = vmatprep.subr.mxu0 0.0
      %1504 = vmatpush2.msra.mxu0 0.0
      %1505 = vmatprep.subr.mxu0 0.0
      %1506 = vmatpush2.msra.mxu0 0.0
      %1507 = vmatprep.subr.mxu0 0.0
      %1508 = vmatpush2.msra.mxu0 0.0
      %1509 = vmatprep.subr.mxu0 0.0
      %1510 = vmatpush2.msra.mxu0 0.0
      %1511 = vmatprep.subr.mxu0 0.0
      %1512 = vmatpush2.msra.mxu0 0.0
      %1513 = vmatprep.subr.mxu0 0.0
      %1514 = vmatpush2.msra.mxu0 0.0
      %1515 = vmatprep.subr.mxu0 0.0
      %1516 = vmatpush2.msra.mxu0 0.0
      %1517 = vmatprep.subr.mxu0 0.0
      %1518 = vmatpush2.msra.mxu0 0.0
      %1519 = vmatprep.subr.mxu0 0.0
      %1520 = vmatpush2.msra.mxu0 0.0
      %1521 = vmatprep.subr.mxu0 0.0
      %1522 = vmatpush2.msra.mxu0 0.0
      %1523 = vmatprep.subr.mxu0 0.0
      %1524 = vmatpush2.msra.mxu0 0.0
      %1525 = vmatprep.mubr.f32.mxu0 0.0
      %1526 = vmatmul.mubr.f32.gmra.mxu0 %v628
      %v1527 = vpop.f32.mrf.mxu0
      %v1528 = vadd.f32 0.0, %v1527
      %v1529 = vpop.f32.mrf.mxu0
      %1530 = vmatprep.mubr.f32.mxu0 0.0
      %1531 = vmatmul.mubr.f32.gmra.mxu0 %v631
      %v1532 = vpop.f32.mrf.mxu0
      %v1533 = vadd.f32 0.0, %v1532
      %v1534 = vpop.f32.mrf.mxu0
      %1535 = vmatprep.mubr.f32.mxu0 0.0
      %1536 = vmatmul.mubr.f32.gmra.mxu0 %v634
      %v1537 = vpop.f32.mrf.mxu0
      %v1538 = vadd.f32 0.0, %v1537
      %v1539 = vpop.f32.mrf.mxu0
      %1540 = vmatprep.mubr.f32.mxu0 0.0
      %1541 = vmatmul.mubr.f32.gmra.mxu0 %v637
      %v1542 = vpop.f32.mrf.mxu0
      %v1543 = vadd.f32 0.0, %v1542
      %v1544 = vpop.f32.mrf.mxu0
      %1545 = vdwg.mxu0
      %v1546 = vadd.f32 %v1443, %v1528
      %v1547 = vadd.f32 %v1448, %v1533
      %v1548 = vadd.f32 %v1453, %v1538
      %v1549 = vadd.f32 %v1458, %v1543
      %1550 = vmatprep.subr.mxu0 0.0
      %1551 = vmatpush1.msra.mxu0 0.0
      %1552 = vmatprep.subr.mxu0 0.0
      %1553 = vmatpush1.msra.mxu0 0.0
      %1554 = vmatprep.subr.mxu0 0.0
      %1555 = vmatpush1.msra.mxu0 0.0
      %1556 = vmatprep.subr.mxu0 0.0
      %1557 = vmatpush1.msra.mxu0 0.0
      %1558 = vmatprep.subr.mxu0 0.0
      %1559 = vmatpush1.msra.mxu0 0.0
      %1560 = vmatprep.subr.mxu0 0.0
      %1561 = vmatpush1.msra.mxu0 %v640
      %1562 = vmatprep.subr.mxu0 0.0
      %1563 = vmatpush1.msra.mxu0 %v247
      %1564 = vmatprep.subr.mxu0 0.0
      %1565 = vmatpush1.msra.mxu0 %v246
      %1566 = vmatprep.subr.mxu0 0.0
      %1567 = vmatpush1.msra.mxu0 %v245
      %1568 = vmatprep.subr.mxu0 0.0
      %1569 = vmatpush1.msra.mxu0 %v244
      %1570 = vmatprep.subr.mxu0 0.0
      %1571 = vmatpush1.msra.mxu0 %v243
      %1572 = vmatprep.subr.mxu0 0.0
      %1573 = vmatpush1.msra.mxu0 %v242
      %1574 = vmatprep.subr.mxu0 0.0
      %1575 = vmatpush1.msra.mxu0 %v241
      %1576 = vmatprep.subr.mxu0 0.0
      %1577 = vmatpush1.msra.mxu0 %v240
      %1578 = vmatprep.subr.mxu0 0.0
      %1579 = vmatpush1.msra.mxu0 %v239
      %1580 = vmatprep.subr.mxu0 0.0
      %1581 = vmatpush1.msra.mxu0 %v238
      %1582 = vmatprep.subr.mxu0 0.0
      %1583 = vmatpush2.msra.mxu0 0.0
      %1584 = vmatprep.subr.mxu0 0.0
      %1585 = vmatpush2.msra.mxu0 0.0
      %1586 = vmatprep.subr.mxu0 0.0
      %1587 = vmatpush2.msra.mxu0 0.0
      %1588 = vmatprep.subr.mxu0 0.0
      %1589 = vmatpush2.msra.mxu0 0.0
      %1590 = vmatprep.subr.mxu0 0.0
      %1591 = vmatpush2.msra.mxu0 0.0
      %1592 = vmatprep.subr.mxu0 0.0
      %1593 = vmatpush2.msra.mxu0 0.0
      %1594 = vmatprep.subr.mxu0 0.0
      %1595 = vmatpush2.msra.mxu0 0.0
      %1596 = vmatprep.subr.mxu0 0.0
      %1597 = vmatpush2.msra.mxu0 0.0
      %1598 = vmatprep.subr.mxu0 0.0
      %1599 = vmatpush2.msra.mxu0 0.0
      %1600 = vmatprep.subr.mxu0 0.0
      %1601 = vmatpush2.msra.mxu0 0.0
      %1602 = vmatprep.subr.mxu0 0.0
      %1603 = vmatpush2.msra.mxu0 0.0
      %1604 = vmatprep.subr.mxu0 0.0
      %1605 = vmatpush2.msra.mxu0 0.0
      %1606 = vmatprep.subr.mxu0 0.0
      %1607 = vmatpush2.msra.mxu0 0.0
      %1608 = vmatprep.subr.mxu0 0.0
      %1609 = vmatpush2.msra.mxu0 0.0
      %1610 = vmatprep.subr.mxu0 0.0
      %1611 = vmatpush2.msra.mxu0 0.0
      %1612 = vmatprep.subr.mxu0 0.0
      %1613 = vmatpush2.msra.mxu0 0.0
      %1614 = vmatprep.mubr.f32.mxu0 0.0
      %1615 = vmatmul.mubr.f32.gmra.mxu0 %v732
      %v1616 = vpop.f32.mrf.mxu0
      %v1617 = vadd.f32 0.0, %v1616
      %v1618 = vpop.f32.mrf.mxu0
      %1619 = vmatprep.mubr.f32.mxu0 0.0
      %1620 = vmatmul.mubr.f32.gmra.mxu0 %v735
      %v1621 = vpop.f32.mrf.mxu0
      %v1622 = vadd.f32 0.0, %v1621
      %v1623 = vpop.f32.mrf.mxu0
      %1624 = vmatprep.mubr.f32.mxu0 0.0
      %1625 = vmatmul.mubr.f32.gmra.mxu0 %v738
      %v1626 = vpop.f32.mrf.mxu0
      %v1627 = vadd.f32 0.0, %v1626
      %v1628 = vpop.f32.mrf.mxu0
      %1629 = vmatprep.mubr.f32.mxu0 0.0
      %1630 = vmatmul.mubr.f32.gmra.mxu0 %v741
      %v1631 = vpop.f32.mrf.mxu0
      %v1632 = vadd.f32 0.0, %v1631
      %v1633 = vpop.f32.mrf.mxu0
      %1634 = vdwg.mxu0
      %v1635 = vadd.f32 %v1546, %v1617
      %v1636 = vadd.f32 %v1547, %v1622
      %v1637 = vadd.f32 %v1548, %v1627
      %v1638 = vadd.f32 %v1549, %v1632
      %v1640 = vsel %vm321, %v198, 0
      %v1643 = vsel %vm321, %v199, 0
      %v1646 = vsel %vm321, %v200, 0
      %v1649 = vsel %vm321, %v201, 0
      %1651 = vmatprep.subr.mxu0 0.0
      %1652 = vmatpush1.msra.mxu0 0.0
      %1653 = vmatprep.subr.mxu0 0.0
      %1654 = vmatpush1.msra.mxu0 0.0
      %1655 = vmatprep.subr.mxu0 0.0
      %1656 = vmatpush1.msra.mxu0 0.0
      %1657 = vmatprep.subr.mxu0 0.0
      %1658 = vmatpush1.msra.mxu0 0.0
      %1659 = vmatprep.subr.mxu0 0.0
      %1660 = vmatpush1.msra.mxu0 0.0
      %1661 = vmatprep.subr.mxu0 0.0
      %1662 = vmatpush1.msra.mxu0 %v744
      %1663 = vmatprep.subr.mxu0 0.0
      %1664 = vmatpush1.msra.mxu0 %v259
      %1665 = vmatprep.subr.mxu0 0.0
      %1666 = vmatpush1.msra.mxu0 %v258
      %1667 = vmatprep.subr.mxu0 0.0
      %1668 = vmatpush1.msra.mxu0 %v257
      %1669 = vmatprep.subr.mxu0 0.0
      %1670 = vmatpush1.msra.mxu0 %v256
      %1671 = vmatprep.subr.mxu0 0.0
      %1672 = vmatpush1.msra.mxu0 %v255
      %1673 = vmatprep.subr.mxu0 0.0
      %1674 = vmatpush1.msra.mxu0 %v254
      %1675 = vmatprep.subr.mxu0 0.0
      %1676 = vmatpush1.msra.mxu0 %v253
      %1677 = vmatprep.subr.mxu0 0.0
      %1678 = vmatpush1.msra.mxu0 %v252
      %1679 = vmatprep.subr.mxu0 0.0
      %1680 = vmatpush1.msra.mxu0 %v251
      %1681 = vmatprep.subr.mxu0 0.0
      %1682 = vmatpush1.msra.mxu0 %v250
      %1683 = vmatprep.subr.mxu0 0.0
      %1684 = vmatpush2.msra.mxu0 0.0
      %1685 = vmatprep.subr.mxu0 0.0
      %1686 = vmatpush2.msra.mxu0 0.0
      %1687 = vmatprep.subr.mxu0 0.0
      %1688 = vmatpush2.msra.mxu0 0.0
      %1689 = vmatprep.subr.mxu0 0.0
      %1690 = vmatpush2.msra.mxu0 0.0
      %1691 = vmatprep.subr.mxu0 0.0
      %1692 = vmatpush2.msra.mxu0 0.0
      %1693 = vmatprep.subr.mxu0 0.0
      %1694 = vmatpush2.msra.mxu0 0.0
      %1695 = vmatprep.subr.mxu0 0.0
      %1696 = vmatpush2.msra.mxu0 0.0
      %1697 = vmatprep.subr.mxu0 0.0
      %1698 = vmatpush2.msra.mxu0 0.0
      %1699 = vmatprep.subr.mxu0 0.0
      %1700 = vmatpush2.msra.mxu0 0.0
      %1701 = vmatprep.subr.mxu0 0.0
      %1702 = vmatpush2.msra.mxu0 0.0
      %1703 = vmatprep.subr.mxu0 0.0
      %1704 = vmatpush2.msra.mxu0 0.0
      %1705 = vmatprep.subr.mxu0 0.0
      %1706 = vmatpush2.msra.mxu0 0.0
      %1707 = vmatprep.subr.mxu0 0.0
      %1708 = vmatpush2.msra.mxu0 0.0
      %1709 = vmatprep.subr.mxu0 0.0
      %1710 = vmatpush2.msra.mxu0 0.0
      %1711 = vmatprep.subr.mxu0 0.0
      %1712 = vmatpush2.msra.mxu0 0.0
      %1713 = vmatprep.subr.mxu0 0.0
      %1714 = vmatpush2.msra.mxu0 0.0
      %1715 = vmatprep.mubr.f32.mxu0 0.0
      %1716 = vmatmul.mubr.f32.gmra.mxu0 %v1640
      %v1717 = vpop.f32.mrf.mxu0
      %v1718 = vadd.f32 0.0, %v1717
      %v1719 = vpop.f32.mrf.mxu0
      %1720 = vmatprep.mubr.f32.mxu0 0.0
      %1721 = vmatmul.mubr.f32.gmra.mxu0 %v1643
      %v1722 = vpop.f32.mrf.mxu0
      %v1723 = vadd.f32 0.0, %v1722
      %v1724 = vpop.f32.mrf.mxu0
      %1725 = vmatprep.mubr.f32.mxu0 0.0
      %1726 = vmatmul.mubr.f32.gmra.mxu0 %v1646
      %v1727 = vpop.f32.mrf.mxu0
      %v1728 = vadd.f32 0.0, %v1727
      %v1729 = vpop.f32.mrf.mxu0
      %1730 = vmatprep.mubr.f32.mxu0 0.0
      %1731 = vmatmul.mubr.f32.gmra.mxu0 %v1649
      %v1732 = vpop.f32.mrf.mxu0
      %v1733 = vadd.f32 0.0, %v1732
      %v1734 = vpop.f32.mrf.mxu0
      %1735 = vdwg.mxu0
      %v1736 = vadd.f32 %v1635, %v1718
      %v1737 = vadd.f32 %v1636, %v1723
      %v1738 = vadd.f32 %v1637, %v1728
      %v1739 = vadd.f32 %v1638, %v1733
      %v1740 = vmax.f32 %v1287, %v1736
      %v1741 = vmax.f32 %v1288, %v1737
      %v1742 = vmax.f32 %v1289, %v1738
      %v1743 = vmax.f32 %v1290, %v1739
      %1744 = vmatprep.subr.mxu0 0.0
      %1745 = vmatpush1.msra.mxu0 0.0
      %1746 = vmatprep.subr.mxu0 0.0
      %1747 = vmatpush1.msra.mxu0 0.0
      %1748 = vmatprep.subr.mxu0 0.0
      %1749 = vmatpush1.msra.mxu0 0.0
      %1750 = vmatprep.subr.mxu0 0.0
      %1751 = vmatpush1.msra.mxu0 0.0
      %1752 = vmatprep.subr.mxu0 0.0
      %1753 = vmatpush1.msra.mxu0 0.0
      %1754 = vmatprep.subr.mxu0 0.0
      %1755 = vmatpush1.msra.mxu0 %v836
      %1756 = vmatprep.subr.mxu0 0.0
      %1757 = vmatpush1.msra.mxu0 %v283
      %1758 = vmatprep.subr.mxu0 0.0
      %1759 = vmatpush1.msra.mxu0 %v282
      %1760 = vmatprep.subr.mxu0 0.0
      %1761 = vmatpush1.msra.mxu0 %v281
      %1762 = vmatprep.subr.mxu0 0.0
      %1763 = vmatpush1.msra.mxu0 %v280
      %1764 = vmatprep.subr.mxu0 0.0
      %1765 = vmatpush1.msra.mxu0 %v279
      %1766 = vmatprep.subr.mxu0 0.0
      %1767 = vmatpush1.msra.mxu0 %v278
      %1768 = vmatprep.subr.mxu0 0.0
      %1769 = vmatpush1.msra.mxu0 %v277
      %1770 = vmatprep.subr.mxu0 0.0
      %1771 = vmatpush1.msra.mxu0 %v276
      %1772 = vmatprep.subr.mxu0 0.0
      %1773 = vmatpush1.msra.mxu0 %v275
      %1774 = vmatprep.subr.mxu0 0.0
      %1775 = vmatpush1.msra.mxu0 %v274
      %1776 = vmatprep.subr.mxu0 0.0
      %1777 = vmatpush2.msra.mxu0 0.0
      %1778 = vmatprep.subr.mxu0 0.0
      %1779 = vmatpush2.msra.mxu0 0.0
      %1780 = vmatprep.subr.mxu0 0.0
      %1781 = vmatpush2.msra.mxu0 0.0
      %1782 = vmatprep.subr.mxu0 0.0
      %1783 = vmatpush2.msra.mxu0 0.0
      %1784 = vmatprep.subr.mxu0 0.0
      %1785 = vmatpush2.msra.mxu0 0.0
      %1786 = vmatprep.subr.mxu0 0.0
      %1787 = vmatpush2.msra.mxu0 0.0
      %1788 = vmatprep.subr.mxu0 0.0
      %1789 = vmatpush2.msra.mxu0 0.0
      %1790 = vmatprep.subr.mxu0 0.0
      %1791 = vmatpush2.msra.mxu0 0.0
      %1792 = vmatprep.subr.mxu0 0.0
      %1793 = vmatpush2.msra.mxu0 0.0
      %1794 = vmatprep.subr.mxu0 0.0
      %1795 = vmatpush2.msra.mxu0 0.0
      %1796 = vmatprep.subr.mxu0 0.0
      %1797 = vmatpush2.msra.mxu0 0.0
      %1798 = vmatprep.subr.mxu0 0.0
      %1799 = vmatpush2.msra.mxu0 0.0
      %1800 = vmatprep.subr.mxu0 0.0
      %1801 = vmatpush2.msra.mxu0 0.0
      %1802 = vmatprep.subr.mxu0 0.0
      %1803 = vmatpush2.msra.mxu0 0.0
      %1804 = vmatprep.subr.mxu0 0.0
      %1805 = vmatpush2.msra.mxu0 0.0
      %1806 = vmatprep.subr.mxu0 0.0
      %1807 = vmatpush2.msra.mxu0 0.0
      %1808 = vmatprep.mubr.f32.mxu0 0.0
      %1809 = vmatmul.mubr.f32.gmra.mxu0 %v524
      %v1810 = vpop.f32.mrf.mxu0
      %v1811 = vadd.f32 0.0, %v1810
      %v1812 = vpop.f32.mrf.mxu0
      %1813 = vmatprep.mubr.f32.mxu0 0.0
      %1814 = vmatmul.mubr.f32.gmra.mxu0 %v527
      %v1815 = vpop.f32.mrf.mxu0
      %v1816 = vadd.f32 0.0, %v1815
      %v1817 = vpop.f32.mrf.mxu0
      %1818 = vmatprep.mubr.f32.mxu0 0.0
      %1819 = vmatmul.mubr.f32.gmra.mxu0 %v530
      %v1820 = vpop.f32.mrf.mxu0
      %v1821 = vadd.f32 0.0, %v1820
      %v1822 = vpop.f32.mrf.mxu0
      %1823 = vmatprep.mubr.f32.mxu0 0.0
      %1824 = vmatmul.mubr.f32.gmra.mxu0 %v533
      %v1825 = vpop.f32.mrf.mxu0
      %v1826 = vadd.f32 0.0, %v1825
      %v1827 = vpop.f32.mrf.mxu0
      %1828 = vdwg.mxu0
      %1829 = vmatprep.subr.mxu0 0.0
      %1830 = vmatpush1.msra.mxu0 0.0
      %1831 = vmatprep.subr.mxu0 0.0
      %1832 = vmatpush1.msra.mxu0 0.0
      %1833 = vmatprep.subr.mxu0 0.0
      %1834 = vmatpush1.msra.mxu0 0.0
      %1835 = vmatprep.subr.mxu0 0.0
      %1836 = vmatpush1.msra.mxu0 0.0
      %1837 = vmatprep.subr.mxu0 0.0
      %1838 = vmatpush1.msra.mxu0 0.0
      %1839 = vmatprep.subr.mxu0 0.0
      %1840 = vmatpush1.msra.mxu0 %v924
      %1841 = vmatprep.subr.mxu0 0.0
      %1842 = vmatpush1.msra.mxu0 %v271
      %1843 = vmatprep.subr.mxu0 0.0
      %1844 = vmatpush1.msra.mxu0 %v270
      %1845 = vmatprep.subr.mxu0 0.0
      %1846 = vmatpush1.msra.mxu0 %v269
      %1847 = vmatprep.subr.mxu0 0.0
      %1848 = vmatpush1.msra.mxu0 %v268
      %1849 = vmatprep.subr.mxu0 0.0
      %1850 = vmatpush1.msra.mxu0 %v267
      %1851 = vmatprep.subr.mxu0 0.0
      %1852 = vmatpush1.msra.mxu0 %v266
      %1853 = vmatprep.subr.mxu0 0.0
      %1854 = vmatpush1.msra.mxu0 %v265
      %1855 = vmatprep.subr.mxu0 0.0
      %1856 = vmatpush1.msra.mxu0 %v264
      %1857 = vmatprep.subr.mxu0 0.0
      %1858 = vmatpush1.msra.mxu0 %v263
      %1859 = vmatprep.subr.mxu0 0.0
      %1860 = vmatpush1.msra.mxu0 %v262
      %1861 = vmatprep.subr.mxu0 0.0
      %1862 = vmatpush2.msra.mxu0 0.0
      %1863 = vmatprep.subr.mxu0 0.0
      %1864 = vmatpush2.msra.mxu0 0.0
      %1865 = vmatprep.subr.mxu0 0.0
      %1866 = vmatpush2.msra.mxu0 0.0
      %1867 = vmatprep.subr.mxu0 0.0
      %1868 = vmatpush2.msra.mxu0 0.0
      %1869 = vmatprep.subr.mxu0 0.0
      %1870 = vmatpush2.msra.mxu0 0.0
      %1871 = vmatprep.subr.mxu0 0.0
      %1872 = vmatpush2.msra.mxu0 0.0
      %1873 = vmatprep.subr.mxu0 0.0
      %1874 = vmatpush2.msra.mxu0 0.0
      %1875 = vmatprep.subr.mxu0 0.0
      %1876 = vmatpush2.msra.mxu0 0.0
      %1877 = vmatprep.subr.mxu0 0.0
      %1878 = vmatpush2.msra.mxu0 0.0
      %1879 = vmatprep.subr.mxu0 0.0
      %1880 = vmatpush2.msra.mxu0 0.0
      %1881 = vmatprep.subr.mxu0 0.0
      %1882 = vmatpush2.msra.mxu0 0.0
      %1883 = vmatprep.subr.mxu0 0.0
      %1884 = vmatpush2.msra.mxu0 0.0
      %1885 = vmatprep.subr.mxu0 0.0
      %1886 = vmatpush2.msra.mxu0 0.0
      %1887 = vmatprep.subr.mxu0 0.0
      %1888 = vmatpush2.msra.mxu0 0.0
      %1889 = vmatprep.subr.mxu0 0.0
      %1890 = vmatpush2.msra.mxu0 0.0
      %1891 = vmatprep.subr.mxu0 0.0
      %1892 = vmatpush2.msra.mxu0 0.0
      %1893 = vmatprep.mubr.f32.mxu0 0.0
      %1894 = vmatmul.mubr.f32.gmra.mxu0 %v323
      %v1895 = vpop.f32.mrf.mxu0
      %v1896 = vadd.f32 %v1811, %v1895
      %v1897 = vpop.f32.mrf.mxu0
      %1898 = vmatprep.mubr.f32.mxu0 0.0
      %1899 = vmatmul.mubr.f32.gmra.mxu0 %v326
      %v1900 = vpop.f32.mrf.mxu0
      %v1901 = vadd.f32 %v1816, %v1900
      %v1902 = vpop.f32.mrf.mxu0
      %1903 = vmatprep.mubr.f32.mxu0 0.0
      %1904 = vmatmul.mubr.f32.gmra.mxu0 %v329
      %v1905 = vpop.f32.mrf.mxu0
      %v1906 = vadd.f32 %v1821, %v1905
      %v1907 = vpop.f32.mrf.mxu0
      %1908 = vmatprep.mubr.f32.mxu0 0.0
      %1909 = vmatmul.mubr.f32.gmra.mxu0 %v332
      %v1910 = vpop.f32.mrf.mxu0
      %v1911 = vadd.f32 %v1826, %v1910
      %v1912 = vpop.f32.mrf.mxu0
      %1913 = vdwg.mxu0
      %1914 = vmatprep.subr.mxu0 0.0
      %1915 = vmatpush1.msra.mxu0 0.0
      %1916 = vmatprep.subr.mxu0 0.0
      %1917 = vmatpush1.msra.mxu0 0.0
      %1918 = vmatprep.subr.mxu0 0.0
      %1919 = vmatpush1.msra.mxu0 0.0
      %1920 = vmatprep.subr.mxu0 0.0
      %1921 = vmatpush1.msra.mxu0 0.0
      %1922 = vmatprep.subr.mxu0 0.0
      %1923 = vmatpush1.msra.mxu0 0.0
      %1924 = vmatprep.subr.mxu0 0.0
      %1925 = vmatpush1.msra.mxu0 %v1012
      %1926 = vmatprep.subr.mxu0 0.0
      %1927 = vmatpush1.msra.mxu0 %v295
      %1928 = vmatprep.subr.mxu0 0.0
      %1929 = vmatpush1.msra.mxu0 %v294
      %1930 = vmatprep.subr.mxu0 0.0
      %1931 = vmatpush1.msra.mxu0 %v293
      %1932 = vmatprep.subr.mxu0 0.0
      %1933 = vmatpush1.msra.mxu0 %v292
      %1934 = vmatprep.subr.mxu0 0.0
      %1935 = vmatpush1.msra.mxu0 %v291
      %1936 = vmatprep.subr.mxu0 0.0
      %1937 = vmatpush1.msra.mxu0 %v290
      %1938 = vmatprep.subr.mxu0 0.0
      %1939 = vmatpush1.msra.mxu0 %v289
      %1940 = vmatprep.subr.mxu0 0.0
      %1941 = vmatpush1.msra.mxu0 %v288
      %1942 = vmatprep.subr.mxu0 0.0
      %1943 = vmatpush1.msra.mxu0 %v287
      %1944 = vmatprep.subr.mxu0 0.0
      %1945 = vmatpush1.msra.mxu0 %v286
      %1946 = vmatprep.subr.mxu0 0.0
      %1947 = vmatpush2.msra.mxu0 0.0
      %1948 = vmatprep.subr.mxu0 0.0
      %1949 = vmatpush2.msra.mxu0 0.0
      %1950 = vmatprep.subr.mxu0 0.0
      %1951 = vmatpush2.msra.mxu0 0.0
      %1952 = vmatprep.subr.mxu0 0.0
      %1953 = vmatpush2.msra.mxu0 0.0
      %1954 = vmatprep.subr.mxu0 0.0
      %1955 = vmatpush2.msra.mxu0 0.0
      %1956 = vmatprep.subr.mxu0 0.0
      %1957 = vmatpush2.msra.mxu0 0.0
      %1958 = vmatprep.subr.mxu0 0.0
      %1959 = vmatpush2.msra.mxu0 0.0
      %1960 = vmatprep.subr.mxu0 0.0
      %1961 = vmatpush2.msra.mxu0 0.0
      %1962 = vmatprep.subr.mxu0 0.0
      %1963 = vmatpush2.msra.mxu0 0.0
      %1964 = vmatprep.subr.mxu0 0.0
      %1965 = vmatpush2.msra.mxu0 0.0
      %1966 = vmatprep.subr.mxu0 0.0
      %1967 = vmatpush2.msra.mxu0 0.0
      %1968 = vmatprep.subr.mxu0 0.0
      %1969 = vmatpush2.msra.mxu0 0.0
      %1970 = vmatprep.subr.mxu0 0.0
      %1971 = vmatpush2.msra.mxu0 0.0
      %1972 = vmatprep.subr.mxu0 0.0
      %1973 = vmatpush2.msra.mxu0 0.0
      %1974 = vmatprep.subr.mxu0 0.0
      %1975 = vmatpush2.msra.mxu0 0.0
      %1976 = vmatprep.subr.mxu0 0.0
      %1977 = vmatpush2.msra.mxu0 0.0
      %1978 = vmatprep.mubr.f32.mxu0 0.0
      %1979 = vmatmul.mubr.f32.gmra.mxu0 %v628
      %v1980 = vpop.f32.mrf.mxu0
      %v1981 = vadd.f32 0.0, %v1980
      %v1982 = vpop.f32.mrf.mxu0
      %1983 = vmatprep.mubr.f32.mxu0 0.0
      %1984 = vmatmul.mubr.f32.gmra.mxu0 %v631
      %v1985 = vpop.f32.mrf.mxu0
      %v1986 = vadd.f32 0.0, %v1985
      %v1987 = vpop.f32.mrf.mxu0
      %1988 = vmatprep.mubr.f32.mxu0 0.0
      %1989 = vmatmul.mubr.f32.gmra.mxu0 %v634
      %v1990 = vpop.f32.mrf.mxu0
      %v1991 = vadd.f32 0.0, %v1990
      %v1992 = vpop.f32.mrf.mxu0
      %1993 = vmatprep.mubr.f32.mxu0 0.0
      %1994 = vmatmul.mubr.f32.gmra.mxu0 %v637
      %v1995 = vpop.f32.mrf.mxu0
      %v1996 = vadd.f32 0.0, %v1995
      %v1997 = vpop.f32.mrf.mxu0
      %1998 = vdwg.mxu0
      %v1999 = vadd.f32 %v1896, %v1981
      %v2000 = vadd.f32 %v1901, %v1986
      %v2001 = vadd.f32 %v1906, %v1991
      %v2002 = vadd.f32 %v1911, %v1996
      %2003 = vmatprep.subr.mxu0 0.0
      %2004 = vmatpush1.msra.mxu0 0.0
      %2005 = vmatprep.subr.mxu0 0.0
      %2006 = vmatpush1.msra.mxu0 0.0
      %2007 = vmatprep.subr.mxu0 0.0
      %2008 = vmatpush1.msra.mxu0 0.0
      %2009 = vmatprep.subr.mxu0 0.0
      %2010 = vmatpush1.msra.mxu0 0.0
      %2011 = vmatprep.subr.mxu0 0.0
      %2012 = vmatpush1.msra.mxu0 0.0
      %2013 = vmatprep.subr.mxu0 0.0
      %2014 = vmatpush1.msra.mxu0 %v1104
      %2015 = vmatprep.subr.mxu0 0.0
      %2016 = vmatpush1.msra.mxu0 %v307
      %2017 = vmatprep.subr.mxu0 0.0
      %2018 = vmatpush1.msra.mxu0 %v306
      %2019 = vmatprep.subr.mxu0 0.0
      %2020 = vmatpush1.msra.mxu0 %v305
      %2021 = vmatprep.subr.mxu0 0.0
      %2022 = vmatpush1.msra.mxu0 %v304
      %2023 = vmatprep.subr.mxu0 0.0
      %2024 = vmatpush1.msra.mxu0 %v303
      %2025 = vmatprep.subr.mxu0 0.0
      %2026 = vmatpush1.msra.mxu0 %v302
      %2027 = vmatprep.subr.mxu0 0.0
      %2028 = vmatpush1.msra.mxu0 %v301
      %2029 = vmatprep.subr.mxu0 0.0
      %2030 = vmatpush1.msra.mxu0 %v300
      %2031 = vmatprep.subr.mxu0 0.0
      %2032 = vmatpush1.msra.mxu0 %v299
      %2033 = vmatprep.subr.mxu0 0.0
      %2034 = vmatpush1.msra.mxu0 %v298
      %2035 = vmatprep.subr.mxu0 0.0
      %2036 = vmatpush2.msra.mxu0 0.0
      %2037 = vmatprep.subr.mxu0 0.0
      %2038 = vmatpush2.msra.mxu0 0.0
      %2039 = vmatprep.subr.mxu0 0.0
      %2040 = vmatpush2.msra.mxu0 0.0
      %2041 = vmatprep.subr.mxu0 0.0
      %2042 = vmatpush2.msra.mxu0 0.0
      %2043 = vmatprep.subr.mxu0 0.0
      %2044 = vmatpush2.msra.mxu0 0.0
      %2045 = vmatprep.subr.mxu0 0.0
      %2046 = vmatpush2.msra.mxu0 0.0
      %2047 = vmatprep.subr.mxu0 0.0
      %2048 = vmatpush2.msra.mxu0 0.0
      %2049 = vmatprep.subr.mxu0 0.0
      %2050 = vmatpush2.msra.mxu0 0.0
      %2051 = vmatprep.subr.mxu0 0.0
      %2052 = vmatpush2.msra.mxu0 0.0
      %2053 = vmatprep.subr.mxu0 0.0
      %2054 = vmatpush2.msra.mxu0 0.0
      %2055 = vmatprep.subr.mxu0 0.0
      %2056 = vmatpush2.msra.mxu0 0.0
      %2057 = vmatprep.subr.mxu0 0.0
      %2058 = vmatpush2.msra.mxu0 0.0
      %2059 = vmatprep.subr.mxu0 0.0
      %2060 = vmatpush2.msra.mxu0 0.0
      %2061 = vmatprep.subr.mxu0 0.0
      %2062 = vmatpush2.msra.mxu0 0.0
      %2063 = vmatprep.subr.mxu0 0.0
      %2064 = vmatpush2.msra.mxu0 0.0
      %2065 = vmatprep.subr.mxu0 0.0
      %2066 = vmatpush2.msra.mxu0 0.0
      %2067 = vmatprep.mubr.f32.mxu0 0.0
      %2068 = vmatmul.mubr.f32.gmra.mxu0 %v732
      %v2069 = vpop.f32.mrf.mxu0
      %v2070 = vadd.f32 0.0, %v2069
      %v2071 = vpop.f32.mrf.mxu0
      %2072 = vmatprep.mubr.f32.mxu0 0.0
      %2073 = vmatmul.mubr.f32.gmra.mxu0 %v735
      %v2074 = vpop.f32.mrf.mxu0
      %v2075 = vadd.f32 0.0, %v2074
      %v2076 = vpop.f32.mrf.mxu0
      %2077 = vmatprep.mubr.f32.mxu0 0.0
      %2078 = vmatmul.mubr.f32.gmra.mxu0 %v738
      %v2079 = vpop.f32.mrf.mxu0
      %v2080 = vadd.f32 0.0, %v2079
      %v2081 = vpop.f32.mrf.mxu0
      %2082 = vmatprep.mubr.f32.mxu0 0.0
      %2083 = vmatmul.mubr.f32.gmra.mxu0 %v741
      %v2084 = vpop.f32.mrf.mxu0
      %v2085 = vadd.f32 0.0, %v2084
      %v2086 = vpop.f32.mrf.mxu0
      %2087 = vdwg.mxu0
      %v2088 = vadd.f32 %v1999, %v2070
      %v2089 = vadd.f32 %v2000, %v2075
      %v2090 = vadd.f32 %v2001, %v2080
      %v2091 = vadd.f32 %v2002, %v2085
      %2092 = vmatprep.subr.mxu0 0.0
      %2093 = vmatpush1.msra.mxu0 0.0
      %2094 = vmatprep.subr.mxu0 0.0
      %2095 = vmatpush1.msra.mxu0 0.0
      %2096 = vmatprep.subr.mxu0 0.0
      %2097 = vmatpush1.msra.mxu0 0.0
      %2098 = vmatprep.subr.mxu0 0.0
      %2099 = vmatpush1.msra.mxu0 0.0
      %2100 = vmatprep.subr.mxu0 0.0
      %2101 = vmatpush1.msra.mxu0 0.0
      %2102 = vmatprep.subr.mxu0 0.0
      %2103 = vmatpush1.msra.mxu0 %v1196
      %2104 = vmatprep.subr.mxu0 0.0
      %2105 = vmatpush1.msra.mxu0 %v319
      %2106 = vmatprep.subr.mxu0 0.0
      %2107 = vmatpush1.msra.mxu0 %v318
      %2108 = vmatprep.subr.mxu0 0.0
      %2109 = vmatpush1.msra.mxu0 %v317
      %2110 = vmatprep.subr.mxu0 0.0
      %2111 = vmatpush1.msra.mxu0 %v316
      %2112 = vmatprep.subr.mxu0 0.0
      %2113 = vmatpush1.msra.mxu0 %v315
      %2114 = vmatprep.subr.mxu0 0.0
      %2115 = vmatpush1.msra.mxu0 %v314
      %2116 = vmatprep.subr.mxu0 0.0
      %2117 = vmatpush1.msra.mxu0 %v313
      %2118 = vmatprep.subr.mxu0 0.0
      %2119 = vmatpush1.msra.mxu0 %v312
      %2120 = vmatprep.subr.mxu0 0.0
      %2121 = vmatpush1.msra.mxu0 %v311
      %2122 = vmatprep.subr.mxu0 0.0
      %2123 = vmatpush1.msra.mxu0 %v310
      %2124 = vmatprep.subr.mxu0 0.0
      %2125 = vmatpush2.msra.mxu0 0.0
      %2126 = vmatprep.subr.mxu0 0.0
      %2127 = vmatpush2.msra.mxu0 0.0
      %2128 = vmatprep.subr.mxu0 0.0
      %2129 = vmatpush2.msra.mxu0 0.0
      %2130 = vmatprep.subr.mxu0 0.0
      %2131 = vmatpush2.msra.mxu0 0.0
      %2132 = vmatprep.subr.mxu0 0.0
      %2133 = vmatpush2.msra.mxu0 0.0
      %2134 = vmatprep.subr.mxu0 0.0
      %2135 = vmatpush2.msra.mxu0 0.0
      %2136 = vmatprep.subr.mxu0 0.0
      %2137 = vmatpush2.msra.mxu0 0.0
      %2138 = vmatprep.subr.mxu0 0.0
      %2139 = vmatpush2.msra.mxu0 0.0
      %2140 = vmatprep.subr.mxu0 0.0
      %2141 = vmatpush2.msra.mxu0 0.0
      %2142 = vmatprep.subr.mxu0 0.0
      %2143 = vmatpush2.msra.mxu0 0.0
      %2144 = vmatprep.subr.mxu0 0.0
      %2145 = vmatpush2.msra.mxu0 0.0
      %2146 = vmatprep.subr.mxu0 0.0
      %2147 = vmatpush2.msra.mxu0 0.0
      %2148 = vmatprep.subr.mxu0 0.0
      %2149 = vmatpush2.msra.mxu0 0.0
      %2150 = vmatprep.subr.mxu0 0.0
      %2151 = vmatpush2.msra.mxu0 0.0
      %2152 = vmatprep.subr.mxu0 0.0
      %2153 = vmatpush2.msra.mxu0 0.0
      %2154 = vmatprep.subr.mxu0 0.0
      %2155 = vmatpush2.msra.mxu0 0.0
      %2156 = vmatprep.mubr.f32.mxu0 0.0
      %2157 = vmatmul.mubr.f32.gmra.mxu0 %v1640
      %v2158 = vpop.f32.mrf.mxu0
      %v2159 = vadd.f32 0.0, %v2158
      %v2160 = vpop.f32.mrf.mxu0
      %2161 = vmatprep.mubr.f32.mxu0 0.0
      %2162 = vmatmul.mubr.f32.gmra.mxu0 %v1643
      %v2163 = vpop.f32.mrf.mxu0
      %v2164 = vadd.f32 0.0, %v2163
      %v2165 = vpop.f32.mrf.mxu0
      %2166 = vmatprep.mubr.f32.mxu0 0.0
      %2167 = vmatmul.mubr.f32.gmra.mxu0 %v1646
      %v2168 = vpop.f32.mrf.mxu0
      %v2169 = vadd.f32 0.0, %v2168
      %v2170 = vpop.f32.mrf.mxu0
      %2171 = vmatprep.mubr.f32.mxu0 0.0
      %2172 = vmatmul.mubr.f32.gmra.mxu0 %v1649
      %v2173 = vpop.f32.mrf.mxu0
      %v2174 = vadd.f32 0.0, %v2173
      %v2175 = vpop.f32.mrf.mxu0
      %2176 = vdwg.mxu0
      %v2177 = vadd.f32 %v2088, %v2159
      %v2178 = vadd.f32 %v2089, %v2164
      %v2179 = vadd.f32 %v2090, %v2169
      %v2180 = vadd.f32 %v2091, %v2174
      %v2181 = vmax.f32 %v1740, %v2177
      %v2182 = vmax.f32 %v1741, %v2178
      %v2183 = vmax.f32 %v1742, %v2179
      %v2184 = vmax.f32 %v1743, %v2180
      %v2185 = vld [vmem:[%s2] sm:$0x1]
      %v2187 = vlaneseq
      %v2188 = vshrl.u32 %v2187, 7
      %v2189 = vsub.s32 0, %v2188
      %v2190 = vrot.slane %v2185, %v2189
      %v2192 = vadd.f32 %v2181, %v2190
      %v2193 = vadd.f32 %v2182, %v2190
      %v2194 = vadd.f32 %v2183, %v2190
      %v2195 = vadd.f32 %v2184, %v2190
      %v2196 = vmax.f32 %v2192, 0.0
      %v2197 = vmax.f32 %v2193, 0.0
      %v2198 = vmax.f32 %v2194, 0.0
      %v2199 = vmax.f32 %v2195, 0.0
      %vm2200 = vcmask 654336
      %2201 = vst.msk [vmem:[%s175] sm:$0xff] %vm2200, %v2196
      %2202 = vst.msk [vmem:[%s175 + $0x8] sm:$0xff] %vm2200, %v2197
      %2203 = vst.msk [vmem:[%s175 + $0x10] sm:$0xff] %vm2200, %v2198
      %2204 = vst.msk [vmem:[%s175 + $0x18] sm:$0xff] %vm2200, %v2199
      %s2205 = smul.u32 4, %s14
      %p2206 = scmp.lt.s32.totalorder %s2205, 7
      %s2207 = scalar_select %p2206, %s2205, 7
      %s2208 = smul.addr %s2207, 8
      %s2209 = scalar_lea.vmem %s3, %s2208
      // Predicated region
      $region33: #{cnn_forward.4} parent=31 // pred_check
        %p2210 = pneg %p100
      $region34: #{cnn_forward.4} parent=31 // pred_check_branch
        %2212 = sbr.rel (%p2210) target = $region36
      $region35: #{cnn_forward.4} parent=31 // pred_region
        %s2213 = smul.u32 4, %s14
      $region36: #{cnn_forward.4} parent=31 // pred_fallthru
        _
    $region32: #{cnn_forward.4} parent=5 // pred_fallthru
      _
    %p2214 = scmp.le.s32.totalorder 2, %s9
    // Predicated region
    $region37: #{cnn_forward.4} parent=5 // pred_check
      %p2215 = pneg %p2214
    $region38: #{cnn_forward.4} parent=5 // pred_check_branch
      %2217 = sbr.rel (%p2215) target = $region40
    $region39: #{cnn_forward.4} parent=5 // pred_region
      %s2218 = ssub.s32 %s9, 2
      // Predicated region
      $region41: #{cnn_forward.4} parent=39 // pred_check
        %p2219 = pneg %p106
      $region42: #{cnn_forward.4} parent=39 // pred_check_branch
        %2221 = sbr.rel (%p2219) target = $region44
      $region43: #{cnn_forward.4} parent=39 // pred_region
        %s2222 = smul.u32 4, %s15
        %p2223 = scmp.lt.s32.totalorder %s2222, 7
        %s2224 = scalar_select %p2223, %s2222, 7
        %s2225 = smul.addr %s2224, 8
        %s2226 = scalar_lea.vmem %s3, %s2225
      $region44: #{cnn_forward.4} parent=39 // pred_fallthru
        _
    $region40: #{cnn_forward.4} parent=5 // pred_fallthru
      _
  $region6: #{cnn_forward.4} parent=0 // loop_footer
    %s13 = sadd.s32 1, %s9
  $region7: #{cnn_forward.4} parent=0 // loop_footer_branch
    %8 = sbr.rel target = $region3
  $region8: #{cnn_forward.4} parent=0 // loop_exit
    _

// kernel: cnn_forward.3
$region0: #{cnn_forward.3}
  #allocation0 [shape = 'u32[]', space=smem, size = 0x4, offset = 0x4, fixed_abs, tag = 'smem constant byte address 0x4 - core index']
  #allocation1 [shape = 'u32[144,128]{1,0:T(1,128)}', space=vmem, size = 0x12000, scoped, tag = 'internal scratch']
  %s0 = inlined_call_operand.vmem [shape: f32[8,2,18,96], index: 0, kind: input, shape index: {}]
  %s1 = inlined_call_operand.vmem [shape: f32[2,5,96,84], index: 1, kind: input, shape index: {}]
  %s2 = inlined_call_operand.vmem [shape: f32[1,84], index: 2, kind: input, shape index: {}]
  %s3 = inlined_call_operand.vmem [shape: f32[128,84], index: 3, kind: output, shape index: {}]
  %s4 = sld [smem:[#allocation0]]
  $region45: #{cnn_forward.3} parent=0
    _
  %s6 = ssub.s32 1, %s4
  %s7 = scalar_select 0, %s6, %s4
  loop: start=0, step=1, limit=4
  $region2: #{cnn_forward.3} parent=0 // loop_pre_header
    _
  $region3: #{cnn_forward.3} parent=0 // loop_header
    %s9 = sphi 0, %s13
    %p10 = scmp.ge.s32.totalorder %s9, 4
    %s19 = sphi 0, %s21
    %s22 = sphi 0, %s19
    %s23 = sphi 0, %s22
    %s39 = sphi 0, %s23
    %s43 = sphi 0, %s43
    %s45 = sphi 0, %s43
    %s46 = sphi 0, %s45
    %s60 = sphi 0, %s46
    %s64 = sphi 0, %s64
    %s66 = sphi 0, %s64
    %s67 = sphi 0, %s66
    %s81 = sphi 0, %s67
    %s87 = sphi 0, %s89
    %s90 = sphi 0, %s87
    %s91 = sphi 0, %s90
    %s107 = sphi 0, %s91
  $region4: #{cnn_forward.3} parent=0 // loop_header_branch
    %12 = sbr.rel (%p10) target = $region8
  $region5: #{cnn_forward.3} parent=0 // loop_body
    %s14 = ssub.s32 %s9, 1
    %s15 = ssub.s32 %s9, 2
    %s16 = sadd.s32 %s9, 1
    %s17 = ssub.s32 %s9, %s16
    %p18 = scmp.eq.s32.totalorder %s17, 0
    %s20 = sadd.s32 %s19, 1
    %s21 = scalar_select %p18, %s19, %s20
    %p24 = pneg %p18
    %p25 = scmp.eq.s32.totalorder %s9, 1
    %p26 = por %p24, %p25
    %p27 = scmp.ne.s32.totalorder %s19, %s22
    %p28 = scmp.eq.s32.totalorder %s9, 0
    %p29 = por %p27, %p28
    %p30 = scmp.ne.s32.totalorder %s19, %s22
    %p31 = scmp.eq.s32.totalorder %s14, 1
    %p32 = por %p30, %p31
    %p33 = scmp.ne.s32.totalorder %s22, %s23
    %p34 = scmp.eq.s32.totalorder %s14, 0
    %p35 = por %p33, %p34
    %p36 = scmp.ne.s32.totalorder %s22, %s23
    %p37 = scmp.eq.s32.totalorder %s15, 1
    %p38 = por %p36, %p37
    %p40 = scmp.ne.s32.totalorder %s23, %s39
    %p41 = scmp.eq.s32.totalorder %s15, 0
    %p42 = por %p40, %p41
    %s44 = sadd.s32 %s43, 1
    %p47 = scmp.eq.s32.totalorder %s9, 1
    %p48 = scmp.ne.s32.totalorder %s43, %s45
    %p49 = scmp.eq.s32.totalorder %s9, 0
    %p50 = por %p48, %p49
    %p51 = scmp.ne.s32.totalorder %s43, %s45
    %p52 = scmp.eq.s32.totalorder %s14, 1
    %p53 = por %p51, %p52
    %p54 = scmp.ne.s32.totalorder %s45, %s46
    %p55 = scmp.eq.s32.totalorder %s14, 0
    %p56 = por %p54, %p55
    %p57 = scmp.ne.s32.totalorder %s45, %s46
    %p58 = scmp.eq.s32.totalorder %s15, 1
    %p59 = por %p57, %p58
    %p61 = scmp.ne.s32.totalorder %s46, %s60
    %p62 = scmp.eq.s32.totalorder %s15, 0
    %p63 = por %p61, %p62
    %s65 = sadd.s32 %s64, 1
    %p68 = scmp.eq.s32.totalorder %s9, 1
    %p69 = scmp.ne.s32.totalorder %s64, %s66
    %p70 = scmp.eq.s32.totalorder %s9, 0
    %p71 = por %p69, %p70
    %p72 = scmp.ne.s32.totalorder %s64, %s66
    %p73 = scmp.eq.s32.totalorder %s14, 1
    %p74 = por %p72, %p73
    %p75 = scmp.ne.s32.totalorder %s66, %s67
    %p76 = scmp.eq.s32.totalorder %s14, 0
    %p77 = por %p75, %p76
    %p78 = scmp.ne.s32.totalorder %s66, %s67
    %p79 = scmp.eq.s32.totalorder %s15, 1
    %p80 = por %p78, %p79
    %p82 = scmp.ne.s32.totalorder %s67, %s81
    %p83 = scmp.eq.s32.totalorder %s15, 0
    %p84 = por %p82, %p83
    %s85 = ssub.s32 %s9, %s16
    %p86 = scmp.eq.s32.totalorder %s85, 0
    %s88 = sadd.s32 %s87, 1
    %s89 = scalar_select %p86, %s87, %s88
    %p92 = pneg %p86
    %p93 = scmp.eq.s32.totalorder %s9, 1
    %p94 = por %p92, %p93
    %p95 = scmp.ne.s32.totalorder %s87, %s90
    %p96 = scmp.eq.s32.totalorder %s9, 0
    %p97 = por %p95, %p96
    %p98 = scmp.ne.s32.totalorder %s87, %s90
    %p99 = scmp.eq.s32.totalorder %s14, 1
    %p100 = por %p98, %p99
    %p101 = scmp.ne.s32.totalorder %s90, %s91
    %p102 = scmp.eq.s32.totalorder %s14, 0
    %p103 = por %p101, %p102
    %p104 = scmp.ne.s32.totalorder %s90, %s91
    %p105 = scmp.eq.s32.totalorder %s15, 1
    %p106 = por %p104, %p105
    %p108 = scmp.ne.s32.totalorder %s91, %s107
    %p109 = scmp.eq.s32.totalorder %s15, 0
    %p110 = por %p108, %p109
    %p111 = scmp.le.s32.totalorder 1, %s9
    %p112 = scmp.lt.s32.totalorder %s9, 3
    %p113 = pnand %p111, %p112
    %p114 = pneg %p113
    // Predicated region
    $region9: #{cnn_forward.3} parent=5 // pred_check
      _
    $region10: #{cnn_forward.3} parent=5 // pred_check_branch
      %116 = sbr.rel (%p113) target = $region12
    $region11: #{cnn_forward.3} parent=5 // pred_region
      %s117 = ssub.s32 %s9, 1
      // Predicated region
      $region13: #{cnn_forward.3} parent=11 // pred_check
        %p118 = pneg %p56
      $region14: #{cnn_forward.3} parent=11 // pred_check_branch
        %120 = sbr.rel (%p118) target = $region16
      $region15: #{cnn_forward.3} parent=11 // pred_region
        _
      $region16: #{cnn_forward.3} parent=11 // pred_fallthru
        _
      // Predicated region
      $region17: #{cnn_forward.3} parent=11 // pred_check
        %p121 = pneg %p77
      $region18: #{cnn_forward.3} parent=11 // pred_check_branch
        %123 = sbr.rel (%p121) target = $region20
      $region19: #{cnn_forward.3} parent=11 // pred_region
        _
      $region20: #{cnn_forward.3} parent=11 // pred_fallthru
        _
    $region12: #{cnn_forward.3} parent=5 // pred_fallthru
      _
    %p124 = scmp.lt.s32.totalorder %s9, 2
    // Predicated region
    $region21: #{cnn_forward.3} parent=5 // pred_check
      %p125 = pneg %p124
    $region22: #{cnn_forward.3} parent=5 // pred_check_branch
      %127 = sbr.rel (%p125) target = $region24
    $region23: #{cnn_forward.3} parent=5 // pred_region
      // Predicated region
      $region25: #{cnn_forward.3} parent=23 // pred_check
        %p128 = pneg %p29
      $region26: #{cnn_forward.3} parent=23 // pred_check_branch
        %130 = sbr.rel (%p128) target = $region28
      $region27: #{cnn_forward.3} parent=23 // pred_region
        %s131 = smul.u32 4, %s9
        %p132 = scmp.lt.s32.totalorder %s131, 7
        %s133 = scalar_select %p132, %s131, 7
        %s134 = smul.addr %s133, 6
        %s135 = smul.addr %s134, 8
        %s136 = scalar_lea.vmem %s0, %s135
        %s137 = smul.u32 4, %s9
      $region28: #{cnn_forward.3} parent=23 // pred_fallthru
        _
    $region24: #{cnn_forward.3} parent=5 // pred_fallthru
      _
    %p138 = scmp.le.s32.totalorder 1, %s9
    %p139 = scmp.lt.s32.totalorder %s9, 3
    %p140 = pnand %p138, %p139
    %p141 = pneg %p140
    // Predicated region
    $region29: #{cnn_forward.3} parent=5 // pred_check
      _
    $region30: #{cnn_forward.3} parent=5 // pred_check_branch
      %143 = sbr.rel (%p140) target = $region32
    $region31: #{cnn_forward.3} parent=5 // pred_region
      %s144 = ssub.s32 %s9, 1
      %s145 = smul.u32 4, %s14
      %p146 = scmp.lt.s32.totalorder %s145, 7
      %s147 = scalar_select %p146, %s145, 7
      %s148 = smul.addr %s147, 6
      %s149 = smul.addr %s148, 8
      %s150 = scalar_lea.vmem %s0, %s149
      %p151 = pneg %p35
      %p152 = pneg %p32
      %p153 = pneg %p56
      %p154 = pneg %p53
      %p155 = pneg %p77
      %p156 = pneg %p74
      %p157 = pneg %p103
      %p158 = pneg %p100
      %s159 = smul.u32 8, %s14
      %p160 = scmp.lt.s32.totalorder %s159, 15
      %s161 = scalar_select %p160, %s159, 15
      %s162 = smul.addr %s161, 8
      %s163 = scalar_lea.vmem %s3, %s162
      %s164 = smul.u32 4, %s14
      %p165 = scmp.lt.s32.totalorder %s164, 7
      %s166 = scalar_select %p165, %s164, 7
      %s167 = smul.addr %s166, 6
      %s168 = smul.addr %s167, 8
      %s169 = scalar_lea.vmem %s0, %s168
      %s170 = smul.u32 4, %s14
      %s171 = smul.u32 8, %s14
      %p172 = scmp.lt.s32.totalorder %s171, 15
      %s173 = scalar_select %p172, %s171, 15
      %s174 = smul.addr %s173, 8
      %s175 = scalar_lea.vmem %s3, %s174
      %s176 = smul.u32 8, %s14
      %v177 = vld [vmem:[%s169] sm:$0xff]
      %v178 = vld [vmem:[%s169 + $0x8] sm:$0xff]
      %v179 = vld [vmem:[%s169 + $0x30] sm:$0xff]
      %v180 = vld [vmem:[%s169 + $0x38] sm:$0xff]
      %v181 = vld [vmem:[%s169 + $0x60] sm:$0xff]
      %v182 = vld [vmem:[%s169 + $0x68] sm:$0xff]
      %v183 = vld [vmem:[%s169 + $0x90] sm:$0xff]
      %v184 = vld [vmem:[%s169 + $0x98] sm:$0xff]
      %s185 = scalar_lea.vmem %s169, 24
      %v186 = vld [vmem:[%s185] sm:$0xff]
      %v187 = vld [vmem:[%s185 + $0x8] sm:$0xff]
      %v188 = vld [vmem:[%s185 + $0x30] sm:$0xff]
      %v189 = vld [vmem:[%s185 + $0x38] sm:$0xff]
      %v190 = vld [vmem:[%s185 + $0x60] sm:$0xff]
      %v191 = vld [vmem:[%s185 + $0x68] sm:$0xff]
      %v192 = vld [vmem:[%s185 + $0x90] sm:$0xff]
      %v193 = vld [vmem:[%s185 + $0x98] sm:$0xff]
      %v194 = vld [vmem:[%s169 + $0x1] sm:$0xff]
      %v195 = vld [vmem:[%s169 + $0x9] sm:$0xff]
      %v196 = vld [vmem:[%s169 + $0x31] sm:$0xff]
      %v197 = vld [vmem:[%s169 + $0x39] sm:$0xff]
      %v198 = vld [vmem:[%s169 + $0x61] sm:$0xff]
      %v199 = vld [vmem:[%s169 + $0x69] sm:$0xff]
      %v200 = vld [vmem:[%s169 + $0x91] sm:$0xff]
      %v201 = vld [vmem:[%s169 + $0x99] sm:$0xff]
      %v202 = vld [vmem:[%s185 + $0x1] sm:$0xff]
      %v203 = vld [vmem:[%s185 + $0x9] sm:$0xff]
      %v204 = vld [vmem:[%s185 + $0x31] sm:$0xff]
      %v205 = vld [vmem:[%s185 + $0x39] sm:$0xff]
      %v206 = vld [vmem:[%s185 + $0x61] sm:$0xff]
      %v207 = vld [vmem:[%s185 + $0x69] sm:$0xff]
      %v208 = vld [vmem:[%s185 + $0x91] sm:$0xff]
      %v209 = vld [vmem:[%s185 + $0x99] sm:$0xff]
      %v210 = vld [vmem:[%s169 + $0x2] sm:$0xff]
      %v211 = vld [vmem:[%s169 + $0xa] sm:$0xff]
      %v212 = vld [vmem:[%s169 + $0x32] sm:$0xff]
      %v213 = vld [vmem:[%s169 + $0x3a] sm:$0xff]
      %v214 = vld [vmem:[%s169 + $0x62] sm:$0xff]
      %v215 = vld [vmem:[%s169 + $0x6a] sm:$0xff]
      %v216 = vld [vmem:[%s169 + $0x92] sm:$0xff]
      %v217 = vld [vmem:[%s169 + $0x9a] sm:$0xff]
      %v218 = vld [vmem:[%s185 + $0x2] sm:$0xff]
      %v219 = vld [vmem:[%s185 + $0xa] sm:$0xff]
      %v220 = vld [vmem:[%s185 + $0x32] sm:$0xff]
      %v221 = vld [vmem:[%s185 + $0x3a] sm:$0xff]
      %v222 = vld [vmem:[%s185 + $0x62] sm:$0xff]
      %v223 = vld [vmem:[%s185 + $0x6a] sm:$0xff]
      %v224 = vld [vmem:[%s185 + $0x92] sm:$0xff]
      %v225 = vld [vmem:[%s185 + $0x9a] sm:$0xff]
      %v226 = vld [vmem:[%s1] sm:$0xff]
      %v227 = vld [vmem:[%s1 + $0x8] sm:$0xff]
      %v228 = vld [vmem:[%s1 + $0x10] sm:$0xff]
      %v229 = vld [vmem:[%s1 + $0x18] sm:$0xff]
      %v230 = vld [vmem:[%s1 + $0x20] sm:$0xff]
      %v231 = vld [vmem:[%s1 + $0x28] sm:$0xff]
      %v232 = vld [vmem:[%s1 + $0x30] sm:$0xff]
      %v233 = vld [vmem:[%s1 + $0x38] sm:$0xff]
      %v234 = vld [vmem:[%s1 + $0x40] sm:$0xff]
      %v235 = vld [vmem:[%s1 + $0x48] sm:$0xff]
      %v236 = vld [vmem:[%s1 + $0x50] sm:$0xff]
      %v237 = vld [vmem:[%s1 + $0x58] sm:$0xff]
      %s238 = scalar_lea.vmem %s1, 96
      %v239 = vld [vmem:[%s238] sm:$0xff]
      %v240 = vld [vmem:[%s238 + $0x8] sm:$0xff]
      %v241 = vld [vmem:[%s238 + $0x10] sm:$0xff]
      %v242 = vld [vmem:[%s238 + $0x18] sm:$0xff]
      %v243 = vld [vmem:[%s238 + $0x20] sm:$0xff]
      %v244 = vld [vmem:[%s238 + $0x28] sm:$0xff]
      %v245 = vld [vmem:[%s238 + $0x30] sm:$0xff]
      %v246 = vld [vmem:[%s238 + $0x38] sm:$0xff]
      %v247 = vld [vmem:[%s238 + $0x40] sm:$0xff]
      %v248 = vld [vmem:[%s238 + $0x48] sm:$0xff]
      %v249 = vld [vmem:[%s238 + $0x50] sm:$0xff]
      %v250 = vld [vmem:[%s238 + $0x58] sm:$0xff]
      %s251 = scalar_lea.vmem %s1, 192
      %v252 = vld [vmem:[%s251] sm:$0xff]
      %v253 = vld [vmem:[%s251 + $0x8] sm:$0xff]
      %v254 = vld [vmem:[%s251 + $0x10] sm:$0xff]
      %v255 = vld [vmem:[%s251 + $0x18] sm:$0xff]
      %v256 = vld [vmem:[%s251 + $0x20] sm:$0xff]
      %v257 = vld [vmem:[%s251 + $0x28] sm:$0xff]
      %v258 = vld [vmem:[%s251 + $0x30] sm:$0xff]
      %v259 = vld [vmem:[%s251 + $0x38] sm:$0xff]
      %v260 = vld [vmem:[%s251 + $0x40] sm:$0xff]
      %v261 = vld [vmem:[%s251 + $0x48] sm:$0xff]
      %v262 = vld [vmem:[%s251 + $0x50] sm:$0xff]
      %v263 = vld [vmem:[%s251 + $0x58] sm:$0xff]
      %s264 = scalar_lea.vmem %s1, 288
      %v265 = vld [vmem:[%s264] sm:$0xff]
      %v266 = vld [vmem:[%s264 + $0x8] sm:$0xff]
      %v267 = vld [vmem:[%s264 + $0x10] sm:$0xff]
      %v268 = vld [vmem:[%s264 + $0x18] sm:$0xff]
      %v269 = vld [vmem:[%s264 + $0x20] sm:$0xff]
      %v270 = vld [vmem:[%s264 + $0x28] sm:$0xff]
      %v271 = vld [vmem:[%s264 + $0x30] sm:$0xff]
      %v272 = vld [vmem:[%s264 + $0x38] sm:$0xff]
      %v273 = vld [vmem:[%s264 + $0x40] sm:$0xff]
      %v274 = vld [vmem:[%s264 + $0x48] sm:$0xff]
      %v275 = vld [vmem:[%s264 + $0x50] sm:$0xff]
      %v276 = vld [vmem:[%s264 + $0x58] sm:$0xff]
      %s277 = scalar_lea.vmem %s1, 384
      %v278 = vld [vmem:[%s277] sm:$0xff]
      %v279 = vld [vmem:[%s277 + $0x8] sm:$0xff]
      %v280 = vld [vmem:[%s277 + $0x10] sm:$0xff]
      %v281 = vld [vmem:[%s277 + $0x18] sm:$0xff]
      %v282 = vld [vmem:[%s277 + $0x20] sm:$0xff]
      %v283 = vld [vmem:[%s277 + $0x28] sm:$0xff]
      %v284 = vld [vmem:[%s277 + $0x30] sm:$0xff]
      %v285 = vld [vmem:[%s277 + $0x38] sm:$0xff]
      %v286 = vld [vmem:[%s277 + $0x40] sm:$0xff]
      %v287 = vld [vmem:[%s277 + $0x48] sm:$0xff]
      %v288 = vld [vmem:[%s277 + $0x50] sm:$0xff]
      %v289 = vld [vmem:[%s277 + $0x58] sm:$0xff]
      %s290 = scalar_lea.vmem %s1, 480
      %v291 = vld [vmem:[%s290] sm:$0xff]
      %v292 = vld [vmem:[%s290 + $0x8] sm:$0xff]
      %v293 = vld [vmem:[%s290 + $0x10] sm:$0xff]
      %v294 = vld [vmem:[%s290 + $0x18] sm:$0xff]
      %v295 = vld [vmem:[%s290 + $0x20] sm:$0xff]
      %v296 = vld [vmem:[%s290 + $0x28] sm:$0xff]
      %v297 = vld [vmem:[%s290 + $0x30] sm:$0xff]
      %v298 = vld [vmem:[%s290 + $0x38] sm:$0xff]
      %v299 = vld [vmem:[%s290 + $0x40] sm:$0xff]
      %v300 = vld [vmem:[%s290 + $0x48] sm:$0xff]
      %v301 = vld [vmem:[%s290 + $0x50] sm:$0xff]
      %v302 = vld [vmem:[%s290 + $0x58] sm:$0xff]
      %s303 = scalar_lea.vmem %s1, 576
      %v304 = vld [vmem:[%s303] sm:$0xff]
      %v305 = vld [vmem:[%s303 + $0x8] sm:$0xff]
      %v306 = vld [vmem:[%s303 + $0x10] sm:$0xff]
      %v307 = vld [vmem:[%s303 + $0x18] sm:$0xff]
      %v308 = vld [vmem:[%s303 + $0x20] sm:$0xff]
      %v309 = vld [vmem:[%s303 + $0x28] sm:$0xff]
      %v310 = vld [vmem:[%s303 + $0x30] sm:$0xff]
      %v311 = vld [vmem:[%s303 + $0x38] sm:$0xff]
      %v312 = vld [vmem:[%s303 + $0x40] sm:$0xff]
      %v313 = vld [vmem:[%s303 + $0x48] sm:$0xff]
      %v314 = vld [vmem:[%s303 + $0x50] sm:$0xff]
      %v315 = vld [vmem:[%s303 + $0x58] sm:$0xff]
      %s316 = scalar_lea.vmem %s1, 672
      %v317 = vld [vmem:[%s316] sm:$0xff]
      %v318 = vld [vmem:[%s316 + $0x8] sm:$0xff]
      %v319 = vld [vmem:[%s316 + $0x10] sm:$0xff]
      %v320 = vld [vmem:[%s316 + $0x18] sm:$0xff]
      %v321 = vld [vmem:[%s316 + $0x20] sm:$0xff]
      %v322 = vld [vmem:[%s316 + $0x28] sm:$0xff]
      %v323 = vld [vmem:[%s316 + $0x30] sm:$0xff]
      %v324 = vld [vmem:[%s316 + $0x38] sm:$0xff]
      %v325 = vld [vmem:[%s316 + $0x40] sm:$0xff]
      %v326 = vld [vmem:[%s316 + $0x48] sm:$0xff]
      %v327 = vld [vmem:[%s316 + $0x50] sm:$0xff]
      %v328 = vld [vmem:[%s316 + $0x58] sm:$0xff]
      %s329 = scalar_lea.vmem %s1, 768
      %v330 = vld [vmem:[%s329] sm:$0xff]
      %v331 = vld [vmem:[%s329 + $0x8] sm:$0xff]
      %v332 = vld [vmem:[%s329 + $0x10] sm:$0xff]
      %v333 = vld [vmem:[%s329 + $0x18] sm:$0xff]
      %v334 = vld [vmem:[%s329 + $0x20] sm:$0xff]
      %v335 = vld [vmem:[%s329 + $0x28] sm:$0xff]
      %v336 = vld [vmem:[%s329 + $0x30] sm:$0xff]
      %v337 = vld [vmem:[%s329 + $0x38] sm:$0xff]
      %v338 = vld [vmem:[%s329 + $0x40] sm:$0xff]
      %v339 = vld [vmem:[%s329 + $0x48] sm:$0xff]
      %v340 = vld [vmem:[%s329 + $0x50] sm:$0xff]
      %v341 = vld [vmem:[%s329 + $0x58] sm:$0xff]
      %s342 = scalar_lea.vmem %s1, 864
      %v343 = vld [vmem:[%s342] sm:$0xff]
      %v344 = vld [vmem:[%s342 + $0x8] sm:$0xff]
      %v345 = vld [vmem:[%s342 + $0x10] sm:$0xff]
      %v346 = vld [vmem:[%s342 + $0x18] sm:$0xff]
      %v347 = vld [vmem:[%s342 + $0x20] sm:$0xff]
      %v348 = vld [vmem:[%s342 + $0x28] sm:$0xff]
      %v349 = vld [vmem:[%s342 + $0x30] sm:$0xff]
      %v350 = vld [vmem:[%s342 + $0x38] sm:$0xff]
      %v351 = vld [vmem:[%s342 + $0x40] sm:$0xff]
      %v352 = vld [vmem:[%s342 + $0x48] sm:$0xff]
      %v353 = vld [vmem:[%s342 + $0x50] sm:$0xff]
      %v354 = vld [vmem:[%s342 + $0x58] sm:$0xff]
      %vm355 = vcmask 785408
      %v357 = vsel %vm355, %v186, 0
      %v360 = vsel %vm355, %v187, 0
      %v363 = vsel %vm355, %v188, 0
      %v366 = vsel %vm355, %v189, 0
      %v369 = vsel %vm355, %v190, 0
      %v372 = vsel %vm355, %v191, 0
      %v375 = vsel %vm355, %v192, 0
      %v378 = vsel %vm355, %v193, 0
      %380 = vmatprep.subr.mxu0 0.0
      %381 = vmatpush1.msra.mxu0 0.0
      %382 = vmatprep.subr.mxu0 0.0
      %383 = vmatpush1.msra.mxu0 0.0
      %384 = vmatprep.subr.mxu0 0.0
      %385 = vmatpush1.msra.mxu0 0.0
      %386 = vmatprep.subr.mxu0 0.0
      %387 = vmatpush1.msra.mxu0 0.0
      %388 = vmatprep.subr.mxu0 0.0
      %389 = vmatpush1.msra.mxu0 %v250
      %390 = vmatprep.subr.mxu0 0.0
      %391 = vmatpush1.msra.mxu0 %v249
      %392 = vmatprep.subr.mxu0 0.0
      %393 = vmatpush1.msra.mxu0 %v248
      %394 = vmatprep.subr.mxu0 0.0
      %395 = vmatpush1.msra.mxu0 %v247
      %396 = vmatprep.subr.mxu0 0.0
      %397 = vmatpush1.msra.mxu0 %v246
      %398 = vmatprep.subr.mxu0 0.0
      %399 = vmatpush1.msra.mxu0 %v245
      %400 = vmatprep.subr.mxu0 0.0
      %401 = vmatpush1.msra.mxu0 %v244
      %402 = vmatprep.subr.mxu0 0.0
      %403 = vmatpush1.msra.mxu0 %v243
      %404 = vmatprep.subr.mxu0 0.0
      %405 = vmatpush1.msra.mxu0 %v242
      %406 = vmatprep.subr.mxu0 0.0
      %407 = vmatpush1.msra.mxu0 %v241
      %408 = vmatprep.subr.mxu0 0.0
      %409 = vmatpush1.msra.mxu0 %v240
      %410 = vmatprep.subr.mxu0 0.0
      %411 = vmatpush1.msra.mxu0 %v239
      %412 = vmatprep.subr.mxu0 0.0
      %413 = vmatpush2.msra.mxu0 0.0
      %414 = vmatprep.subr.mxu0 0.0
      %415 = vmatpush2.msra.mxu0 0.0
      %416 = vmatprep.subr.mxu0 0.0
      %417 = vmatpush2.msra.mxu0 0.0
      %418 = vmatprep.subr.mxu0 0.0
      %419 = vmatpush2.msra.mxu0 0.0
      %420 = vmatprep.subr.mxu0 0.0
      %421 = vmatpush2.msra.mxu0 0.0
      %422 = vmatprep.subr.mxu0 0.0
      %423 = vmatpush2.msra.mxu0 0.0
      %424 = vmatprep.subr.mxu0 0.0
      %425 = vmatpush2.msra.mxu0 0.0
      %426 = vmatprep.subr.mxu0 0.0
      %427 = vmatpush2.msra.mxu0 0.0
      %428 = vmatprep.subr.mxu0 0.0
      %429 = vmatpush2.msra.mxu0 0.0
      %430 = vmatprep.subr.mxu0 0.0
      %431 = vmatpush2.msra.mxu0 0.0
      %432 = vmatprep.subr.mxu0 0.0
      %433 = vmatpush2.msra.mxu0 0.0
      %434 = vmatprep.subr.mxu0 0.0
      %435 = vmatpush2.msra.mxu0 0.0
      %436 = vmatprep.subr.mxu0 0.0
      %437 = vmatpush2.msra.mxu0 0.0
      %438 = vmatprep.subr.mxu0 0.0
      %439 = vmatpush2.msra.mxu0 0.0
      %440 = vmatprep.subr.mxu0 0.0
      %441 = vmatpush2.msra.mxu0 0.0
      %442 = vmatprep.subr.mxu0 0.0
      %443 = vmatpush2.msra.mxu0 0.0
      %444 = vmatprep.mubr.f32.mxu0 0.0
      %445 = vmatmul.mubr.f32.gmra.mxu0 %v357
      %v446 = vpop.f32.mrf.mxu0
      %v447 = vadd.f32 0.0, %v446
      %v448 = vpop.f32.mrf.mxu0
      %449 = vmatprep.mubr.f32.mxu0 0.0
      %450 = vmatmul.mubr.f32.gmra.mxu0 %v360
      %v451 = vpop.f32.mrf.mxu0
      %v452 = vadd.f32 0.0, %v451
      %v453 = vpop.f32.mrf.mxu0
      %454 = vmatprep.mubr.f32.mxu0 0.0
      %455 = vmatmul.mubr.f32.gmra.mxu0 %v363
      %v456 = vpop.f32.mrf.mxu0
      %v457 = vadd.f32 0.0, %v456
      %v458 = vpop.f32.mrf.mxu0
      %459 = vmatprep.mubr.f32.mxu0 0.0
      %460 = vmatmul.mubr.f32.gmra.mxu0 %v366
      %v461 = vpop.f32.mrf.mxu0
      %v462 = vadd.f32 0.0, %v461
      %v463 = vpop.f32.mrf.mxu0
      %464 = vmatprep.mubr.f32.mxu0 0.0
      %465 = vmatmul.mubr.f32.gmra.mxu0 %v369
      %v466 = vpop.f32.mrf.mxu0
      %v467 = vadd.f32 0.0, %v466
      %v468 = vpop.f32.mrf.mxu0
      %469 = vmatprep.mubr.f32.mxu0 0.0
      %470 = vmatmul.mubr.f32.gmra.mxu0 %v372
      %v471 = vpop.f32.mrf.mxu0
      %v472 = vadd.f32 0.0, %v471
      %v473 = vpop.f32.mrf.mxu0
      %474 = vmatprep.mubr.f32.mxu0 0.0
      %475 = vmatmul.mubr.f32.gmra.mxu0 %v375
      %v476 = vpop.f32.mrf.mxu0
      %v477 = vadd.f32 0.0, %v476
      %v478 = vpop.f32.mrf.mxu0
      %479 = vmatprep.mubr.f32.mxu0 0.0
      %480 = vmatmul.mubr.f32.gmra.mxu0 %v378
      %v481 = vpop.f32.mrf.mxu0
      %v482 = vadd.f32 0.0, %v481
      %v483 = vpop.f32.mrf.mxu0
      %484 = vdwg.mxu0
      %v486 = vsel %vm355, %v177, 0
      %v489 = vsel %vm355, %v178, 0
      %v492 = vsel %vm355, %v179, 0
      %v495 = vsel %vm355, %v180, 0
      %v498 = vsel %vm355, %v181, 0
      %v501 = vsel %vm355, %v182, 0
      %v504 = vsel %vm355, %v183, 0
      %v507 = vsel %vm355, %v184, 0
      %509 = vmatprep.subr.mxu0 0.0
      %510 = vmatpush1.msra.mxu0 0.0
      %511 = vmatprep.subr.mxu0 0.0
      %512 = vmatpush1.msra.mxu0 0.0
      %513 = vmatprep.subr.mxu0 0.0
      %514 = vmatpush1.msra.mxu0 0.0
      %515 = vmatprep.subr.mxu0 0.0
      %516 = vmatpush1.msra.mxu0 0.0
      %517 = vmatprep.subr.mxu0 0.0
      %518 = vmatpush1.msra.mxu0 %v237
      %519 = vmatprep.subr.mxu0 0.0
      %520 = vmatpush1.msra.mxu0 %v236
      %521 = vmatprep.subr.mxu0 0.0
      %522 = vmatpush1.msra.mxu0 %v235
      %523 = vmatprep.subr.mxu0 0.0
      %524 = vmatpush1.msra.mxu0 %v234
      %525 = vmatprep.subr.mxu0 0.0
      %526 = vmatpush1.msra.mxu0 %v233
      %527 = vmatprep.subr.mxu0 0.0
      %528 = vmatpush1.msra.mxu0 %v232
      %529 = vmatprep.subr.mxu0 0.0
      %530 = vmatpush1.msra.mxu0 %v231
      %531 = vmatprep.subr.mxu0 0.0
      %532 = vmatpush1.msra.mxu0 %v230
      %533 = vmatprep.subr.mxu0 0.0
      %534 = vmatpush1.msra.mxu0 %v229
      %535 = vmatprep.subr.mxu0 0.0
      %536 = vmatpush1.msra.mxu0 %v228
      %537 = vmatprep.subr.mxu0 0.0
      %538 = vmatpush1.msra.mxu0 %v227
      %539 = vmatprep.subr.mxu0 0.0
      %540 = vmatpush1.msra.mxu0 %v226
      %541 = vmatprep.subr.mxu0 0.0
      %542 = vmatpush2.msra.mxu0 0.0
      %543 = vmatprep.subr.mxu0 0.0
      %544 = vmatpush2.msra.mxu0 0.0
      %545 = vmatprep.subr.mxu0 0.0
      %546 = vmatpush2.msra.mxu0 0.0
      %547 = vmatprep.subr.mxu0 0.0
      %548 = vmatpush2.msra.mxu0 0.0
      %549 = vmatprep.subr.mxu0 0.0
      %550 = vmatpush2.msra.mxu0 0.0
      %551 = vmatprep.subr.mxu0 0.0
      %552 = vmatpush2.msra.mxu0 0.0
      %553 = vmatprep.subr.mxu0 0.0
      %554 = vmatpush2.msra.mxu0 0.0
      %555 = vmatprep.subr.mxu0 0.0
      %556 = vmatpush2.msra.mxu0 0.0
      %557 = vmatprep.subr.mxu0 0.0
      %558 = vmatpush2.msra.mxu0 0.0
      %559 = vmatprep.subr.mxu0 0.0
      %560 = vmatpush2.msra.mxu0 0.0
      %561 = vmatprep.subr.mxu0 0.0
      %562 = vmatpush2.msra.mxu0 0.0
      %563 = vmatprep.subr.mxu0 0.0
      %564 = vmatpush2.msra.mxu0 0.0
      %565 = vmatprep.subr.mxu0 0.0
      %566 = vmatpush2.msra.mxu0 0.0
      %567 = vmatprep.subr.mxu0 0.0
      %568 = vmatpush2.msra.mxu0 0.0
      %569 = vmatprep.subr.mxu0 0.0
      %570 = vmatpush2.msra.mxu0 0.0
      %571 = vmatprep.subr.mxu0 0.0
      %572 = vmatpush2.msra.mxu0 0.0
      %573 = vmatprep.mubr.f32.mxu0 0.0
      %574 = vmatmul.mubr.f32.gmra.mxu0 %v486
      %v575 = vpop.f32.mrf.mxu0
      %v576 = vadd.f32 %v447, %v575
      %v577 = vpop.f32.mrf.mxu0
      %578 = vmatprep.mubr.f32.mxu0 0.0
      %579 = vmatmul.mubr.f32.gmra.mxu0 %v489
      %v580 = vpop.f32.mrf.mxu0
      %v581 = vadd.f32 %v452, %v580
      %v582 = vpop.f32.mrf.mxu0
      %583 = vmatprep.mubr.f32.mxu0 0.0
      %584 = vmatmul.mubr.f32.gmra.mxu0 %v492
      %v585 = vpop.f32.mrf.mxu0
      %v586 = vadd.f32 %v457, %v585
      %v587 = vpop.f32.mrf.mxu0
      %588 = vmatprep.mubr.f32.mxu0 0.0
      %589 = vmatmul.mubr.f32.gmra.mxu0 %v495
      %v590 = vpop.f32.mrf.mxu0
      %v591 = vadd.f32 %v462, %v590
      %v592 = vpop.f32.mrf.mxu0
      %593 = vmatprep.mubr.f32.mxu0 0.0
      %594 = vmatmul.mubr.f32.gmra.mxu0 %v498
      %v595 = vpop.f32.mrf.mxu0
      %v596 = vadd.f32 %v467, %v595
      %v597 = vpop.f32.mrf.mxu0
      %598 = vmatprep.mubr.f32.mxu0 0.0
      %599 = vmatmul.mubr.f32.gmra.mxu0 %v501
      %v600 = vpop.f32.mrf.mxu0
      %v601 = vadd.f32 %v472, %v600
      %v602 = vpop.f32.mrf.mxu0
      %603 = vmatprep.mubr.f32.mxu0 0.0
      %604 = vmatmul.mubr.f32.gmra.mxu0 %v504
      %v605 = vpop.f32.mrf.mxu0
      %v606 = vadd.f32 %v477, %v605
      %v607 = vpop.f32.mrf.mxu0
      %608 = vmatprep.mubr.f32.mxu0 0.0
      %609 = vmatmul.mubr.f32.gmra.mxu0 %v507
      %v610 = vpop.f32.mrf.mxu0
      %v611 = vadd.f32 %v482, %v610
      %v612 = vpop.f32.mrf.mxu0
      %613 = vdwg.mxu0
      %v615 = vsel %vm355, %v194, 0
      %v618 = vsel %vm355, %v195, 0
      %v621 = vsel %vm355, %v196, 0
      %v624 = vsel %vm355, %v197, 0
      %v627 = vsel %vm355, %v198, 0
      %v630 = vsel %vm355, %v199, 0
      %v633 = vsel %vm355, %v200, 0
      %v636 = vsel %vm355, %v201, 0
      %638 = vmatprep.subr.mxu0 0.0
      %639 = vmatpush1.msra.mxu0 0.0
      %640 = vmatprep.subr.mxu0 0.0
      %641 = vmatpush1.msra.mxu0 0.0
      %642 = vmatprep.subr.mxu0 0.0
      %643 = vmatpush1.msra.mxu0 0.0
      %644 = vmatprep.subr.mxu0 0.0
      %645 = vmatpush1.msra.mxu0 0.0
      %646 = vmatprep.subr.mxu0 0.0
      %647 = vmatpush1.msra.mxu0 %v263
      %648 = vmatprep.subr.mxu0 0.0
      %649 = vmatpush1.msra.mxu0 %v262
      %650 = vmatprep.subr.mxu0 0.0
      %651 = vmatpush1.msra.mxu0 %v261
      %652 = vmatprep.subr.mxu0 0.0
      %653 = vmatpush1.msra.mxu0 %v260
      %654 = vmatprep.subr.mxu0 0.0
      %655 = vmatpush1.msra.mxu0 %v259
      %656 = vmatprep.subr.mxu0 0.0
      %657 = vmatpush1.msra.mxu0 %v258
      %658 = vmatprep.subr.mxu0 0.0
      %659 = vmatpush1.msra.mxu0 %v257
      %660 = vmatprep.subr.mxu0 0.0
      %661 = vmatpush1.msra.mxu0 %v256
      %662 = vmatprep.subr.mxu0 0.0
      %663 = vmatpush1.msra.mxu0 %v255
      %664 = vmatprep.subr.mxu0 0.0
      %665 = vmatpush1.msra.mxu0 %v254
      %666 = vmatprep.subr.mxu0 0.0
      %667 = vmatpush1.msra.mxu0 %v253
      %668 = vmatprep.subr.mxu0 0.0
      %669 = vmatpush1.msra.mxu0 %v252
      %670 = vmatprep.subr.mxu0 0.0
      %671 = vmatpush2.msra.mxu0 0.0
      %672 = vmatprep.subr.mxu0 0.0
      %673 = vmatpush2.msra.mxu0 0.0
      %674 = vmatprep.subr.mxu0 0.0
      %675 = vmatpush2.msra.mxu0 0.0
      %676 = vmatprep.subr.mxu0 0.0
      %677 = vmatpush2.msra.mxu0 0.0
      %678 = vmatprep.subr.mxu0 0.0
      %679 = vmatpush2.msra.mxu0 0.0
      %680 = vmatprep.subr.mxu0 0.0
      %681 = vmatpush2.msra.mxu0 0.0
      %682 = vmatprep.subr.mxu0 0.0
      %683 = vmatpush2.msra.mxu0 0.0
      %684 = vmatprep.subr.mxu0 0.0
      %685 = vmatpush2.msra.mxu0 0.0
      %686 = vmatprep.subr.mxu0 0.0
      %687 = vmatpush2.msra.mxu0 0.0
      %688 = vmatprep.subr.mxu0 0.0
      %689 = vmatpush2.msra.mxu0 0.0
      %690 = vmatprep.subr.mxu0 0.0
      %691 = vmatpush2.msra.mxu0 0.0
      %692 = vmatprep.subr.mxu0 0.0
      %693 = vmatpush2.msra.mxu0 0.0
      %694 = vmatprep.subr.mxu0 0.0
      %695 = vmatpush2.msra.mxu0 0.0
      %696 = vmatprep.subr.mxu0 0.0
      %697 = vmatpush2.msra.mxu0 0.0
      %698 = vmatprep.subr.mxu0 0.0
      %699 = vmatpush2.msra.mxu0 0.0
      %700 = vmatprep.subr.mxu0 0.0
      %701 = vmatpush2.msra.mxu0 0.0
      %702 = vmatprep.mubr.f32.mxu0 0.0
      %703 = vmatmul.mubr.f32.gmra.mxu0 %v615
      %v704 = vpop.f32.mrf.mxu0
      %v705 = vadd.f32 0.0, %v704
      %v706 = vpop.f32.mrf.mxu0
      %707 = vmatprep.mubr.f32.mxu0 0.0
      %708 = vmatmul.mubr.f32.gmra.mxu0 %v618
      %v709 = vpop.f32.mrf.mxu0
      %v710 = vadd.f32 0.0, %v709
      %v711 = vpop.f32.mrf.mxu0
      %712 = vmatprep.mubr.f32.mxu0 0.0
      %713 = vmatmul.mubr.f32.gmra.mxu0 %v621
      %v714 = vpop.f32.mrf.mxu0
      %v715 = vadd.f32 0.0, %v714
      %v716 = vpop.f32.mrf.mxu0
      %717 = vmatprep.mubr.f32.mxu0 0.0
      %718 = vmatmul.mubr.f32.gmra.mxu0 %v624
      %v719 = vpop.f32.mrf.mxu0
      %v720 = vadd.f32 0.0, %v719
      %v721 = vpop.f32.mrf.mxu0
      %722 = vmatprep.mubr.f32.mxu0 0.0
      %723 = vmatmul.mubr.f32.gmra.mxu0 %v627
      %v724 = vpop.f32.mrf.mxu0
      %v725 = vadd.f32 0.0, %v724
      %v726 = vpop.f32.mrf.mxu0
      %727 = vmatprep.mubr.f32.mxu0 0.0
      %728 = vmatmul.mubr.f32.gmra.mxu0 %v630
      %v729 = vpop.f32.mrf.mxu0
      %v730 = vadd.f32 0.0, %v729
      %v731 = vpop.f32.mrf.mxu0
      %732 = vmatprep.mubr.f32.mxu0 0.0
      %733 = vmatmul.mubr.f32.gmra.mxu0 %v633
      %v734 = vpop.f32.mrf.mxu0
      %v735 = vadd.f32 0.0, %v734
      %v736 = vpop.f32.mrf.mxu0
      %737 = vmatprep.mubr.f32.mxu0 0.0
      %738 = vmatmul.mubr.f32.gmra.mxu0 %v636
      %v739 = vpop.f32.mrf.mxu0
      %v740 = vadd.f32 0.0, %v739
      %v741 = vpop.f32.mrf.mxu0
      %742 = vdwg.mxu0
      %v743 = vadd.f32 %v576, %v705
      %v744 = vadd.f32 %v581, %v710
      %v745 = vadd.f32 %v586, %v715
      %v746 = vadd.f32 %v591, %v720
      %v747 = vadd.f32 %v596, %v725
      %v748 = vadd.f32 %v601, %v730
      %v749 = vadd.f32 %v606, %v735
      %v750 = vadd.f32 %v611, %v740
      %v752 = vsel %vm355, %v202, 0
      %v755 = vsel %vm355, %v203, 0
      %v758 = vsel %vm355, %v204, 0
      %v761 = vsel %vm355, %v205, 0
      %v764 = vsel %vm355, %v206, 0
      %v767 = vsel %vm355, %v207, 0
      %v770 = vsel %vm355, %v208, 0
      %v773 = vsel %vm355, %v209, 0
      %775 = vmatprep.subr.mxu0 0.0
      %776 = vmatpush1.msra.mxu0 0.0
      %777 = vmatprep.subr.mxu0 0.0
      %778 = vmatpush1.msra.mxu0 0.0
      %779 = vmatprep.subr.mxu0 0.0
      %780 = vmatpush1.msra.mxu0 0.0
      %781 = vmatprep.subr.mxu0 0.0
      %782 = vmatpush1.msra.mxu0 0.0
      %783 = vmatprep.subr.mxu0 0.0
      %784 = vmatpush1.msra.mxu0 %v276
      %785 = vmatprep.subr.mxu0 0.0
      %786 = vmatpush1.msra.mxu0 %v275
      %787 = vmatprep.subr.mxu0 0.0
      %788 = vmatpush1.msra.mxu0 %v274
      %789 = vmatprep.subr.mxu0 0.0
      %790 = vmatpush1.msra.mxu0 %v273
      %791 = vmatprep.subr.mxu0 0.0
      %792 = vmatpush1.msra.mxu0 %v272
      %793 = vmatprep.subr.mxu0 0.0
      %794 = vmatpush1.msra.mxu0 %v271
      %795 = vmatprep.subr.mxu0 0.0
      %796 = vmatpush1.msra.mxu0 %v270
      %797 = vmatprep.subr.mxu0 0.0
      %798 = vmatpush1.msra.mxu0 %v269
      %799 = vmatprep.subr.mxu0 0.0
      %800 = vmatpush1.msra.mxu0 %v268
      %801 = vmatprep.subr.mxu0 0.0
      %802 = vmatpush1.msra.mxu0 %v267
      %803 = vmatprep.subr.mxu0 0.0
      %804 = vmatpush1.msra.mxu0 %v266
      %805 = vmatprep.subr.mxu0 0.0
      %806 = vmatpush1.msra.mxu0 %v265
      %807 = vmatprep.subr.mxu0 0.0
      %808 = vmatpush2.msra.mxu0 0.0
      %809 = vmatprep.subr.mxu0 0.0
      %810 = vmatpush2.msra.mxu0 0.0
      %811 = vmatprep.subr.mxu0 0.0
      %812 = vmatpush2.msra.mxu0 0.0
      %813 = vmatprep.subr.mxu0 0.0
      %814 = vmatpush2.msra.mxu0 0.0
      %815 = vmatprep.subr.mxu0 0.0
      %816 = vmatpush2.msra.mxu0 0.0
      %817 = vmatprep.subr.mxu0 0.0
      %818 = vmatpush2.msra.mxu0 0.0
      %819 = vmatprep.subr.mxu0 0.0
      %820 = vmatpush2.msra.mxu0 0.0
      %821 = vmatprep.subr.mxu0 0.0
      %822 = vmatpush2.msra.mxu0 0.0
      %823 = vmatprep.subr.mxu0 0.0
      %824 = vmatpush2.msra.mxu0 0.0
      %825 = vmatprep.subr.mxu0 0.0
      %826 = vmatpush2.msra.mxu0 0.0
      %827 = vmatprep.subr.mxu0 0.0
      %828 = vmatpush2.msra.mxu0 0.0
      %829 = vmatprep.subr.mxu0 0.0
      %830 = vmatpush2.msra.mxu0 0.0
      %831 = vmatprep.subr.mxu0 0.0
      %832 = vmatpush2.msra.mxu0 0.0
      %833 = vmatprep.subr.mxu0 0.0
      %834 = vmatpush2.msra.mxu0 0.0
      %835 = vmatprep.subr.mxu0 0.0
      %836 = vmatpush2.msra.mxu0 0.0
      %837 = vmatprep.subr.mxu0 0.0
      %838 = vmatpush2.msra.mxu0 0.0
      %839 = vmatprep.mubr.f32.mxu0 0.0
      %840 = vmatmul.mubr.f32.gmra.mxu0 %v752
      %v841 = vpop.f32.mrf.mxu0
      %v842 = vadd.f32 0.0, %v841
      %v843 = vpop.f32.mrf.mxu0
      %844 = vmatprep.mubr.f32.mxu0 0.0
      %845 = vmatmul.mubr.f32.gmra.mxu0 %v755
      %v846 = vpop.f32.mrf.mxu0
      %v847 = vadd.f32 0.0, %v846
      %v848 = vpop.f32.mrf.mxu0
      %849 = vmatprep.mubr.f32.mxu0 0.0
      %850 = vmatmul.mubr.f32.gmra.mxu0 %v758
      %v851 = vpop.f32.mrf.mxu0
      %v852 = vadd.f32 0.0, %v851
      %v853 = vpop.f32.mrf.mxu0
      %854 = vmatprep.mubr.f32.mxu0 0.0
      %855 = vmatmul.mubr.f32.gmra.mxu0 %v761
      %v856 = vpop.f32.mrf.mxu0
      %v857 = vadd.f32 0.0, %v856
      %v858 = vpop.f32.mrf.mxu0
      %859 = vmatprep.mubr.f32.mxu0 0.0
      %860 = vmatmul.mubr.f32.gmra.mxu0 %v764
      %v861 = vpop.f32.mrf.mxu0
      %v862 = vadd.f32 0.0, %v861
      %v863 = vpop.f32.mrf.mxu0
      %864 = vmatprep.mubr.f32.mxu0 0.0
      %865 = vmatmul.mubr.f32.gmra.mxu0 %v767
      %v866 = vpop.f32.mrf.mxu0
      %v867 = vadd.f32 0.0, %v866
      %v868 = vpop.f32.mrf.mxu0
      %869 = vmatprep.mubr.f32.mxu0 0.0
      %870 = vmatmul.mubr.f32.gmra.mxu0 %v770
      %v871 = vpop.f32.mrf.mxu0
      %v872 = vadd.f32 0.0, %v871
      %v873 = vpop.f32.mrf.mxu0
      %874 = vmatprep.mubr.f32.mxu0 0.0
      %875 = vmatmul.mubr.f32.gmra.mxu0 %v773
      %v876 = vpop.f32.mrf.mxu0
      %v877 = vadd.f32 0.0, %v876
      %v878 = vpop.f32.mrf.mxu0
      %879 = vdwg.mxu0
      %v880 = vadd.f32 %v743, %v842
      %v881 = vadd.f32 %v744, %v847
      %v882 = vadd.f32 %v745, %v852
      %v883 = vadd.f32 %v746, %v857
      %v884 = vadd.f32 %v747, %v862
      %v885 = vadd.f32 %v748, %v867
      %v886 = vadd.f32 %v749, %v872
      %v887 = vadd.f32 %v750, %v877
      %v889 = vsel %vm355, %v210, 0
      %v892 = vsel %vm355, %v211, 0
      %v895 = vsel %vm355, %v212, 0
      %v898 = vsel %vm355, %v213, 0
      %v901 = vsel %vm355, %v214, 0
      %v904 = vsel %vm355, %v215, 0
      %v907 = vsel %vm355, %v216, 0
      %v910 = vsel %vm355, %v217, 0
      %912 = vmatprep.subr.mxu0 0.0
      %913 = vmatpush1.msra.mxu0 0.0
      %914 = vmatprep.subr.mxu0 0.0
      %915 = vmatpush1.msra.mxu0 0.0
      %916 = vmatprep.subr.mxu0 0.0
      %917 = vmatpush1.msra.mxu0 0.0
      %918 = vmatprep.subr.mxu0 0.0
      %919 = vmatpush1.msra.mxu0 0.0
      %920 = vmatprep.subr.mxu0 0.0
      %921 = vmatpush1.msra.mxu0 %v289
      %922 = vmatprep.subr.mxu0 0.0
      %923 = vmatpush1.msra.mxu0 %v288
      %924 = vmatprep.subr.mxu0 0.0
      %925 = vmatpush1.msra.mxu0 %v287
      %926 = vmatprep.subr.mxu0 0.0
      %927 = vmatpush1.msra.mxu0 %v286
      %928 = vmatprep.subr.mxu0 0.0
      %929 = vmatpush1.msra.mxu0 %v285
      %930 = vmatprep.subr.mxu0 0.0
      %931 = vmatpush1.msra.mxu0 %v284
      %932 = vmatprep.subr.mxu0 0.0
      %933 = vmatpush1.msra.mxu0 %v283
      %934 = vmatprep.subr.mxu0 0.0
      %935 = vmatpush1.msra.mxu0 %v282
      %936 = vmatprep.subr.mxu0 0.0
      %937 = vmatpush1.msra.mxu0 %v281
      %938 = vmatprep.subr.mxu0 0.0
      %939 = vmatpush1.msra.mxu0 %v280
      %940 = vmatprep.subr.mxu0 0.0
      %941 = vmatpush1.msra.mxu0 %v279
      %942 = vmatprep.subr.mxu0 0.0
      %943 = vmatpush1.msra.mxu0 %v278
      %944 = vmatprep.subr.mxu0 0.0
      %945 = vmatpush2.msra.mxu0 0.0
      %946 = vmatprep.subr.mxu0 0.0
      %947 = vmatpush2.msra.mxu0 0.0
      %948 = vmatprep.subr.mxu0 0.0
      %949 = vmatpush2.msra.mxu0 0.0
      %950 = vmatprep.subr.mxu0 0.0
      %951 = vmatpush2.msra.mxu0 0.0
      %952 = vmatprep.subr.mxu0 0.0
      %953 = vmatpush2.msra.mxu0 0.0
      %954 = vmatprep.subr.mxu0 0.0
      %955 = vmatpush2.msra.mxu0 0.0
      %956 = vmatprep.subr.mxu0 0.0
      %957 = vmatpush2.msra.mxu0 0.0
      %958 = vmatprep.subr.mxu0 0.0
      %959 = vmatpush2.msra.mxu0 0.0
      %960 = vmatprep.subr.mxu0 0.0
      %961 = vmatpush2.msra.mxu0 0.0
      %962 = vmatprep.subr.mxu0 0.0
      %963 = vmatpush2.msra.mxu0 0.0
      %964 = vmatprep.subr.mxu0 0.0
      %965 = vmatpush2.msra.mxu0 0.0
      %966 = vmatprep.subr.mxu0 0.0
      %967 = vmatpush2.msra.mxu0 0.0
      %968 = vmatprep.subr.mxu0 0.0
      %969 = vmatpush2.msra.mxu0 0.0
      %970 = vmatprep.subr.mxu0 0.0
      %971 = vmatpush2.msra.mxu0 0.0
      %972 = vmatprep.subr.mxu0 0.0
      %973 = vmatpush2.msra.mxu0 0.0
      %974 = vmatprep.subr.mxu0 0.0
      %975 = vmatpush2.msra.mxu0 0.0
      %976 = vmatprep.mubr.f32.mxu0 0.0
      %977 = vmatmul.mubr.f32.gmra.mxu0 %v889
      %v978 = vpop.f32.mrf.mxu0
      %v979 = vadd.f32 0.0, %v978
      %v980 = vpop.f32.mrf.mxu0
      %981 = vmatprep.mubr.f32.mxu0 0.0
      %982 = vmatmul.mubr.f32.gmra.mxu0 %v892
      %v983 = vpop.f32.mrf.mxu0
      %v984 = vadd.f32 0.0, %v983
      %v985 = vpop.f32.mrf.mxu0
      %986 = vmatprep.mubr.f32.mxu0 0.0
      %987 = vmatmul.mubr.f32.gmra.mxu0 %v895
      %v988 = vpop.f32.mrf.mxu0
      %v989 = vadd.f32 0.0, %v988
      %v990 = vpop.f32.mrf.mxu0
      %991 = vmatprep.mubr.f32.mxu0 0.0
      %992 = vmatmul.mubr.f32.gmra.mxu0 %v898
      %v993 = vpop.f32.mrf.mxu0
      %v994 = vadd.f32 0.0, %v993
      %v995 = vpop.f32.mrf.mxu0
      %996 = vmatprep.mubr.f32.mxu0 0.0
      %997 = vmatmul.mubr.f32.gmra.mxu0 %v901
      %v998 = vpop.f32.mrf.mxu0
      %v999 = vadd.f32 0.0, %v998
      %v1000 = vpop.f32.mrf.mxu0
      %1001 = vmatprep.mubr.f32.mxu0 0.0
      %1002 = vmatmul.mubr.f32.gmra.mxu0 %v904
      %v1003 = vpop.f32.mrf.mxu0
      %v1004 = vadd.f32 0.0, %v1003
      %v1005 = vpop.f32.mrf.mxu0
      %1006 = vmatprep.mubr.f32.mxu0 0.0
      %1007 = vmatmul.mubr.f32.gmra.mxu0 %v907
      %v1008 = vpop.f32.mrf.mxu0
      %v1009 = vadd.f32 0.0, %v1008
      %v1010 = vpop.f32.mrf.mxu0
      %1011 = vmatprep.mubr.f32.mxu0 0.0
      %1012 = vmatmul.mubr.f32.gmra.mxu0 %v910
      %v1013 = vpop.f32.mrf.mxu0
      %v1014 = vadd.f32 0.0, %v1013
      %v1015 = vpop.f32.mrf.mxu0
      %1016 = vdwg.mxu0
      %v1017 = vadd.f32 %v880, %v979
      %v1018 = vadd.f32 %v881, %v984
      %v1019 = vadd.f32 %v882, %v989
      %v1020 = vadd.f32 %v883, %v994
      %v1021 = vadd.f32 %v884, %v999
      %v1022 = vadd.f32 %v885, %v1004
      %v1023 = vadd.f32 %v886, %v1009
      %v1024 = vadd.f32 %v887, %v1014
      %1025 = vmatprep.subr.mxu0 0.0
      %1026 = vmatpush1.msra.mxu0 0.0
      %1027 = vmatprep.subr.mxu0 0.0
      %1028 = vmatpush1.msra.mxu0 0.0
      %1029 = vmatprep.subr.mxu0 0.0
      %1030 = vmatpush1.msra.mxu0 0.0
      %1031 = vmatprep.subr.mxu0 0.0
      %1032 = vmatpush1.msra.mxu0 0.0
      %1033 = vmatprep.subr.mxu0 0.0
      %1034 = vmatpush1.msra.mxu0 %v315
      %1035 = vmatprep.subr.mxu0 0.0
      %1036 = vmatpush1.msra.mxu0 %v314
      %1037 = vmatprep.subr.mxu0 0.0
      %1038 = vmatpush1.msra.mxu0 %v313
      %1039 = vmatprep.subr.mxu0 0.0
      %1040 = vmatpush1.msra.mxu0 %v312
      %1041 = vmatprep.subr.mxu0 0.0
      %1042 = vmatpush1.msra.mxu0 %v311
      %1043 = vmatprep.subr.mxu0 0.0
      %1044 = vmatpush1.msra.mxu0 %v310
      %1045 = vmatprep.subr.mxu0 0.0
      %1046 = vmatpush1.msra.mxu0 %v309
      %1047 = vmatprep.subr.mxu0 0.0
      %1048 = vmatpush1.msra.mxu0 %v308
      %1049 = vmatprep.subr.mxu0 0.0
      %1050 = vmatpush1.msra.mxu0 %v307
      %1051 = vmatprep.subr.mxu0 0.0
      %1052 = vmatpush1.msra.mxu0 %v306
      %1053 = vmatprep.subr.mxu0 0.0
      %1054 = vmatpush1.msra.mxu0 %v305
      %1055 = vmatprep.subr.mxu0 0.0
      %1056 = vmatpush1.msra.mxu0 %v304
      %1057 = vmatprep.subr.mxu0 0.0
      %1058 = vmatpush2.msra.mxu0 0.0
      %1059 = vmatprep.subr.mxu0 0.0
      %1060 = vmatpush2.msra.mxu0 0.0
      %1061 = vmatprep.subr.mxu0 0.0
      %1062 = vmatpush2.msra.mxu0 0.0
      %1063 = vmatprep.subr.mxu0 0.0
      %1064 = vmatpush2.msra.mxu0 0.0
      %1065 = vmatprep.subr.mxu0 0.0
      %1066 = vmatpush2.msra.mxu0 0.0
      %1067 = vmatprep.subr.mxu0 0.0
      %1068 = vmatpush2.msra.mxu0 0.0
      %1069 = vmatprep.subr.mxu0 0.0
      %1070 = vmatpush2.msra.mxu0 0.0
      %1071 = vmatprep.subr.mxu0 0.0
      %1072 = vmatpush2.msra.mxu0 0.0
      %1073 = vmatprep.subr.mxu0 0.0
      %1074 = vmatpush2.msra.mxu0 0.0
      %1075 = vmatprep.subr.mxu0 0.0
      %1076 = vmatpush2.msra.mxu0 0.0
      %1077 = vmatprep.subr.mxu0 0.0
      %1078 = vmatpush2.msra.mxu0 0.0
      %1079 = vmatprep.subr.mxu0 0.0
      %1080 = vmatpush2.msra.mxu0 0.0
      %1081 = vmatprep.subr.mxu0 0.0
      %1082 = vmatpush2.msra.mxu0 0.0
      %1083 = vmatprep.subr.mxu0 0.0
      %1084 = vmatpush2.msra.mxu0 0.0
      %1085 = vmatprep.subr.mxu0 0.0
      %1086 = vmatpush2.msra.mxu0 0.0
      %1087 = vmatprep.subr.mxu0 0.0
      %1088 = vmatpush2.msra.mxu0 0.0
      %1089 = vmatprep.mubr.f32.mxu0 0.0
      %1090 = vmatmul.mubr.f32.gmra.mxu0 %v357
      %v1091 = vpop.f32.mrf.mxu0
      %v1092 = vadd.f32 0.0, %v1091
      %v1093 = vpop.f32.mrf.mxu0
      %1094 = vmatprep.mubr.f32.mxu0 0.0
      %1095 = vmatmul.mubr.f32.gmra.mxu0 %v360
      %v1096 = vpop.f32.mrf.mxu0
      %v1097 = vadd.f32 0.0, %v1096
      %v1098 = vpop.f32.mrf.mxu0
      %1099 = vmatprep.mubr.f32.mxu0 0.0
      %1100 = vmatmul.mubr.f32.gmra.mxu0 %v363
      %v1101 = vpop.f32.mrf.mxu0
      %v1102 = vadd.f32 0.0, %v1101
      %v1103 = vpop.f32.mrf.mxu0
      %1104 = vmatprep.mubr.f32.mxu0 0.0
      %1105 = vmatmul.mubr.f32.gmra.mxu0 %v366
      %v1106 = vpop.f32.mrf.mxu0
      %v1107 = vadd.f32 0.0, %v1106
      %v1108 = vpop.f32.mrf.mxu0
      %1109 = vmatprep.mubr.f32.mxu0 0.0
      %1110 = vmatmul.mubr.f32.gmra.mxu0 %v369
      %v1111 = vpop.f32.mrf.mxu0
      %v1112 = vadd.f32 0.0, %v1111
      %v1113 = vpop.f32.mrf.mxu0
      %1114 = vmatprep.mubr.f32.mxu0 0.0
      %1115 = vmatmul.mubr.f32.gmra.mxu0 %v372
      %v1116 = vpop.f32.mrf.mxu0
      %v1117 = vadd.f32 0.0, %v1116
      %v1118 = vpop.f32.mrf.mxu0
      %1119 = vmatprep.mubr.f32.mxu0 0.0
      %1120 = vmatmul.mubr.f32.gmra.mxu0 %v375
      %v1121 = vpop.f32.mrf.mxu0
      %v1122 = vadd.f32 0.0, %v1121
      %v1123 = vpop.f32.mrf.mxu0
      %1124 = vmatprep.mubr.f32.mxu0 0.0
      %1125 = vmatmul.mubr.f32.gmra.mxu0 %v378
      %v1126 = vpop.f32.mrf.mxu0
      %v1127 = vadd.f32 0.0, %v1126
      %v1128 = vpop.f32.mrf.mxu0
      %1129 = vdwg.mxu0
      %1130 = vmatprep.subr.mxu0 0.0
      %1131 = vmatpush1.msra.mxu0 0.0
      %1132 = vmatprep.subr.mxu0 0.0
      %1133 = vmatpush1.msra.mxu0 0.0
      %1134 = vmatprep.subr.mxu0 0.0
      %1135 = vmatpush1.msra.mxu0 0.0
      %1136 = vmatprep.subr.mxu0 0.0
      %1137 = vmatpush1.msra.mxu0 0.0
      %1138 = vmatprep.subr.mxu0 0.0
      %1139 = vmatpush1.msra.mxu0 %v302
      %1140 = vmatprep.subr.mxu0 0.0
      %1141 = vmatpush1.msra.mxu0 %v301
      %1142 = vmatprep.subr.mxu0 0.0
      %1143 = vmatpush1.msra.mxu0 %v300
      %1144 = vmatprep.subr.mxu0 0.0
      %1145 = vmatpush1.msra.mxu0 %v299
      %1146 = vmatprep.subr.mxu0 0.0
      %1147 = vmatpush1.msra.mxu0 %v298
      %1148 = vmatprep.subr.mxu0 0.0
      %1149 = vmatpush1.msra.mxu0 %v297
      %1150 = vmatprep.subr.mxu0 0.0
      %1151 = vmatpush1.msra.mxu0 %v296
      %1152 = vmatprep.subr.mxu0 0.0
      %1153 = vmatpush1.msra.mxu0 %v295
      %1154 = vmatprep.subr.mxu0 0.0
      %1155 = vmatpush1.msra.mxu0 %v294
      %1156 = vmatprep.subr.mxu0 0.0
      %1157 = vmatpush1.msra.mxu0 %v293
      %1158 = vmatprep.subr.mxu0 0.0
      %1159 = vmatpush1.msra.mxu0 %v292
      %1160 = vmatprep.subr.mxu0 0.0
      %1161 = vmatpush1.msra.mxu0 %v291
      %1162 = vmatprep.subr.mxu0 0.0
      %1163 = vmatpush2.msra.mxu0 0.0
      %1164 = vmatprep.subr.mxu0 0.0
      %1165 = vmatpush2.msra.mxu0 0.0
      %1166 = vmatprep.subr.mxu0 0.0
      %1167 = vmatpush2.msra.mxu0 0.0
      %1168 = vmatprep.subr.mxu0 0.0
      %1169 = vmatpush2.msra.mxu0 0.0
      %1170 = vmatprep.subr.mxu0 0.0
      %1171 = vmatpush2.msra.mxu0 0.0
      %1172 = vmatprep.subr.mxu0 0.0
      %1173 = vmatpush2.msra.mxu0 0.0
      %1174 = vmatprep.subr.mxu0 0.0
      %1175 = vmatpush2.msra.mxu0 0.0
      %1176 = vmatprep.subr.mxu0 0.0
      %1177 = vmatpush2.msra.mxu0 0.0
      %1178 = vmatprep.subr.mxu0 0.0
      %1179 = vmatpush2.msra.mxu0 0.0
      %1180 = vmatprep.subr.mxu0 0.0
      %1181 = vmatpush2.msra.mxu0 0.0
      %1182 = vmatprep.subr.mxu0 0.0
      %1183 = vmatpush2.msra.mxu0 0.0
      %1184 = vmatprep.subr.mxu0 0.0
      %1185 = vmatpush2.msra.mxu0 0.0
      %1186 = vmatprep.subr.mxu0 0.0
      %1187 = vmatpush2.msra.mxu0 0.0
      %1188 = vmatprep.subr.mxu0 0.0
      %1189 = vmatpush2.msra.mxu0 0.0
      %1190 = vmatprep.subr.mxu0 0.0
      %1191 = vmatpush2.msra.mxu0 0.0
      %1192 = vmatprep.subr.mxu0 0.0
      %1193 = vmatpush2.msra.mxu0 0.0
      %1194 = vmatprep.mubr.f32.mxu0 0.0
      %1195 = vmatmul.mubr.f32.gmra.mxu0 %v486
      %v1196 = vpop.f32.mrf.mxu0
      %v1197 = vadd.f32 %v1092, %v1196
      %v1198 = vpop.f32.mrf.mxu0
      %1199 = vmatprep.mubr.f32.mxu0 0.0
      %1200 = vmatmul.mubr.f32.gmra.mxu0 %v489
      %v1201 = vpop.f32.mrf.mxu0
      %v1202 = vadd.f32 %v1097, %v1201
      %v1203 = vpop.f32.mrf.mxu0
      %1204 = vmatprep.mubr.f32.mxu0 0.0
      %1205 = vmatmul.mubr.f32.gmra.mxu0 %v492
      %v1206 = vpop.f32.mrf.mxu0
      %v1207 = vadd.f32 %v1102, %v1206
      %v1208 = vpop.f32.mrf.mxu0
      %1209 = vmatprep.mubr.f32.mxu0 0.0
      %1210 = vmatmul.mubr.f32.gmra.mxu0 %v495
      %v1211 = vpop.f32.mrf.mxu0
      %v1212 = vadd.f32 %v1107, %v1211
      %v1213 = vpop.f32.mrf.mxu0
      %1214 = vmatprep.mubr.f32.mxu0 0.0
      %1215 = vmatmul.mubr.f32.gmra.mxu0 %v498
      %v1216 = vpop.f32.mrf.mxu0
      %v1217 = vadd.f32 %v1112, %v1216
      %v1218 = vpop.f32.mrf.mxu0
      %1219 = vmatprep.mubr.f32.mxu0 0.0
      %1220 = vmatmul.mubr.f32.gmra.mxu0 %v501
      %v1221 = vpop.f32.mrf.mxu0
      %v1222 = vadd.f32 %v1117, %v1221
      %v1223 = vpop.f32.mrf.mxu0
      %1224 = vmatprep.mubr.f32.mxu0 0.0
      %1225 = vmatmul.mubr.f32.gmra.mxu0 %v504
      %v1226 = vpop.f32.mrf.mxu0
      %v1227 = vadd.f32 %v1122, %v1226
      %v1228 = vpop.f32.mrf.mxu0
      %1229 = vmatprep.mubr.f32.mxu0 0.0
      %1230 = vmatmul.mubr.f32.gmra.mxu0 %v507
      %v1231 = vpop.f32.mrf.mxu0
      %v1232 = vadd.f32 %v1127, %v1231
      %v1233 = vpop.f32.mrf.mxu0
      %1234 = vdwg.mxu0
      %1235 = vmatprep.subr.mxu0 0.0
      %1236 = vmatpush1.msra.mxu0 0.0
      %1237 = vmatprep.subr.mxu0 0.0
      %1238 = vmatpush1.msra.mxu0 0.0
      %1239 = vmatprep.subr.mxu0 0.0
      %1240 = vmatpush1.msra.mxu0 0.0
      %1241 = vmatprep.subr.mxu0 0.0
      %1242 = vmatpush1.msra.mxu0 0.0
      %1243 = vmatprep.subr.mxu0 0.0
      %1244 = vmatpush1.msra.mxu0 %v328
      %1245 = vmatprep.subr.mxu0 0.0
      %1246 = vmatpush1.msra.mxu0 %v327
      %1247 = vmatprep.subr.mxu0 0.0
      %1248 = vmatpush1.msra.mxu0 %v326
      %1249 = vmatprep.subr.mxu0 0.0
      %1250 = vmatpush1.msra.mxu0 %v325
      %1251 = vmatprep.subr.mxu0 0.0
      %1252 = vmatpush1.msra.mxu0 %v324
      %1253 = vmatprep.subr.mxu0 0.0
      %1254 = vmatpush1.msra.mxu0 %v323
      %1255 = vmatprep.subr.mxu0 0.0
      %1256 = vmatpush1.msra.mxu0 %v322
      %1257 = vmatprep.subr.mxu0 0.0
      %1258 = vmatpush1.msra.mxu0 %v321
      %1259 = vmatprep.subr.mxu0 0.0
      %1260 = vmatpush1.msra.mxu0 %v320
      %1261 = vmatprep.subr.mxu0 0.0
      %1262 = vmatpush1.msra.mxu0 %v319
      %1263 = vmatprep.subr.mxu0 0.0
      %1264 = vmatpush1.msra.mxu0 %v318
      %1265 = vmatprep.subr.mxu0 0.0
      %1266 = vmatpush1.msra.mxu0 %v317
      %1267 = vmatprep.subr.mxu0 0.0
      %1268 = vmatpush2.msra.mxu0 0.0
      %1269 = vmatprep.subr.mxu0 0.0
      %1270 = vmatpush2.msra.mxu0 0.0
      %1271 = vmatprep.subr.mxu0 0.0
      %1272 = vmatpush2.msra.mxu0 0.0
      %1273 = vmatprep.subr.mxu0 0.0
      %1274 = vmatpush2.msra.mxu0 0.0
      %1275 = vmatprep.subr.mxu0 0.0
      %1276 = vmatpush2.msra.mxu0 0.0
      %1277 = vmatprep.subr.mxu0 0.0
      %1278 = vmatpush2.msra.mxu0 0.0
      %1279 = vmatprep.subr.mxu0 0.0
      %1280 = vmatpush2.msra.mxu0 0.0
      %1281 = vmatprep.subr.mxu0 0.0
      %1282 = vmatpush2.msra.mxu0 0.0
      %1283 = vmatprep.subr.mxu0 0.0
      %1284 = vmatpush2.msra.mxu0 0.0
      %1285 = vmatprep.subr.mxu0 0.0
      %1286 = vmatpush2.msra.mxu0 0.0
      %1287 = vmatprep.subr.mxu0 0.0
      %1288 = vmatpush2.msra.mxu0 0.0
      %1289 = vmatprep.subr.mxu0 0.0
      %1290 = vmatpush2.msra.mxu0 0.0
      %1291 = vmatprep.subr.mxu0 0.0
      %1292 = vmatpush2.msra.mxu0 0.0
      %1293 = vmatprep.subr.mxu0 0.0
      %1294 = vmatpush2.msra.mxu0 0.0
      %1295 = vmatprep.subr.mxu0 0.0
      %1296 = vmatpush2.msra.mxu0 0.0
      %1297 = vmatprep.subr.mxu0 0.0
      %1298 = vmatpush2.msra.mxu0 0.0
      %1299 = vmatprep.mubr.f32.mxu0 0.0
      %1300 = vmatmul.mubr.f32.gmra.mxu0 %v615
      %v1301 = vpop.f32.mrf.mxu0
      %v1302 = vadd.f32 0.0, %v1301
      %v1303 = vpop.f32.mrf.mxu0
      %1304 = vmatprep.mubr.f32.mxu0 0.0
      %1305 = vmatmul.mubr.f32.gmra.mxu0 %v618
      %v1306 = vpop.f32.mrf.mxu0
      %v1307 = vadd.f32 0.0, %v1306
      %v1308 = vpop.f32.mrf.mxu0
      %1309 = vmatprep.mubr.f32.mxu0 0.0
      %1310 = vmatmul.mubr.f32.gmra.mxu0 %v621
      %v1311 = vpop.f32.mrf.mxu0
      %v1312 = vadd.f32 0.0, %v1311
      %v1313 = vpop.f32.mrf.mxu0
      %1314 = vmatprep.mubr.f32.mxu0 0.0
      %1315 = vmatmul.mubr.f32.gmra.mxu0 %v624
      %v1316 = vpop.f32.mrf.mxu0
      %v1317 = vadd.f32 0.0, %v1316
      %v1318 = vpop.f32.mrf.mxu0
      %1319 = vmatprep.mubr.f32.mxu0 0.0
      %1320 = vmatmul.mubr.f32.gmra.mxu0 %v627
      %v1321 = vpop.f32.mrf.mxu0
      %v1322 = vadd.f32 0.0, %v1321
      %v1323 = vpop.f32.mrf.mxu0
      %1324 = vmatprep.mubr.f32.mxu0 0.0
      %1325 = vmatmul.mubr.f32.gmra.mxu0 %v630
      %v1326 = vpop.f32.mrf.mxu0
      %v1327 = vadd.f32 0.0, %v1326
      %v1328 = vpop.f32.mrf.mxu0
      %1329 = vmatprep.mubr.f32.mxu0 0.0
      %1330 = vmatmul.mubr.f32.gmra.mxu0 %v633
      %v1331 = vpop.f32.mrf.mxu0
      %v1332 = vadd.f32 0.0, %v1331
      %v1333 = vpop.f32.mrf.mxu0
      %1334 = vmatprep.mubr.f32.mxu0 0.0
      %1335 = vmatmul.mubr.f32.gmra.mxu0 %v636
      %v1336 = vpop.f32.mrf.mxu0
      %v1337 = vadd.f32 0.0, %v1336
      %v1338 = vpop.f32.mrf.mxu0
      %1339 = vdwg.mxu0
      %v1340 = vadd.f32 %v1197, %v1302
      %v1341 = vadd.f32 %v1202, %v1307
      %v1342 = vadd.f32 %v1207, %v1312
      %v1343 = vadd.f32 %v1212, %v1317
      %v1344 = vadd.f32 %v1217, %v1322
      %v1345 = vadd.f32 %v1222, %v1327
      %v1346 = vadd.f32 %v1227, %v1332
      %v1347 = vadd.f32 %v1232, %v1337
      %1348 = vmatprep.subr.mxu0 0.0
      %1349 = vmatpush1.msra.mxu0 0.0
      %1350 = vmatprep.subr.mxu0 0.0
      %1351 = vmatpush1.msra.mxu0 0.0
      %1352 = vmatprep.subr.mxu0 0.0
      %1353 = vmatpush1.msra.mxu0 0.0
      %1354 = vmatprep.subr.mxu0 0.0
      %1355 = vmatpush1.msra.mxu0 0.0
      %1356 = vmatprep.subr.mxu0 0.0
      %1357 = vmatpush1.msra.mxu0 %v341
      %1358 = vmatprep.subr.mxu0 0.0
      %1359 = vmatpush1.msra.mxu0 %v340
      %1360 = vmatprep.subr.mxu0 0.0
      %1361 = vmatpush1.msra.mxu0 %v339
      %1362 = vmatprep.subr.mxu0 0.0
      %1363 = vmatpush1.msra.mxu0 %v338
      %1364 = vmatprep.subr.mxu0 0.0
      %1365 = vmatpush1.msra.mxu0 %v337
      %1366 = vmatprep.subr.mxu0 0.0
      %1367 = vmatpush1.msra.mxu0 %v336
      %1368 = vmatprep.subr.mxu0 0.0
      %1369 = vmatpush1.msra.mxu0 %v335
      %1370 = vmatprep.subr.mxu0 0.0
      %1371 = vmatpush1.msra.mxu0 %v334
      %1372 = vmatprep.subr.mxu0 0.0
      %1373 = vmatpush1.msra.mxu0 %v333
      %1374 = vmatprep.subr.mxu0 0.0
      %1375 = vmatpush1.msra.mxu0 %v332
      %1376 = vmatprep.subr.mxu0 0.0
      %1377 = vmatpush1.msra.mxu0 %v331
      %1378 = vmatprep.subr.mxu0 0.0
      %1379 = vmatpush1.msra.mxu0 %v330
      %1380 = vmatprep.subr.mxu0 0.0
      %1381 = vmatpush2.msra.mxu0 0.0
      %1382 = vmatprep.subr.mxu0 0.0
      %1383 = vmatpush2.msra.mxu0 0.0
      %1384 = vmatprep.subr.mxu0 0.0
      %1385 = vmatpush2.msra.mxu0 0.0
      %1386 = vmatprep.subr.mxu0 0.0
      %1387 = vmatpush2.msra.mxu0 0.0
      %1388 = vmatprep.subr.mxu0 0.0
      %1389 = vmatpush2.msra.mxu0 0.0
      %1390 = vmatprep.subr.mxu0 0.0
      %1391 = vmatpush2.msra.mxu0 0.0
      %1392 = vmatprep.subr.mxu0 0.0
      %1393 = vmatpush2.msra.mxu0 0.0
      %1394 = vmatprep.subr.mxu0 0.0
      %1395 = vmatpush2.msra.mxu0 0.0
      %1396 = vmatprep.subr.mxu0 0.0
      %1397 = vmatpush2.msra.mxu0 0.0
      %1398 = vmatprep.subr.mxu0 0.0
      %1399 = vmatpush2.msra.mxu0 0.0
      %1400 = vmatprep.subr.mxu0 0.0
      %1401 = vmatpush2.msra.mxu0 0.0
      %1402 = vmatprep.subr.mxu0 0.0
      %1403 = vmatpush2.msra.mxu0 0.0
      %1404 = vmatprep.subr.mxu0 0.0
      %1405 = vmatpush2.msra.mxu0 0.0
      %1406 = vmatprep.subr.mxu0 0.0
      %1407 = vmatpush2.msra.mxu0 0.0
      %1408 = vmatprep.subr.mxu0 0.0
      %1409 = vmatpush2.msra.mxu0 0.0
      %1410 = vmatprep.subr.mxu0 0.0
      %1411 = vmatpush2.msra.mxu0 0.0
      %1412 = vmatprep.mubr.f32.mxu0 0.0
      %1413 = vmatmul.mubr.f32.gmra.mxu0 %v752
      %v1414 = vpop.f32.mrf.mxu0
      %v1415 = vadd.f32 0.0, %v1414
      %v1416 = vpop.f32.mrf.mxu0
      %1417 = vmatprep.mubr.f32.mxu0 0.0
      %1418 = vmatmul.mubr.f32.gmra.mxu0 %v755
      %v1419 = vpop.f32.mrf.mxu0
      %v1420 = vadd.f32 0.0, %v1419
      %v1421 = vpop.f32.mrf.mxu0
      %1422 = vmatprep.mubr.f32.mxu0 0.0
      %1423 = vmatmul.mubr.f32.gmra.mxu0 %v758
      %v1424 = vpop.f32.mrf.mxu0
      %v1425 = vadd.f32 0.0, %v1424
      %v1426 = vpop.f32.mrf.mxu0
      %1427 = vmatprep.mubr.f32.mxu0 0.0
      %1428 = vmatmul.mubr.f32.gmra.mxu0 %v761
      %v1429 = vpop.f32.mrf.mxu0
      %v1430 = vadd.f32 0.0, %v1429
      %v1431 = vpop.f32.mrf.mxu0
      %1432 = vmatprep.mubr.f32.mxu0 0.0
      %1433 = vmatmul.mubr.f32.gmra.mxu0 %v764
      %v1434 = vpop.f32.mrf.mxu0
      %v1435 = vadd.f32 0.0, %v1434
      %v1436 = vpop.f32.mrf.mxu0
      %1437 = vmatprep.mubr.f32.mxu0 0.0
      %1438 = vmatmul.mubr.f32.gmra.mxu0 %v767
      %v1439 = vpop.f32.mrf.mxu0
      %v1440 = vadd.f32 0.0, %v1439
      %v1441 = vpop.f32.mrf.mxu0
      %1442 = vmatprep.mubr.f32.mxu0 0.0
      %1443 = vmatmul.mubr.f32.gmra.mxu0 %v770
      %v1444 = vpop.f32.mrf.mxu0
      %v1445 = vadd.f32 0.0, %v1444
      %v1446 = vpop.f32.mrf.mxu0
      %1447 = vmatprep.mubr.f32.mxu0 0.0
      %1448 = vmatmul.mubr.f32.gmra.mxu0 %v773
      %v1449 = vpop.f32.mrf.mxu0
      %v1450 = vadd.f32 0.0, %v1449
      %v1451 = vpop.f32.mrf.mxu0
      %1452 = vdwg.mxu0
      %v1453 = vadd.f32 %v1340, %v1415
      %v1454 = vadd.f32 %v1341, %v1420
      %v1455 = vadd.f32 %v1342, %v1425
      %v1456 = vadd.f32 %v1343, %v1430
      %v1457 = vadd.f32 %v1344, %v1435
      %v1458 = vadd.f32 %v1345, %v1440
      %v1459 = vadd.f32 %v1346, %v1445
      %v1460 = vadd.f32 %v1347, %v1450
      %1461 = vmatprep.subr.mxu0 0.0
      %1462 = vmatpush1.msra.mxu0 0.0
      %1463 = vmatprep.subr.mxu0 0.0
      %1464 = vmatpush1.msra.mxu0 0.0
      %1465 = vmatprep.subr.mxu0 0.0
      %1466 = vmatpush1.msra.mxu0 0.0
      %1467 = vmatprep.subr.mxu0 0.0
      %1468 = vmatpush1.msra.mxu0 0.0
      %1469 = vmatprep.subr.mxu0 0.0
      %1470 = vmatpush1.msra.mxu0 %v354
      %1471 = vmatprep.subr.mxu0 0.0
      %1472 = vmatpush1.msra.mxu0 %v353
      %1473 = vmatprep.subr.mxu0 0.0
      %1474 = vmatpush1.msra.mxu0 %v352
      %1475 = vmatprep.subr.mxu0 0.0
      %1476 = vmatpush1.msra.mxu0 %v351
      %1477 = vmatprep.subr.mxu0 0.0
      %1478 = vmatpush1.msra.mxu0 %v350
      %1479 = vmatprep.subr.mxu0 0.0
      %1480 = vmatpush1.msra.mxu0 %v349
      %1481 = vmatprep.subr.mxu0 0.0
      %1482 = vmatpush1.msra.mxu0 %v348
      %1483 = vmatprep.subr.mxu0 0.0
      %1484 = vmatpush1.msra.mxu0 %v347
      %1485 = vmatprep.subr.mxu0 0.0
      %1486 = vmatpush1.msra.mxu0 %v346
      %1487 = vmatprep.subr.mxu0 0.0
      %1488 = vmatpush1.msra.mxu0 %v345
      %1489 = vmatprep.subr.mxu0 0.0
      %1490 = vmatpush1.msra.mxu0 %v344
      %1491 = vmatprep.subr.mxu0 0.0
      %1492 = vmatpush1.msra.mxu0 %v343
      %1493 = vmatprep.subr.mxu0 0.0
      %1494 = vmatpush2.msra.mxu0 0.0
      %1495 = vmatprep.subr.mxu0 0.0
      %1496 = vmatpush2.msra.mxu0 0.0
      %1497 = vmatprep.subr.mxu0 0.0
      %1498 = vmatpush2.msra.mxu0 0.0
      %1499 = vmatprep.subr.mxu0 0.0
      %1500 = vmatpush2.msra.mxu0 0.0
      %1501 = vmatprep.subr.mxu0 0.0
      %1502 = vmatpush2.msra.mxu0 0.0
      %1503 = vmatprep.subr.mxu0 0.0
      %1504 = vmatpush2.msra.mxu0 0.0
      %1505 = vmatprep.subr.mxu0 0.0
      %1506 = vmatpush2.msra.mxu0 0.0
      %1507 = vmatprep.subr.mxu0 0.0
      %1508 = vmatpush2.msra.mxu0 0.0
      %1509 = vmatprep.subr.mxu0 0.0
      %1510 = vmatpush2.msra.mxu0 0.0
      %1511 = vmatprep.subr.mxu0 0.0
      %1512 = vmatpush2.msra.mxu0 0.0
      %1513 = vmatprep.subr.mxu0 0.0
      %1514 = vmatpush2.msra.mxu0 0.0
      %1515 = vmatprep.subr.mxu0 0.0
      %1516 = vmatpush2.msra.mxu0 0.0
      %1517 = vmatprep.subr.mxu0 0.0
      %1518 = vmatpush2.msra.mxu0 0.0
      %1519 = vmatprep.subr.mxu0 0.0
      %1520 = vmatpush2.msra.mxu0 0.0
      %1521 = vmatprep.subr.mxu0 0.0
      %1522 = vmatpush2.msra.mxu0 0.0
      %1523 = vmatprep.subr.mxu0 0.0
      %1524 = vmatpush2.msra.mxu0 0.0
      %1525 = vmatprep.mubr.f32.mxu0 0.0
      %1526 = vmatmul.mubr.f32.gmra.mxu0 %v889
      %v1527 = vpop.f32.mrf.mxu0
      %v1528 = vadd.f32 0.0, %v1527
      %v1529 = vpop.f32.mrf.mxu0
      %1530 = vmatprep.mubr.f32.mxu0 0.0
      %1531 = vmatmul.mubr.f32.gmra.mxu0 %v892
      %v1532 = vpop.f32.mrf.mxu0
      %v1533 = vadd.f32 0.0, %v1532
      %v1534 = vpop.f32.mrf.mxu0
      %1535 = vmatprep.mubr.f32.mxu0 0.0
      %1536 = vmatmul.mubr.f32.gmra.mxu0 %v895
      %v1537 = vpop.f32.mrf.mxu0
      %v1538 = vadd.f32 0.0, %v1537
      %v1539 = vpop.f32.mrf.mxu0
      %1540 = vmatprep.mubr.f32.mxu0 0.0
      %1541 = vmatmul.mubr.f32.gmra.mxu0 %v898
      %v1542 = vpop.f32.mrf.mxu0
      %v1543 = vadd.f32 0.0, %v1542
      %v1544 = vpop.f32.mrf.mxu0
      %1545 = vmatprep.mubr.f32.mxu0 0.0
      %1546 = vmatmul.mubr.f32.gmra.mxu0 %v901
      %v1547 = vpop.f32.mrf.mxu0
      %v1548 = vadd.f32 0.0, %v1547
      %v1549 = vpop.f32.mrf.mxu0
      %1550 = vmatprep.mubr.f32.mxu0 0.0
      %1551 = vmatmul.mubr.f32.gmra.mxu0 %v904
      %v1552 = vpop.f32.mrf.mxu0
      %v1553 = vadd.f32 0.0, %v1552
      %v1554 = vpop.f32.mrf.mxu0
      %1555 = vmatprep.mubr.f32.mxu0 0.0
      %1556 = vmatmul.mubr.f32.gmra.mxu0 %v907
      %v1557 = vpop.f32.mrf.mxu0
      %v1558 = vadd.f32 0.0, %v1557
      %v1559 = vpop.f32.mrf.mxu0
      %1560 = vmatprep.mubr.f32.mxu0 0.0
      %1561 = vmatmul.mubr.f32.gmra.mxu0 %v910
      %v1562 = vpop.f32.mrf.mxu0
      %v1563 = vadd.f32 0.0, %v1562
      %v1564 = vpop.f32.mrf.mxu0
      %1565 = vdwg.mxu0
      %v1566 = vadd.f32 %v1453, %v1528
      %v1567 = vadd.f32 %v1454, %v1533
      %v1568 = vadd.f32 %v1455, %v1538
      %v1569 = vadd.f32 %v1456, %v1543
      %v1570 = vadd.f32 %v1457, %v1548
      %v1571 = vadd.f32 %v1458, %v1553
      %v1572 = vadd.f32 %v1459, %v1558
      %v1573 = vadd.f32 %v1460, %v1563
      %v1574 = vmax.f32 %v1017, %v1566
      %v1575 = vmax.f32 %v1018, %v1567
      %v1576 = vmax.f32 %v1019, %v1568
      %v1577 = vmax.f32 %v1020, %v1569
      %v1578 = vmax.f32 %v1021, %v1570
      %v1579 = vmax.f32 %v1022, %v1571
      %v1580 = vmax.f32 %v1023, %v1572
      %v1581 = vmax.f32 %v1024, %v1573
      %1582 = vmatprep.subr.mxu0 0.0
      %1583 = vmatpush1.msra.mxu0 0.0
      %1584 = vmatprep.subr.mxu0 0.0
      %1585 = vmatpush1.msra.mxu0 0.0
      %1586 = vmatprep.subr.mxu0 0.0
      %1587 = vmatpush1.msra.mxu0 0.0
      %1588 = vmatprep.subr.mxu0 0.0
      %1589 = vmatpush1.msra.mxu0 0.0
      %1590 = vmatprep.subr.mxu0 0.0
      %1591 = vmatpush1.msra.mxu0 %v250
      %1592 = vmatprep.subr.mxu0 0.0
      %1593 = vmatpush1.msra.mxu0 %v249
      %1594 = vmatprep.subr.mxu0 0.0
      %1595 = vmatpush1.msra.mxu0 %v248
      %1596 = vmatprep.subr.mxu0 0.0
      %1597 = vmatpush1.msra.mxu0 %v247
      %1598 = vmatprep.subr.mxu0 0.0
      %1599 = vmatpush1.msra.mxu0 %v246
      %1600 = vmatprep.subr.mxu0 0.0
      %1601 = vmatpush1.msra.mxu0 %v245
      %1602 = vmatprep.subr.mxu0 0.0
      %1603 = vmatpush1.msra.mxu0 %v244
      %1604 = vmatprep.subr.mxu0 0.0
      %1605 = vmatpush1.msra.mxu0 %v243
      %1606 = vmatprep.subr.mxu0 0.0
      %1607 = vmatpush1.msra.mxu0 %v242
      %1608 = vmatprep.subr.mxu0 0.0
      %1609 = vmatpush1.msra.mxu0 %v241
      %1610 = vmatprep.subr.mxu0 0.0
      %1611 = vmatpush1.msra.mxu0 %v240
      %1612 = vmatprep.subr.mxu0 0.0
      %1613 = vmatpush1.msra.mxu0 %v239
      %1614 = vmatprep.subr.mxu0 0.0
      %1615 = vmatpush2.msra.mxu0 0.0
      %1616 = vmatprep.subr.mxu0 0.0
      %1617 = vmatpush2.msra.mxu0 0.0
      %1618 = vmatprep.subr.mxu0 0.0
      %1619 = vmatpush2.msra.mxu0 0.0
      %1620 = vmatprep.subr.mxu0 0.0
      %1621 = vmatpush2.msra.mxu0 0.0
      %1622 = vmatprep.subr.mxu0 0.0
      %1623 = vmatpush2.msra.mxu0 0.0
      %1624 = vmatprep.subr.mxu0 0.0
      %1625 = vmatpush2.msra.mxu0 0.0
      %1626 = vmatprep.subr.mxu0 0.0
      %1627 = vmatpush2.msra.mxu0 0.0
      %1628 = vmatprep.subr.mxu0 0.0
      %1629 = vmatpush2.msra.mxu0 0.0
      %1630 = vmatprep.subr.mxu0 0.0
      %1631 = vmatpush2.msra.mxu0 0.0
      %1632 = vmatprep.subr.mxu0 0.0
      %1633 = vmatpush2.msra.mxu0 0.0
      %1634 = vmatprep.subr.mxu0 0.0
      %1635 = vmatpush2.msra.mxu0 0.0
      %1636 = vmatprep.subr.mxu0 0.0
      %1637 = vmatpush2.msra.mxu0 0.0
      %1638 = vmatprep.subr.mxu0 0.0
      %1639 = vmatpush2.msra.mxu0 0.0
      %1640 = vmatprep.subr.mxu0 0.0
      %1641 = vmatpush2.msra.mxu0 0.0
      %1642 = vmatprep.subr.mxu0 0.0
      %1643 = vmatpush2.msra.mxu0 0.0
      %1644 = vmatprep.subr.mxu0 0.0
      %1645 = vmatpush2.msra.mxu0 0.0
      %1646 = vmatprep.mubr.f32.mxu0 0.0
      %1647 = vmatmul.mubr.f32.gmra.mxu0 %v615
      %v1648 = vpop.f32.mrf.mxu0
      %v1649 = vadd.f32 0.0, %v1648
      %v1650 = vpop.f32.mrf.mxu0
      %1651 = vmatprep.mubr.f32.mxu0 0.0
      %1652 = vmatmul.mubr.f32.gmra.mxu0 %v618
      %v1653 = vpop.f32.mrf.mxu0
      %v1654 = vadd.f32 0.0, %v1653
      %v1655 = vpop.f32.mrf.mxu0
      %1656 = vmatprep.mubr.f32.mxu0 0.0
      %1657 = vmatmul.mubr.f32.gmra.mxu0 %v621
      %v1658 = vpop.f32.mrf.mxu0
      %v1659 = vadd.f32 0.0, %v1658
      %v1660 = vpop.f32.mrf.mxu0
      %1661 = vmatprep.mubr.f32.mxu0 0.0
      %1662 = vmatmul.mubr.f32.gmra.mxu0 %v624
      %v1663 = vpop.f32.mrf.mxu0
      %v1664 = vadd.f32 0.0, %v1663
      %v1665 = vpop.f32.mrf.mxu0
      %1666 = vmatprep.mubr.f32.mxu0 0.0
      %1667 = vmatmul.mubr.f32.gmra.mxu0 %v627
      %v1668 = vpop.f32.mrf.mxu0
      %v1669 = vadd.f32 0.0, %v1668
      %v1670 = vpop.f32.mrf.mxu0
      %1671 = vmatprep.mubr.f32.mxu0 0.0
      %1672 = vmatmul.mubr.f32.gmra.mxu0 %v630
      %v1673 = vpop.f32.mrf.mxu0
      %v1674 = vadd.f32 0.0, %v1673
      %v1675 = vpop.f32.mrf.mxu0
      %1676 = vmatprep.mubr.f32.mxu0 0.0
      %1677 = vmatmul.mubr.f32.gmra.mxu0 %v633
      %v1678 = vpop.f32.mrf.mxu0
      %v1679 = vadd.f32 0.0, %v1678
      %v1680 = vpop.f32.mrf.mxu0
      %1681 = vmatprep.mubr.f32.mxu0 0.0
      %1682 = vmatmul.mubr.f32.gmra.mxu0 %v636
      %v1683 = vpop.f32.mrf.mxu0
      %v1684 = vadd.f32 0.0, %v1683
      %v1685 = vpop.f32.mrf.mxu0
      %1686 = vdwg.mxu0
      %1687 = vmatprep.subr.mxu0 0.0
      %1688 = vmatpush1.msra.mxu0 0.0
      %1689 = vmatprep.subr.mxu0 0.0
      %1690 = vmatpush1.msra.mxu0 0.0
      %1691 = vmatprep.subr.mxu0 0.0
      %1692 = vmatpush1.msra.mxu0 0.0
      %1693 = vmatprep.subr.mxu0 0.0
      %1694 = vmatpush1.msra.mxu0 0.0
      %1695 = vmatprep.subr.mxu0 0.0
      %1696 = vmatpush1.msra.mxu0 %v237
      %1697 = vmatprep.subr.mxu0 0.0
      %1698 = vmatpush1.msra.mxu0 %v236
      %1699 = vmatprep.subr.mxu0 0.0
      %1700 = vmatpush1.msra.mxu0 %v235
      %1701 = vmatprep.subr.mxu0 0.0
      %1702 = vmatpush1.msra.mxu0 %v234
      %1703 = vmatprep.subr.mxu0 0.0
      %1704 = vmatpush1.msra.mxu0 %v233
      %1705 = vmatprep.subr.mxu0 0.0
      %1706 = vmatpush1.msra.mxu0 %v232
      %1707 = vmatprep.subr.mxu0 0.0
      %1708 = vmatpush1.msra.mxu0 %v231
      %1709 = vmatprep.subr.mxu0 0.0
      %1710 = vmatpush1.msra.mxu0 %v230
      %1711 = vmatprep.subr.mxu0 0.0
      %1712 = vmatpush1.msra.mxu0 %v229
      %1713 = vmatprep.subr.mxu0 0.0
      %1714 = vmatpush1.msra.mxu0 %v228
      %1715 = vmatprep.subr.mxu0 0.0
      %1716 = vmatpush1.msra.mxu0 %v227
      %1717 = vmatprep.subr.mxu0 0.0
      %1718 = vmatpush1.msra.mxu0 %v226
      %1719 = vmatprep.subr.mxu0 0.0
      %1720 = vmatpush2.msra.mxu0 0.0
      %1721 = vmatprep.subr.mxu0 0.0
      %1722 = vmatpush2.msra.mxu0 0.0
      %1723 = vmatprep.subr.mxu0 0.0
      %1724 = vmatpush2.msra.mxu0 0.0
      %1725 = vmatprep.subr.mxu0 0.0
      %1726 = vmatpush2.msra.mxu0 0.0
      %1727 = vmatprep.subr.mxu0 0.0
      %1728 = vmatpush2.msra.mxu0 0.0
      %1729 = vmatprep.subr.mxu0 0.0
      %1730 = vmatpush2.msra.mxu0 0.0
      %1731 = vmatprep.subr.mxu0 0.0
      %1732 = vmatpush2.msra.mxu0 0.0
      %1733 = vmatprep.subr.mxu0 0.0
      %1734 = vmatpush2.msra.mxu0 0.0
      %1735 = vmatprep.subr.mxu0 0.0
      %1736 = vmatpush2.msra.mxu0 0.0
      %1737 = vmatprep.subr.mxu0 0.0
      %1738 = vmatpush2.msra.mxu0 0.0
      %1739 = vmatprep.subr.mxu0 0.0
      %1740 = vmatpush2.msra.mxu0 0.0
      %1741 = vmatprep.subr.mxu0 0.0
      %1742 = vmatpush2.msra.mxu0 0.0
      %1743 = vmatprep.subr.mxu0 0.0
      %1744 = vmatpush2.msra.mxu0 0.0
      %1745 = vmatprep.subr.mxu0 0.0
      %1746 = vmatpush2.msra.mxu0 0.0
      %1747 = vmatprep.subr.mxu0 0.0
      %1748 = vmatpush2.msra.mxu0 0.0
      %1749 = vmatprep.subr.mxu0 0.0
      %1750 = vmatpush2.msra.mxu0 0.0
      %1751 = vmatprep.mubr.f32.mxu0 0.0
      %1752 = vmatmul.mubr.f32.gmra.mxu0 %v357
      %v1753 = vpop.f32.mrf.mxu0
      %v1754 = vadd.f32 %v1649, %v1753
      %v1755 = vpop.f32.mrf.mxu0
      %1756 = vmatprep.mubr.f32.mxu0 0.0
      %1757 = vmatmul.mubr.f32.gmra.mxu0 %v360
      %v1758 = vpop.f32.mrf.mxu0
      %v1759 = vadd.f32 %v1654, %v1758
      %v1760 = vpop.f32.mrf.mxu0
      %1761 = vmatprep.mubr.f32.mxu0 0.0
      %1762 = vmatmul.mubr.f32.gmra.mxu0 %v363
      %v1763 = vpop.f32.mrf.mxu0
      %v1764 = vadd.f32 %v1659, %v1763
      %v1765 = vpop.f32.mrf.mxu0
      %1766 = vmatprep.mubr.f32.mxu0 0.0
      %1767 = vmatmul.mubr.f32.gmra.mxu0 %v366
      %v1768 = vpop.f32.mrf.mxu0
      %v1769 = vadd.f32 %v1664, %v1768
      %v1770 = vpop.f32.mrf.mxu0
      %1771 = vmatprep.mubr.f32.mxu0 0.0
      %1772 = vmatmul.mubr.f32.gmra.mxu0 %v369
      %v1773 = vpop.f32.mrf.mxu0
      %v1774 = vadd.f32 %v1669, %v1773
      %v1775 = vpop.f32.mrf.mxu0
      %1776 = vmatprep.mubr.f32.mxu0 0.0
      %1777 = vmatmul.mubr.f32.gmra.mxu0 %v372
      %v1778 = vpop.f32.mrf.mxu0
      %v1779 = vadd.f32 %v1674, %v1778
      %v1780 = vpop.f32.mrf.mxu0
      %1781 = vmatprep.mubr.f32.mxu0 0.0
      %1782 = vmatmul.mubr.f32.gmra.mxu0 %v375
      %v1783 = vpop.f32.mrf.mxu0
      %v1784 = vadd.f32 %v1679, %v1783
      %v1785 = vpop.f32.mrf.mxu0
      %1786 = vmatprep.mubr.f32.mxu0 0.0
      %1787 = vmatmul.mubr.f32.gmra.mxu0 %v378
      %v1788 = vpop.f32.mrf.mxu0
      %v1789 = vadd.f32 %v1684, %v1788
      %v1790 = vpop.f32.mrf.mxu0
      %1791 = vdwg.mxu0
      %1792 = vmatprep.subr.mxu0 0.0
      %1793 = vmatpush1.msra.mxu0 0.0
      %1794 = vmatprep.subr.mxu0 0.0
      %1795 = vmatpush1.msra.mxu0 0.0
      %1796 = vmatprep.subr.mxu0 0.0
      %1797 = vmatpush1.msra.mxu0 0.0
      %1798 = vmatprep.subr.mxu0 0.0
      %1799 = vmatpush1.msra.mxu0 0.0
      %1800 = vmatprep.subr.mxu0 0.0
      %1801 = vmatpush1.msra.mxu0 %v263
      %1802 = vmatprep.subr.mxu0 0.0
      %1803 = vmatpush1.msra.mxu0 %v262
      %1804 = vmatprep.subr.mxu0 0.0
      %1805 = vmatpush1.msra.mxu0 %v261
      %1806 = vmatprep.subr.mxu0 0.0
      %1807 = vmatpush1.msra.mxu0 %v260
      %1808 = vmatprep.subr.mxu0 0.0
      %1809 = vmatpush1.msra.mxu0 %v259
      %1810 = vmatprep.subr.mxu0 0.0
      %1811 = vmatpush1.msra.mxu0 %v258
      %1812 = vmatprep.subr.mxu0 0.0
      %1813 = vmatpush1.msra.mxu0 %v257
      %1814 = vmatprep.subr.mxu0 0.0
      %1815 = vmatpush1.msra.mxu0 %v256
      %1816 = vmatprep.subr.mxu0 0.0
      %1817 = vmatpush1.msra.mxu0 %v255
      %1818 = vmatprep.subr.mxu0 0.0
      %1819 = vmatpush1.msra.mxu0 %v254
      %1820 = vmatprep.subr.mxu0 0.0
      %1821 = vmatpush1.msra.mxu0 %v253
      %1822 = vmatprep.subr.mxu0 0.0
      %1823 = vmatpush1.msra.mxu0 %v252
      %1824 = vmatprep.subr.mxu0 0.0
      %1825 = vmatpush2.msra.mxu0 0.0
      %1826 = vmatprep.subr.mxu0 0.0
      %1827 = vmatpush2.msra.mxu0 0.0
      %1828 = vmatprep.subr.mxu0 0.0
      %1829 = vmatpush2.msra.mxu0 0.0
      %1830 = vmatprep.subr.mxu0 0.0
      %1831 = vmatpush2.msra.mxu0 0.0
      %1832 = vmatprep.subr.mxu0 0.0
      %1833 = vmatpush2.msra.mxu0 0.0
      %1834 = vmatprep.subr.mxu0 0.0
      %1835 = vmatpush2.msra.mxu0 0.0
      %1836 = vmatprep.subr.mxu0 0.0
      %1837 = vmatpush2.msra.mxu0 0.0
      %1838 = vmatprep.subr.mxu0 0.0
      %1839 = vmatpush2.msra.mxu0 0.0
      %1840 = vmatprep.subr.mxu0 0.0
      %1841 = vmatpush2.msra.mxu0 0.0
      %1842 = vmatprep.subr.mxu0 0.0
      %1843 = vmatpush2.msra.mxu0 0.0
      %1844 = vmatprep.subr.mxu0 0.0
      %1845 = vmatpush2.msra.mxu0 0.0
      %1846 = vmatprep.subr.mxu0 0.0
      %1847 = vmatpush2.msra.mxu0 0.0
      %1848 = vmatprep.subr.mxu0 0.0
      %1849 = vmatpush2.msra.mxu0 0.0
      %1850 = vmatprep.subr.mxu0 0.0
      %1851 = vmatpush2.msra.mxu0 0.0
      %1852 = vmatprep.subr.mxu0 0.0
      %1853 = vmatpush2.msra.mxu0 0.0
      %1854 = vmatprep.subr.mxu0 0.0
      %1855 = vmatpush2.msra.mxu0 0.0
      %1856 = vmatprep.mubr.f32.mxu0 0.0
      %1857 = vmatmul.mubr.f32.gmra.mxu0 %v752
      %v1858 = vpop.f32.mrf.mxu0
      %v1859 = vadd.f32 0.0, %v1858
      %v1860 = vpop.f32.mrf.mxu0
      %1861 = vmatprep.mubr.f32.mxu0 0.0
      %1862 = vmatmul.mubr.f32.gmra.mxu0 %v755
      %v1863 = vpop.f32.mrf.mxu0
      %v1864 = vadd.f32 0.0, %v1863
      %v1865 = vpop.f32.mrf.mxu0
      %1866 = vmatprep.mubr.f32.mxu0 0.0
      %1867 = vmatmul.mubr.f32.gmra.mxu0 %v758
      %v1868 = vpop.f32.mrf.mxu0
      %v1869 = vadd.f32 0.0, %v1868
      %v1870 = vpop.f32.mrf.mxu0
      %1871 = vmatprep.mubr.f32.mxu0 0.0
      %1872 = vmatmul.mubr.f32.gmra.mxu0 %v761
      %v1873 = vpop.f32.mrf.mxu0
      %v1874 = vadd.f32 0.0, %v1873
      %v1875 = vpop.f32.mrf.mxu0
      %1876 = vmatprep.mubr.f32.mxu0 0.0
      %1877 = vmatmul.mubr.f32.gmra.mxu0 %v764
      %v1878 = vpop.f32.mrf.mxu0
      %v1879 = vadd.f32 0.0, %v1878
      %v1880 = vpop.f32.mrf.mxu0
      %1881 = vmatprep.mubr.f32.mxu0 0.0
      %1882 = vmatmul.mubr.f32.gmra.mxu0 %v767
      %v1883 = vpop.f32.mrf.mxu0
      %v1884 = vadd.f32 0.0, %v1883
      %v1885 = vpop.f32.mrf.mxu0
      %1886 = vmatprep.mubr.f32.mxu0 0.0
      %1887 = vmatmul.mubr.f32.gmra.mxu0 %v770
      %v1888 = vpop.f32.mrf.mxu0
      %v1889 = vadd.f32 0.0, %v1888
      %v1890 = vpop.f32.mrf.mxu0
      %1891 = vmatprep.mubr.f32.mxu0 0.0
      %1892 = vmatmul.mubr.f32.gmra.mxu0 %v773
      %v1893 = vpop.f32.mrf.mxu0
      %v1894 = vadd.f32 0.0, %v1893
      %v1895 = vpop.f32.mrf.mxu0
      %1896 = vdwg.mxu0
      %v1897 = vadd.f32 %v1754, %v1859
      %v1898 = vadd.f32 %v1759, %v1864
      %v1899 = vadd.f32 %v1764, %v1869
      %v1900 = vadd.f32 %v1769, %v1874
      %v1901 = vadd.f32 %v1774, %v1879
      %v1902 = vadd.f32 %v1779, %v1884
      %v1903 = vadd.f32 %v1784, %v1889
      %v1904 = vadd.f32 %v1789, %v1894
      %1905 = vmatprep.subr.mxu0 0.0
      %1906 = vmatpush1.msra.mxu0 0.0
      %1907 = vmatprep.subr.mxu0 0.0
      %1908 = vmatpush1.msra.mxu0 0.0
      %1909 = vmatprep.subr.mxu0 0.0
      %1910 = vmatpush1.msra.mxu0 0.0
      %1911 = vmatprep.subr.mxu0 0.0
      %1912 = vmatpush1.msra.mxu0 0.0
      %1913 = vmatprep.subr.mxu0 0.0
      %1914 = vmatpush1.msra.mxu0 %v276
      %1915 = vmatprep.subr.mxu0 0.0
      %1916 = vmatpush1.msra.mxu0 %v275
      %1917 = vmatprep.subr.mxu0 0.0
      %1918 = vmatpush1.msra.mxu0 %v274
      %1919 = vmatprep.subr.mxu0 0.0
      %1920 = vmatpush1.msra.mxu0 %v273
      %1921 = vmatprep.subr.mxu0 0.0
      %1922 = vmatpush1.msra.mxu0 %v272
      %1923 = vmatprep.subr.mxu0 0.0
      %1924 = vmatpush1.msra.mxu0 %v271
      %1925 = vmatprep.subr.mxu0 0.0
      %1926 = vmatpush1.msra.mxu0 %v270
      %1927 = vmatprep.subr.mxu0 0.0
      %1928 = vmatpush1.msra.mxu0 %v269
      %1929 = vmatprep.subr.mxu0 0.0
      %1930 = vmatpush1.msra.mxu0 %v268
      %1931 = vmatprep.subr.mxu0 0.0
      %1932 = vmatpush1.msra.mxu0 %v267
      %1933 = vmatprep.subr.mxu0 0.0
      %1934 = vmatpush1.msra.mxu0 %v266
      %1935 = vmatprep.subr.mxu0 0.0
      %1936 = vmatpush1.msra.mxu0 %v265
      %1937 = vmatprep.subr.mxu0 0.0
      %1938 = vmatpush2.msra.mxu0 0.0
      %1939 = vmatprep.subr.mxu0 0.0
      %1940 = vmatpush2.msra.mxu0 0.0
      %1941 = vmatprep.subr.mxu0 0.0
      %1942 = vmatpush2.msra.mxu0 0.0
      %1943 = vmatprep.subr.mxu0 0.0
      %1944 = vmatpush2.msra.mxu0 0.0
      %1945 = vmatprep.subr.mxu0 0.0
      %1946 = vmatpush2.msra.mxu0 0.0
      %1947 = vmatprep.subr.mxu0 0.0
      %1948 = vmatpush2.msra.mxu0 0.0
      %1949 = vmatprep.subr.mxu0 0.0
      %1950 = vmatpush2.msra.mxu0 0.0
      %1951 = vmatprep.subr.mxu0 0.0
      %1952 = vmatpush2.msra.mxu0 0.0
      %1953 = vmatprep.subr.mxu0 0.0
      %1954 = vmatpush2.msra.mxu0 0.0
      %1955 = vmatprep.subr.mxu0 0.0
      %1956 = vmatpush2.msra.mxu0 0.0
      %1957 = vmatprep.subr.mxu0 0.0
      %1958 = vmatpush2.msra.mxu0 0.0
      %1959 = vmatprep.subr.mxu0 0.0
      %1960 = vmatpush2.msra.mxu0 0.0
      %1961 = vmatprep.subr.mxu0 0.0
      %1962 = vmatpush2.msra.mxu0 0.0
      %1963 = vmatprep.subr.mxu0 0.0
      %1964 = vmatpush2.msra.mxu0 0.0
      %1965 = vmatprep.subr.mxu0 0.0
      %1966 = vmatpush2.msra.mxu0 0.0
      %1967 = vmatprep.subr.mxu0 0.0
      %1968 = vmatpush2.msra.mxu0 0.0
      %1969 = vmatprep.mubr.f32.mxu0 0.0
      %1970 = vmatmul.mubr.f32.gmra.mxu0 %v889
      %v1971 = vpop.f32.mrf.mxu0
      %v1972 = vadd.f32 0.0, %v1971
      %v1973 = vpop.f32.mrf.mxu0
      %1974 = vmatprep.mubr.f32.mxu0 0.0
      %1975 = vmatmul.mubr.f32.gmra.mxu0 %v892
      %v1976 = vpop.f32.mrf.mxu0
      %v1977 = vadd.f32 0.0, %v1976
      %v1978 = vpop.f32.mrf.mxu0
      %1979 = vmatprep.mubr.f32.mxu0 0.0
      %1980 = vmatmul.mubr.f32.gmra.mxu0 %v895
      %v1981 = vpop.f32.mrf.mxu0
      %v1982 = vadd.f32 0.0, %v1981
      %v1983 = vpop.f32.mrf.mxu0
      %1984 = vmatprep.mubr.f32.mxu0 0.0
      %1985 = vmatmul.mubr.f32.gmra.mxu0 %v898
      %v1986 = vpop.f32.mrf.mxu0
      %v1987 = vadd.f32 0.0, %v1986
      %v1988 = vpop.f32.mrf.mxu0
      %1989 = vmatprep.mubr.f32.mxu0 0.0
      %1990 = vmatmul.mubr.f32.gmra.mxu0 %v901
      %v1991 = vpop.f32.mrf.mxu0
      %v1992 = vadd.f32 0.0, %v1991
      %v1993 = vpop.f32.mrf.mxu0
      %1994 = vmatprep.mubr.f32.mxu0 0.0
      %1995 = vmatmul.mubr.f32.gmra.mxu0 %v904
      %v1996 = vpop.f32.mrf.mxu0
      %v1997 = vadd.f32 0.0, %v1996
      %v1998 = vpop.f32.mrf.mxu0
      %1999 = vmatprep.mubr.f32.mxu0 0.0
      %2000 = vmatmul.mubr.f32.gmra.mxu0 %v907
      %v2001 = vpop.f32.mrf.mxu0
      %v2002 = vadd.f32 0.0, %v2001
      %v2003 = vpop.f32.mrf.mxu0
      %2004 = vmatprep.mubr.f32.mxu0 0.0
      %2005 = vmatmul.mubr.f32.gmra.mxu0 %v910
      %v2006 = vpop.f32.mrf.mxu0
      %v2007 = vadd.f32 0.0, %v2006
      %v2008 = vpop.f32.mrf.mxu0
      %2009 = vdwg.mxu0
      %v2010 = vadd.f32 %v1897, %v1972
      %v2011 = vadd.f32 %v1898, %v1977
      %v2012 = vadd.f32 %v1899, %v1982
      %v2013 = vadd.f32 %v1900, %v1987
      %v2014 = vadd.f32 %v1901, %v1992
      %v2015 = vadd.f32 %v1902, %v1997
      %v2016 = vadd.f32 %v1903, %v2002
      %v2017 = vadd.f32 %v1904, %v2007
      %v2019 = vsel %vm355, %v218, 0
      %v2022 = vsel %vm355, %v219, 0
      %v2025 = vsel %vm355, %v220, 0
      %v2028 = vsel %vm355, %v221, 0
      %v2031 = vsel %vm355, %v222, 0
      %v2034 = vsel %vm355, %v223, 0
      %v2037 = vsel %vm355, %v224, 0
      %v2040 = vsel %vm355, %v225, 0
      %2042 = vmatprep.subr.mxu0 0.0
      %2043 = vmatpush1.msra.mxu0 0.0
      %2044 = vmatprep.subr.mxu0 0.0
      %2045 = vmatpush1.msra.mxu0 0.0
      %2046 = vmatprep.subr.mxu0 0.0
      %2047 = vmatpush1.msra.mxu0 0.0
      %2048 = vmatprep.subr.mxu0 0.0
      %2049 = vmatpush1.msra.mxu0 0.0
      %2050 = vmatprep.subr.mxu0 0.0
      %2051 = vmatpush1.msra.mxu0 %v289
      %2052 = vmatprep.subr.mxu0 0.0
      %2053 = vmatpush1.msra.mxu0 %v288
      %2054 = vmatprep.subr.mxu0 0.0
      %2055 = vmatpush1.msra.mxu0 %v287
      %2056 = vmatprep.subr.mxu0 0.0
      %2057 = vmatpush1.msra.mxu0 %v286
      %2058 = vmatprep.subr.mxu0 0.0
      %2059 = vmatpush1.msra.mxu0 %v285
      %2060 = vmatprep.subr.mxu0 0.0
      %2061 = vmatpush1.msra.mxu0 %v284
      %2062 = vmatprep.subr.mxu0 0.0
      %2063 = vmatpush1.msra.mxu0 %v283
      %2064 = vmatprep.subr.mxu0 0.0
      %2065 = vmatpush1.msra.mxu0 %v282
      %2066 = vmatprep.subr.mxu0 0.0
      %2067 = vmatpush1.msra.mxu0 %v281
      %2068 = vmatprep.subr.mxu0 0.0
      %2069 = vmatpush1.msra.mxu0 %v280
      %2070 = vmatprep.subr.mxu0 0.0
      %2071 = vmatpush1.msra.mxu0 %v279
      %2072 = vmatprep.subr.mxu0 0.0
      %2073 = vmatpush1.msra.mxu0 %v278
      %2074 = vmatprep.subr.mxu0 0.0
      %2075 = vmatpush2.msra.mxu0 0.0
      %2076 = vmatprep.subr.mxu0 0.0
      %2077 = vmatpush2.msra.mxu0 0.0
      %2078 = vmatprep.subr.mxu0 0.0
      %2079 = vmatpush2.msra.mxu0 0.0
      %2080 = vmatprep.subr.mxu0 0.0
      %2081 = vmatpush2.msra.mxu0 0.0
      %2082 = vmatprep.subr.mxu0 0.0
      %2083 = vmatpush2.msra.mxu0 0.0
      %2084 = vmatprep.subr.mxu0 0.0
      %2085 = vmatpush2.msra.mxu0 0.0
      %2086 = vmatprep.subr.mxu0 0.0
      %2087 = vmatpush2.msra.mxu0 0.0
      %2088 = vmatprep.subr.mxu0 0.0
      %2089 = vmatpush2.msra.mxu0 0.0
      %2090 = vmatprep.subr.mxu0 0.0
      %2091 = vmatpush2.msra.mxu0 0.0
      %2092 = vmatprep.subr.mxu0 0.0
      %2093 = vmatpush2.msra.mxu0 0.0
      %2094 = vmatprep.subr.mxu0 0.0
      %2095 = vmatpush2.msra.mxu0 0.0
      %2096 = vmatprep.subr.mxu0 0.0
      %2097 = vmatpush2.msra.mxu0 0.0
      %2098 = vmatprep.subr.mxu0 0.0
      %2099 = vmatpush2.msra.mxu0 0.0
      %2100 = vmatprep.subr.mxu0 0.0
      %2101 = vmatpush2.msra.mxu0 0.0
      %2102 = vmatprep.subr.mxu0 0.0
      %2103 = vmatpush2.msra.mxu0 0.0
      %2104 = vmatprep.subr.mxu0 0.0
      %2105 = vmatpush2.msra.mxu0 0.0
      %2106 = vmatprep.mubr.f32.mxu0 0.0
      %2107 = vmatmul.mubr.f32.gmra.mxu0 %v2019
      %v2108 = vpop.f32.mrf.mxu0
      %v2109 = vadd.f32 0.0, %v2108
      %v2110 = vpop.f32.mrf.mxu0
      %2111 = vmatprep.mubr.f32.mxu0 0.0
      %2112 = vmatmul.mubr.f32.gmra.mxu0 %v2022
      %v2113 = vpop.f32.mrf.mxu0
      %v2114 = vadd.f32 0.0, %v2113
      %v2115 = vpop.f32.mrf.mxu0
      %2116 = vmatprep.mubr.f32.mxu0 0.0
      %2117 = vmatmul.mubr.f32.gmra.mxu0 %v2025
      %v2118 = vpop.f32.mrf.mxu0
      %v2119 = vadd.f32 0.0, %v2118
      %v2120 = vpop.f32.mrf.mxu0
      %2121 = vmatprep.mubr.f32.mxu0 0.0
      %2122 = vmatmul.mubr.f32.gmra.mxu0 %v2028
      %v2123 = vpop.f32.mrf.mxu0
      %v2124 = vadd.f32 0.0, %v2123
      %v2125 = vpop.f32.mrf.mxu0
      %2126 = vmatprep.mubr.f32.mxu0 0.0
      %2127 = vmatmul.mubr.f32.gmra.mxu0 %v2031
      %v2128 = vpop.f32.mrf.mxu0
      %v2129 = vadd.f32 0.0, %v2128
      %v2130 = vpop.f32.mrf.mxu0
      %2131 = vmatprep.mubr.f32.mxu0 0.0
      %2132 = vmatmul.mubr.f32.gmra.mxu0 %v2034
      %v2133 = vpop.f32.mrf.mxu0
      %v2134 = vadd.f32 0.0, %v2133
      %v2135 = vpop.f32.mrf.mxu0
      %2136 = vmatprep.mubr.f32.mxu0 0.0
      %2137 = vmatmul.mubr.f32.gmra.mxu0 %v2037
      %v2138 = vpop.f32.mrf.mxu0
      %v2139 = vadd.f32 0.0, %v2138
      %v2140 = vpop.f32.mrf.mxu0
      %2141 = vmatprep.mubr.f32.mxu0 0.0
      %2142 = vmatmul.mubr.f32.gmra.mxu0 %v2040
      %v2143 = vpop.f32.mrf.mxu0
      %v2144 = vadd.f32 0.0, %v2143
      %v2145 = vpop.f32.mrf.mxu0
      %2146 = vdwg.mxu0
      %v2147 = vadd.f32 %v2010, %v2109
      %v2148 = vadd.f32 %v2011, %v2114
      %v2149 = vadd.f32 %v2012, %v2119
      %v2150 = vadd.f32 %v2013, %v2124
      %v2151 = vadd.f32 %v2014, %v2129
      %v2152 = vadd.f32 %v2015, %v2134
      %v2153 = vadd.f32 %v2016, %v2139
      %v2154 = vadd.f32 %v2017, %v2144
      %v2155 = vmax.f32 %v1574, %v2147
      %v2156 = vmax.f32 %v1575, %v2148
      %v2157 = vmax.f32 %v1576, %v2149
      %v2158 = vmax.f32 %v1577, %v2150
      %v2159 = vmax.f32 %v1578, %v2151
      %v2160 = vmax.f32 %v1579, %v2152
      %v2161 = vmax.f32 %v1580, %v2153
      %v2162 = vmax.f32 %v1581, %v2154
      %2163 = vmatprep.subr.mxu0 0.0
      %2164 = vmatpush1.msra.mxu0 0.0
      %2165 = vmatprep.subr.mxu0 0.0
      %2166 = vmatpush1.msra.mxu0 0.0
      %2167 = vmatprep.subr.mxu0 0.0
      %2168 = vmatpush1.msra.mxu0 0.0
      %2169 = vmatprep.subr.mxu0 0.0
      %2170 = vmatpush1.msra.mxu0 0.0
      %2171 = vmatprep.subr.mxu0 0.0
      %2172 = vmatpush1.msra.mxu0 %v315
      %2173 = vmatprep.subr.mxu0 0.0
      %2174 = vmatpush1.msra.mxu0 %v314
      %2175 = vmatprep.subr.mxu0 0.0
      %2176 = vmatpush1.msra.mxu0 %v313
      %2177 = vmatprep.subr.mxu0 0.0
      %2178 = vmatpush1.msra.mxu0 %v312
      %2179 = vmatprep.subr.mxu0 0.0
      %2180 = vmatpush1.msra.mxu0 %v311
      %2181 = vmatprep.subr.mxu0 0.0
      %2182 = vmatpush1.msra.mxu0 %v310
      %2183 = vmatprep.subr.mxu0 0.0
      %2184 = vmatpush1.msra.mxu0 %v309
      %2185 = vmatprep.subr.mxu0 0.0
      %2186 = vmatpush1.msra.mxu0 %v308
      %2187 = vmatprep.subr.mxu0 0.0
      %2188 = vmatpush1.msra.mxu0 %v307
      %2189 = vmatprep.subr.mxu0 0.0
      %2190 = vmatpush1.msra.mxu0 %v306
      %2191 = vmatprep.subr.mxu0 0.0
      %2192 = vmatpush1.msra.mxu0 %v305
      %2193 = vmatprep.subr.mxu0 0.0
      %2194 = vmatpush1.msra.mxu0 %v304
      %2195 = vmatprep.subr.mxu0 0.0
      %2196 = vmatpush2.msra.mxu0 0.0
      %2197 = vmatprep.subr.mxu0 0.0
      %2198 = vmatpush2.msra.mxu0 0.0
      %2199 = vmatprep.subr.mxu0 0.0
      %2200 = vmatpush2.msra.mxu0 0.0
      %2201 = vmatprep.subr.mxu0 0.0
      %2202 = vmatpush2.msra.mxu0 0.0
      %2203 = vmatprep.subr.mxu0 0.0
      %2204 = vmatpush2.msra.mxu0 0.0
      %2205 = vmatprep.subr.mxu0 0.0
      %2206 = vmatpush2.msra.mxu0 0.0
      %2207 = vmatprep.subr.mxu0 0.0
      %2208 = vmatpush2.msra.mxu0 0.0
      %2209 = vmatprep.subr.mxu0 0.0
      %2210 = vmatpush2.msra.mxu0 0.0
      %2211 = vmatprep.subr.mxu0 0.0
      %2212 = vmatpush2.msra.mxu0 0.0
      %2213 = vmatprep.subr.mxu0 0.0
      %2214 = vmatpush2.msra.mxu0 0.0
      %2215 = vmatprep.subr.mxu0 0.0
      %2216 = vmatpush2.msra.mxu0 0.0
      %2217 = vmatprep.subr.mxu0 0.0
      %2218 = vmatpush2.msra.mxu0 0.0
      %2219 = vmatprep.subr.mxu0 0.0
      %2220 = vmatpush2.msra.mxu0 0.0
      %2221 = vmatprep.subr.mxu0 0.0
      %2222 = vmatpush2.msra.mxu0 0.0
      %2223 = vmatprep.subr.mxu0 0.0
      %2224 = vmatpush2.msra.mxu0 0.0
      %2225 = vmatprep.subr.mxu0 0.0
      %2226 = vmatpush2.msra.mxu0 0.0
      %2227 = vmatprep.mubr.f32.mxu0 0.0
      %2228 = vmatmul.mubr.f32.gmra.mxu0 %v615
      %v2229 = vpop.f32.mrf.mxu0
      %v2230 = vadd.f32 0.0, %v2229
      %v2231 = vpop.f32.mrf.mxu0
      %2232 = vmatprep.mubr.f32.mxu0 0.0
      %2233 = vmatmul.mubr.f32.gmra.mxu0 %v618
      %v2234 = vpop.f32.mrf.mxu0
      %v2235 = vadd.f32 0.0, %v2234
      %v2236 = vpop.f32.mrf.mxu0
      %2237 = vmatprep.mubr.f32.mxu0 0.0
      %2238 = vmatmul.mubr.f32.gmra.mxu0 %v621
      %v2239 = vpop.f32.mrf.mxu0
      %v2240 = vadd.f32 0.0, %v2239
      %v2241 = vpop.f32.mrf.mxu0
      %2242 = vmatprep.mubr.f32.mxu0 0.0
      %2243 = vmatmul.mubr.f32.gmra.mxu0 %v624
      %v2244 = vpop.f32.mrf.mxu0
      %v2245 = vadd.f32 0.0, %v2244
      %v2246 = vpop.f32.mrf.mxu0
      %2247 = vmatprep.mubr.f32.mxu0 0.0
      %2248 = vmatmul.mubr.f32.gmra.mxu0 %v627
      %v2249 = vpop.f32.mrf.mxu0
      %v2250 = vadd.f32 0.0, %v2249
      %v2251 = vpop.f32.mrf.mxu0
      %2252 = vmatprep.mubr.f32.mxu0 0.0
      %2253 = vmatmul.mubr.f32.gmra.mxu0 %v630
      %v2254 = vpop.f32.mrf.mxu0
      %v2255 = vadd.f32 0.0, %v2254
      %v2256 = vpop.f32.mrf.mxu0
      %2257 = vmatprep.mubr.f32.mxu0 0.0
      %2258 = vmatmul.mubr.f32.gmra.mxu0 %v633
      %v2259 = vpop.f32.mrf.mxu0
      %v2260 = vadd.f32 0.0, %v2259
      %v2261 = vpop.f32.mrf.mxu0
      %2262 = vmatprep.mubr.f32.mxu0 0.0
      %2263 = vmatmul.mubr.f32.gmra.mxu0 %v636
      %v2264 = vpop.f32.mrf.mxu0
      %v2265 = vadd.f32 0.0, %v2264
      %v2266 = vpop.f32.mrf.mxu0
      %2267 = vdwg.mxu0
      %2268 = vmatprep.subr.mxu0 0.0
      %2269 = vmatpush1.msra.mxu0 0.0
      %2270 = vmatprep.subr.mxu0 0.0
      %2271 = vmatpush1.msra.mxu0 0.0
      %2272 = vmatprep.subr.mxu0 0.0
      %2273 = vmatpush1.msra.mxu0 0.0
      %2274 = vmatprep.subr.mxu0 0.0
      %2275 = vmatpush1.msra.mxu0 0.0
      %2276 = vmatprep.subr.mxu0 0.0
      %2277 = vmatpush1.msra.mxu0 %v302
      %2278 = vmatprep.subr.mxu0 0.0
      %2279 = vmatpush1.msra.mxu0 %v301
      %2280 = vmatprep.subr.mxu0 0.0
      %2281 = vmatpush1.msra.mxu0 %v300
      %2282 = vmatprep.subr.mxu0 0.0
      %2283 = vmatpush1.msra.mxu0 %v299
      %2284 = vmatprep.subr.mxu0 0.0
      %2285 = vmatpush1.msra.mxu0 %v298
      %2286 = vmatprep.subr.mxu0 0.0
      %2287 = vmatpush1.msra.mxu0 %v297
      %2288 = vmatprep.subr.mxu0 0.0
      %2289 = vmatpush1.msra.mxu0 %v296
      %2290 = vmatprep.subr.mxu0 0.0
      %2291 = vmatpush1.msra.mxu0 %v295
      %2292 = vmatprep.subr.mxu0 0.0
      %2293 = vmatpush1.msra.mxu0 %v294
      %2294 = vmatprep.subr.mxu0 0.0
      %2295 = vmatpush1.msra.mxu0 %v293
      %2296 = vmatprep.subr.mxu0 0.0
      %2297 = vmatpush1.msra.mxu0 %v292
      %2298 = vmatprep.subr.mxu0 0.0
      %2299 = vmatpush1.msra.mxu0 %v291
      %2300 = vmatprep.subr.mxu0 0.0
      %2301 = vmatpush2.msra.mxu0 0.0
      %2302 = vmatprep.subr.mxu0 0.0
      %2303 = vmatpush2.msra.mxu0 0.0
      %2304 = vmatprep.subr.mxu0 0.0
      %2305 = vmatpush2.msra.mxu0 0.0
      %2306 = vmatprep.subr.mxu0 0.0
      %2307 = vmatpush2.msra.mxu0 0.0
      %2308 = vmatprep.subr.mxu0 0.0
      %2309 = vmatpush2.msra.mxu0 0.0
      %2310 = vmatprep.subr.mxu0 0.0
      %2311 = vmatpush2.msra.mxu0 0.0
      %2312 = vmatprep.subr.mxu0 0.0
      %2313 = vmatpush2.msra.mxu0 0.0
      %2314 = vmatprep.subr.mxu0 0.0
      %2315 = vmatpush2.msra.mxu0 0.0
      %2316 = vmatprep.subr.mxu0 0.0
      %2317 = vmatpush2.msra.mxu0 0.0
      %2318 = vmatprep.subr.mxu0 0.0
      %2319 = vmatpush2.msra.mxu0 0.0
      %2320 = vmatprep.subr.mxu0 0.0
      %2321 = vmatpush2.msra.mxu0 0.0
      %2322 = vmatprep.subr.mxu0 0.0
      %2323 = vmatpush2.msra.mxu0 0.0
      %2324 = vmatprep.subr.mxu0 0.0
      %2325 = vmatpush2.msra.mxu0 0.0
      %2326 = vmatprep.subr.mxu0 0.0
      %2327 = vmatpush2.msra.mxu0 0.0
      %2328 = vmatprep.subr.mxu0 0.0
      %2329 = vmatpush2.msra.mxu0 0.0
      %2330 = vmatprep.subr.mxu0 0.0
      %2331 = vmatpush2.msra.mxu0 0.0
      %2332 = vmatprep.mubr.f32.mxu0 0.0
      %2333 = vmatmul.mubr.f32.gmra.mxu0 %v357
      %v2334 = vpop.f32.mrf.mxu0
      %v2335 = vadd.f32 %v2230, %v2334
      %v2336 = vpop.f32.mrf.mxu0
      %2337 = vmatprep.mubr.f32.mxu0 0.0
      %2338 = vmatmul.mubr.f32.gmra.mxu0 %v360
      %v2339 = vpop.f32.mrf.mxu0
      %v2340 = vadd.f32 %v2235, %v2339
      %v2341 = vpop.f32.mrf.mxu0
      %2342 = vmatprep.mubr.f32.mxu0 0.0
      %2343 = vmatmul.mubr.f32.gmra.mxu0 %v363
      %v2344 = vpop.f32.mrf.mxu0
      %v2345 = vadd.f32 %v2240, %v2344
      %v2346 = vpop.f32.mrf.mxu0
      %2347 = vmatprep.mubr.f32.mxu0 0.0
      %2348 = vmatmul.mubr.f32.gmra.mxu0 %v366
      %v2349 = vpop.f32.mrf.mxu0
      %v2350 = vadd.f32 %v2245, %v2349
      %v2351 = vpop.f32.mrf.mxu0
      %2352 = vmatprep.mubr.f32.mxu0 0.0
      %2353 = vmatmul.mubr.f32.gmra.mxu0 %v369
      %v2354 = vpop.f32.mrf.mxu0
      %v2355 = vadd.f32 %v2250, %v2354
      %v2356 = vpop.f32.mrf.mxu0
      %2357 = vmatprep.mubr.f32.mxu0 0.0
      %2358 = vmatmul.mubr.f32.gmra.mxu0 %v372
      %v2359 = vpop.f32.mrf.mxu0
      %v2360 = vadd.f32 %v2255, %v2359
      %v2361 = vpop.f32.mrf.mxu0
      %2362 = vmatprep.mubr.f32.mxu0 0.0
      %2363 = vmatmul.mubr.f32.gmra.mxu0 %v375
      %v2364 = vpop.f32.mrf.mxu0
      %v2365 = vadd.f32 %v2260, %v2364
      %v2366 = vpop.f32.mrf.mxu0
      %2367 = vmatprep.mubr.f32.mxu0 0.0
      %2368 = vmatmul.mubr.f32.gmra.mxu0 %v378
      %v2369 = vpop.f32.mrf.mxu0
      %v2370 = vadd.f32 %v2265, %v2369
      %v2371 = vpop.f32.mrf.mxu0
      %2372 = vdwg.mxu0
      %2373 = vmatprep.subr.mxu0 0.0
      %2374 = vmatpush1.msra.mxu0 0.0
      %2375 = vmatprep.subr.mxu0 0.0
      %2376 = vmatpush1.msra.mxu0 0.0
      %2377 = vmatprep.subr.mxu0 0.0
      %2378 = vmatpush1.msra.mxu0 0.0
      %2379 = vmatprep.subr.mxu0 0.0
      %2380 = vmatpush1.msra.mxu0 0.0
      %2381 = vmatprep.subr.mxu0 0.0
      %2382 = vmatpush1.msra.mxu0 %v328
      %2383 = vmatprep.subr.mxu0 0.0
      %2384 = vmatpush1.msra.mxu0 %v327
      %2385 = vmatprep.subr.mxu0 0.0
      %2386 = vmatpush1.msra.mxu0 %v326
      %2387 = vmatprep.subr.mxu0 0.0
      %2388 = vmatpush1.msra.mxu0 %v325
      %2389 = vmatprep.subr.mxu0 0.0
      %2390 = vmatpush1.msra.mxu0 %v324
      %2391 = vmatprep.subr.mxu0 0.0
      %2392 = vmatpush1.msra.mxu0 %v323
      %2393 = vmatprep.subr.mxu0 0.0
      %2394 = vmatpush1.msra.mxu0 %v322
      %2395 = vmatprep.subr.mxu0 0.0
      %2396 = vmatpush1.msra.mxu0 %v321
      %2397 = vmatprep.subr.mxu0 0.0
      %2398 = vmatpush1.msra.mxu0 %v320
      %2399 = vmatprep.subr.mxu0 0.0
      %2400 = vmatpush1.msra.mxu0 %v319
      %2401 = vmatprep.subr.mxu0 0.0
      %2402 = vmatpush1.msra.mxu0 %v318
      %2403 = vmatprep.subr.mxu0 0.0
      %2404 = vmatpush1.msra.mxu0 %v317
      %2405 = vmatprep.subr.mxu0 0.0
      %2406 = vmatpush2.msra.mxu0 0.0
      %2407 = vmatprep.subr.mxu0 0.0
      %2408 = vmatpush2.msra.mxu0 0.0
      %2409 = vmatprep.subr.mxu0 0.0
      %2410 = vmatpush2.msra.mxu0 0.0
      %2411 = vmatprep.subr.mxu0 0.0
      %2412 = vmatpush2.msra.mxu0 0.0
      %2413 = vmatprep.subr.mxu0 0.0
      %2414 = vmatpush2.msra.mxu0 0.0
      %2415 = vmatprep.subr.mxu0 0.0
      %2416 = vmatpush2.msra.mxu0 0.0
      %2417 = vmatprep.subr.mxu0 0.0
      %2418 = vmatpush2.msra.mxu0 0.0
      %2419 = vmatprep.subr.mxu0 0.0
      %2420 = vmatpush2.msra.mxu0 0.0
      %2421 = vmatprep.subr.mxu0 0.0
      %2422 = vmatpush2.msra.mxu0 0.0
      %2423 = vmatprep.subr.mxu0 0.0
      %2424 = vmatpush2.msra.mxu0 0.0
      %2425 = vmatprep.subr.mxu0 0.0
      %2426 = vmatpush2.msra.mxu0 0.0
      %2427 = vmatprep.subr.mxu0 0.0
      %2428 = vmatpush2.msra.mxu0 0.0
      %2429 = vmatprep.subr.mxu0 0.0
      %2430 = vmatpush2.msra.mxu0 0.0
      %2431 = vmatprep.subr.mxu0 0.0
      %2432 = vmatpush2.msra.mxu0 0.0
      %2433 = vmatprep.subr.mxu0 0.0
      %2434 = vmatpush2.msra.mxu0 0.0
      %2435 = vmatprep.subr.mxu0 0.0
      %2436 = vmatpush2.msra.mxu0 0.0
      %2437 = vmatprep.mubr.f32.mxu0 0.0
      %2438 = vmatmul.mubr.f32.gmra.mxu0 %v752
      %v2439 = vpop.f32.mrf.mxu0
      %v2440 = vadd.f32 0.0, %v2439
      %v2441 = vpop.f32.mrf.mxu0
      %2442 = vmatprep.mubr.f32.mxu0 0.0
      %2443 = vmatmul.mubr.f32.gmra.mxu0 %v755
      %v2444 = vpop.f32.mrf.mxu0
      %v2445 = vadd.f32 0.0, %v2444
      %v2446 = vpop.f32.mrf.mxu0
      %2447 = vmatprep.mubr.f32.mxu0 0.0
      %2448 = vmatmul.mubr.f32.gmra.mxu0 %v758
      %v2449 = vpop.f32.mrf.mxu0
      %v2450 = vadd.f32 0.0, %v2449
      %v2451 = vpop.f32.mrf.mxu0
      %2452 = vmatprep.mubr.f32.mxu0 0.0
      %2453 = vmatmul.mubr.f32.gmra.mxu0 %v761
      %v2454 = vpop.f32.mrf.mxu0
      %v2455 = vadd.f32 0.0, %v2454
      %v2456 = vpop.f32.mrf.mxu0
      %2457 = vmatprep.mubr.f32.mxu0 0.0
      %2458 = vmatmul.mubr.f32.gmra.mxu0 %v764
      %v2459 = vpop.f32.mrf.mxu0
      %v2460 = vadd.f32 0.0, %v2459
      %v2461 = vpop.f32.mrf.mxu0
      %2462 = vmatprep.mubr.f32.mxu0 0.0
      %2463 = vmatmul.mubr.f32.gmra.mxu0 %v767
      %v2464 = vpop.f32.mrf.mxu0
      %v2465 = vadd.f32 0.0, %v2464
      %v2466 = vpop.f32.mrf.mxu0
      %2467 = vmatprep.mubr.f32.mxu0 0.0
      %2468 = vmatmul.mubr.f32.gmra.mxu0 %v770
      %v2469 = vpop.f32.mrf.mxu0
      %v2470 = vadd.f32 0.0, %v2469
      %v2471 = vpop.f32.mrf.mxu0
      %2472 = vmatprep.mubr.f32.mxu0 0.0
      %2473 = vmatmul.mubr.f32.gmra.mxu0 %v773
      %v2474 = vpop.f32.mrf.mxu0
      %v2475 = vadd.f32 0.0, %v2474
      %v2476 = vpop.f32.mrf.mxu0
      %2477 = vdwg.mxu0
      %v2478 = vadd.f32 %v2335, %v2440
      %v2479 = vadd.f32 %v2340, %v2445
      %v2480 = vadd.f32 %v2345, %v2450
      %v2481 = vadd.f32 %v2350, %v2455
      %v2482 = vadd.f32 %v2355, %v2460
      %v2483 = vadd.f32 %v2360, %v2465
      %v2484 = vadd.f32 %v2365, %v2470
      %v2485 = vadd.f32 %v2370, %v2475
      %2486 = vmatprep.subr.mxu0 0.0
      %2487 = vmatpush1.msra.mxu0 0.0
      %2488 = vmatprep.subr.mxu0 0.0
      %2489 = vmatpush1.msra.mxu0 0.0
      %2490 = vmatprep.subr.mxu0 0.0
      %2491 = vmatpush1.msra.mxu0 0.0
      %2492 = vmatprep.subr.mxu0 0.0
      %2493 = vmatpush1.msra.mxu0 0.0
      %2494 = vmatprep.subr.mxu0 0.0
      %2495 = vmatpush1.msra.mxu0 %v341
      %2496 = vmatprep.subr.mxu0 0.0
      %2497 = vmatpush1.msra.mxu0 %v340
      %2498 = vmatprep.subr.mxu0 0.0
      %2499 = vmatpush1.msra.mxu0 %v339
      %2500 = vmatprep.subr.mxu0 0.0
      %2501 = vmatpush1.msra.mxu0 %v338
      %2502 = vmatprep.subr.mxu0 0.0
      %2503 = vmatpush1.msra.mxu0 %v337
      %2504 = vmatprep.subr.mxu0 0.0
      %2505 = vmatpush1.msra.mxu0 %v336
      %2506 = vmatprep.subr.mxu0 0.0
      %2507 = vmatpush1.msra.mxu0 %v335
      %2508 = vmatprep.subr.mxu0 0.0
      %2509 = vmatpush1.msra.mxu0 %v334
      %2510 = vmatprep.subr.mxu0 0.0
      %2511 = vmatpush1.msra.mxu0 %v333
      %2512 = vmatprep.subr.mxu0 0.0
      %2513 = vmatpush1.msra.mxu0 %v332
      %2514 = vmatprep.subr.mxu0 0.0
      %2515 = vmatpush1.msra.mxu0 %v331
      %2516 = vmatprep.subr.mxu0 0.0
      %2517 = vmatpush1.msra.mxu0 %v330
      %2518 = vmatprep.subr.mxu0 0.0
      %2519 = vmatpush2.msra.mxu0 0.0
      %2520 = vmatprep.subr.mxu0 0.0
      %2521 = vmatpush2.msra.mxu0 0.0
      %2522 = vmatprep.subr.mxu0 0.0
      %2523 = vmatpush2.msra.mxu0 0.0
      %2524 = vmatprep.subr.mxu0 0.0
      %2525 = vmatpush2.msra.mxu0 0.0
      %2526 = vmatprep.subr.mxu0 0.0
      %2527 = vmatpush2.msra.mxu0 0.0
      %2528 = vmatprep.subr.mxu0 0.0
      %2529 = vmatpush2.msra.mxu0 0.0
      %2530 = vmatprep.subr.mxu0 0.0
      %2531 = vmatpush2.msra.mxu0 0.0
      %2532 = vmatprep.subr.mxu0 0.0
      %2533 = vmatpush2.msra.mxu0 0.0
      %2534 = vmatprep.subr.mxu0 0.0
      %2535 = vmatpush2.msra.mxu0 0.0
      %2536 = vmatprep.subr.mxu0 0.0
      %2537 = vmatpush2.msra.mxu0 0.0
      %2538 = vmatprep.subr.mxu0 0.0
      %2539 = vmatpush2.msra.mxu0 0.0
      %2540 = vmatprep.subr.mxu0 0.0
      %2541 = vmatpush2.msra.mxu0 0.0
      %2542 = vmatprep.subr.mxu0 0.0
      %2543 = vmatpush2.msra.mxu0 0.0
      %2544 = vmatprep.subr.mxu0 0.0
      %2545 = vmatpush2.msra.mxu0 0.0
      %2546 = vmatprep.subr.mxu0 0.0
      %2547 = vmatpush2.msra.mxu0 0.0
      %2548 = vmatprep.subr.mxu0 0.0
      %2549 = vmatpush2.msra.mxu0 0.0
      %2550 = vmatprep.mubr.f32.mxu0 0.0
      %2551 = vmatmul.mubr.f32.gmra.mxu0 %v889
      %v2552 = vpop.f32.mrf.mxu0
      %v2553 = vadd.f32 0.0, %v2552
      %v2554 = vpop.f32.mrf.mxu0
      %2555 = vmatprep.mubr.f32.mxu0 0.0
      %2556 = vmatmul.mubr.f32.gmra.mxu0 %v892
      %v2557 = vpop.f32.mrf.mxu0
      %v2558 = vadd.f32 0.0, %v2557
      %v2559 = vpop.f32.mrf.mxu0
      %2560 = vmatprep.mubr.f32.mxu0 0.0
      %2561 = vmatmul.mubr.f32.gmra.mxu0 %v895
      %v2562 = vpop.f32.mrf.mxu0
      %v2563 = vadd.f32 0.0, %v2562
      %v2564 = vpop.f32.mrf.mxu0
      %2565 = vmatprep.mubr.f32.mxu0 0.0
      %2566 = vmatmul.mubr.f32.gmra.mxu0 %v898
      %v2567 = vpop.f32.mrf.mxu0
      %v2568 = vadd.f32 0.0, %v2567
      %v2569 = vpop.f32.mrf.mxu0
      %2570 = vmatprep.mubr.f32.mxu0 0.0
      %2571 = vmatmul.mubr.f32.gmra.mxu0 %v901
      %v2572 = vpop.f32.mrf.mxu0
      %v2573 = vadd.f32 0.0, %v2572
      %v2574 = vpop.f32.mrf.mxu0
      %2575 = vmatprep.mubr.f32.mxu0 0.0
      %2576 = vmatmul.mubr.f32.gmra.mxu0 %v904
      %v2577 = vpop.f32.mrf.mxu0
      %v2578 = vadd.f32 0.0, %v2577
      %v2579 = vpop.f32.mrf.mxu0
      %2580 = vmatprep.mubr.f32.mxu0 0.0
      %2581 = vmatmul.mubr.f32.gmra.mxu0 %v907
      %v2582 = vpop.f32.mrf.mxu0
      %v2583 = vadd.f32 0.0, %v2582
      %v2584 = vpop.f32.mrf.mxu0
      %2585 = vmatprep.mubr.f32.mxu0 0.0
      %2586 = vmatmul.mubr.f32.gmra.mxu0 %v910
      %v2587 = vpop.f32.mrf.mxu0
      %v2588 = vadd.f32 0.0, %v2587
      %v2589 = vpop.f32.mrf.mxu0
      %2590 = vdwg.mxu0
      %v2591 = vadd.f32 %v2478, %v2553
      %v2592 = vadd.f32 %v2479, %v2558
      %v2593 = vadd.f32 %v2480, %v2563
      %v2594 = vadd.f32 %v2481, %v2568
      %v2595 = vadd.f32 %v2482, %v2573
      %v2596 = vadd.f32 %v2483, %v2578
      %v2597 = vadd.f32 %v2484, %v2583
      %v2598 = vadd.f32 %v2485, %v2588
      %2599 = vmatprep.subr.mxu0 0.0
      %2600 = vmatpush1.msra.mxu0 0.0
      %2601 = vmatprep.subr.mxu0 0.0
      %2602 = vmatpush1.msra.mxu0 0.0
      %2603 = vmatprep.subr.mxu0 0.0
      %2604 = vmatpush1.msra.mxu0 0.0
      %2605 = vmatprep.subr.mxu0 0.0
      %2606 = vmatpush1.msra.mxu0 0.0
      %2607 = vmatprep.subr.mxu0 0.0
      %2608 = vmatpush1.msra.mxu0 %v354
      %2609 = vmatprep.subr.mxu0 0.0
      %2610 = vmatpush1.msra.mxu0 %v353
      %2611 = vmatprep.subr.mxu0 0.0
      %2612 = vmatpush1.msra.mxu0 %v352
      %2613 = vmatprep.subr.mxu0 0.0
      %2614 = vmatpush1.msra.mxu0 %v351
      %2615 = vmatprep.subr.mxu0 0.0
      %2616 = vmatpush1.msra.mxu0 %v350
      %2617 = vmatprep.subr.mxu0 0.0
      %2618 = vmatpush1.msra.mxu0 %v349
      %2619 = vmatprep.subr.mxu0 0.0
      %2620 = vmatpush1.msra.mxu0 %v348
      %2621 = vmatprep.subr.mxu0 0.0
      %2622 = vmatpush1.msra.mxu0 %v347
      %2623 = vmatprep.subr.mxu0 0.0
      %2624 = vmatpush1.msra.mxu0 %v346
      %2625 = vmatprep.subr.mxu0 0.0
      %2626 = vmatpush1.msra.mxu0 %v345
      %2627 = vmatprep.subr.mxu0 0.0
      %2628 = vmatpush1.msra.mxu0 %v344
      %2629 = vmatprep.subr.mxu0 0.0
      %2630 = vmatpush1.msra.mxu0 %v343
      %2631 = vmatprep.subr.mxu0 0.0
      %2632 = vmatpush2.msra.mxu0 0.0
      %2633 = vmatprep.subr.mxu0 0.0
      %2634 = vmatpush2.msra.mxu0 0.0
      %2635 = vmatprep.subr.mxu0 0.0
      %2636 = vmatpush2.msra.mxu0 0.0
      %2637 = vmatprep.subr.mxu0 0.0
      %2638 = vmatpush2.msra.mxu0 0.0
      %2639 = vmatprep.subr.mxu0 0.0
      %2640 = vmatpush2.msra.mxu0 0.0
      %2641 = vmatprep.subr.mxu0 0.0
      %2642 = vmatpush2.msra.mxu0 0.0
      %2643 = vmatprep.subr.mxu0 0.0
      %2644 = vmatpush2.msra.mxu0 0.0
      %2645 = vmatprep.subr.mxu0 0.0
      %2646 = vmatpush2.msra.mxu0 0.0
      %2647 = vmatprep.subr.mxu0 0.0
      %2648 = vmatpush2.msra.mxu0 0.0
      %2649 = vmatprep.subr.mxu0 0.0
      %2650 = vmatpush2.msra.mxu0 0.0
      %2651 = vmatprep.subr.mxu0 0.0
      %2652 = vmatpush2.msra.mxu0 0.0
      %2653 = vmatprep.subr.mxu0 0.0
      %2654 = vmatpush2.msra.mxu0 0.0
      %2655 = vmatprep.subr.mxu0 0.0
      %2656 = vmatpush2.msra.mxu0 0.0
      %2657 = vmatprep.subr.mxu0 0.0
      %2658 = vmatpush2.msra.mxu0 0.0
      %2659 = vmatprep.subr.mxu0 0.0
      %2660 = vmatpush2.msra.mxu0 0.0
      %2661 = vmatprep.subr.mxu0 0.0
      %2662 = vmatpush2.msra.mxu0 0.0
      %2663 = vmatprep.mubr.f32.mxu0 0.0
      %2664 = vmatmul.mubr.f32.gmra.mxu0 %v2019
      %v2665 = vpop.f32.mrf.mxu0
      %v2666 = vadd.f32 0.0, %v2665
      %v2667 = vpop.f32.mrf.mxu0
      %2668 = vmatprep.mubr.f32.mxu0 0.0
      %2669 = vmatmul.mubr.f32.gmra.mxu0 %v2022
      %v2670 = vpop.f32.mrf.mxu0
      %v2671 = vadd.f32 0.0, %v2670
      %v2672 = vpop.f32.mrf.mxu0
      %2673 = vmatprep.mubr.f32.mxu0 0.0
      %2674 = vmatmul.mubr.f32.gmra.mxu0 %v2025
      %v2675 = vpop.f32.mrf.mxu0
      %v2676 = vadd.f32 0.0, %v2675
      %v2677 = vpop.f32.mrf.mxu0
      %2678 = vmatprep.mubr.f32.mxu0 0.0
      %2679 = vmatmul.mubr.f32.gmra.mxu0 %v2028
      %v2680 = vpop.f32.mrf.mxu0
      %v2681 = vadd.f32 0.0, %v2680
      %v2682 = vpop.f32.mrf.mxu0
      %2683 = vmatprep.mubr.f32.mxu0 0.0
      %2684 = vmatmul.mubr.f32.gmra.mxu0 %v2031
      %v2685 = vpop.f32.mrf.mxu0
      %v2686 = vadd.f32 0.0, %v2685
      %v2687 = vpop.f32.mrf.mxu0
      %2688 = vmatprep.mubr.f32.mxu0 0.0
      %2689 = vmatmul.mubr.f32.gmra.mxu0 %v2034
      %v2690 = vpop.f32.mrf.mxu0
      %v2691 = vadd.f32 0.0, %v2690
      %v2692 = vpop.f32.mrf.mxu0
      %2693 = vmatprep.mubr.f32.mxu0 0.0
      %2694 = vmatmul.mubr.f32.gmra.mxu0 %v2037
      %v2695 = vpop.f32.mrf.mxu0
      %v2696 = vadd.f32 0.0, %v2695
      %v2697 = vpop.f32.mrf.mxu0
      %2698 = vmatprep.mubr.f32.mxu0 0.0
      %2699 = vmatmul.mubr.f32.gmra.mxu0 %v2040
      %v2700 = vpop.f32.mrf.mxu0
      %v2701 = vadd.f32 0.0, %v2700
      %v2702 = vpop.f32.mrf.mxu0
      %2703 = vdwg.mxu0
      %v2704 = vadd.f32 %v2591, %v2666
      %v2705 = vadd.f32 %v2592, %v2671
      %v2706 = vadd.f32 %v2593, %v2676
      %v2707 = vadd.f32 %v2594, %v2681
      %v2708 = vadd.f32 %v2595, %v2686
      %v2709 = vadd.f32 %v2596, %v2691
      %v2710 = vadd.f32 %v2597, %v2696
      %v2711 = vadd.f32 %v2598, %v2701
      %v2712 = vmax.f32 %v2155, %v2704
      %v2713 = vmax.f32 %v2156, %v2705
      %v2714 = vmax.f32 %v2157, %v2706
      %v2715 = vmax.f32 %v2158, %v2707
      %v2716 = vmax.f32 %v2159, %v2708
      %v2717 = vmax.f32 %v2160, %v2709
      %v2718 = vmax.f32 %v2161, %v2710
      %v2719 = vmax.f32 %v2162, %v2711
      %v2720 = vld [vmem:[%s2] sm:$0x1]
      %v2722 = vlaneseq
      %v2723 = vshrl.u32 %v2722, 7
      %v2724 = vsub.s32 0, %v2723
      %v2725 = vrot.slane %v2720, %v2724
      %v2727 = vadd.f32 %v2712, %v2725
      %v2728 = vadd.f32 %v2713, %v2725
      %v2729 = vadd.f32 %v2714, %v2725
      %v2730 = vadd.f32 %v2715, %v2725
      %v2731 = vadd.f32 %v2716, %v2725
      %v2732 = vadd.f32 %v2717, %v2725
      %v2733 = vadd.f32 %v2718, %v2725
      %v2734 = vadd.f32 %v2719, %v2725
      %v2735 = vmax.f32 %v2727, 0.0
      %v2736 = vmax.f32 %v2728, 0.0
      %v2737 = vmax.f32 %v2729, 0.0
      %v2738 = vmax.f32 %v2730, 0.0
      %v2739 = vmax.f32 %v2731, 0.0
      %v2740 = vmax.f32 %v2732, 0.0
      %v2741 = vmax.f32 %v2733, 0.0
      %v2742 = vmax.f32 %v2734, 0.0
      %vm2743 = vcmask 687104
      %2744 = vst.msk [vmem:[%s175] sm:$0xff] %vm2743, %v2735
      %2745 = vst.msk [vmem:[%s175 + $0x8] sm:$0xff] %vm2743, %v2736
      %2746 = vst.msk [vmem:[%s175 + $0x10] sm:$0xff] %vm2743, %v2737
      %2747 = vst.msk [vmem:[%s175 + $0x18] sm:$0xff] %vm2743, %v2738
      %2748 = vst.msk [vmem:[%s175 + $0x20] sm:$0xff] %vm2743, %v2739
      %2749 = vst.msk [vmem:[%s175 + $0x28] sm:$0xff] %vm2743, %v2740
      %2750 = vst.msk [vmem:[%s175 + $0x30] sm:$0xff] %vm2743, %v2741
      %2751 = vst.msk [vmem:[%s175 + $0x38] sm:$0xff] %vm2743, %v2742
      %s2752 = smul.u32 8, %s14
      %p2753 = scmp.lt.s32.totalorder %s2752, 15
      %s2754 = scalar_select %p2753, %s2752, 15
      %s2755 = smul.addr %s2754, 8
      %s2756 = scalar_lea.vmem %s3, %s2755
      // Predicated region
      $region33: #{cnn_forward.3} parent=31 // pred_check
        %p2757 = pneg %p100
      $region34: #{cnn_forward.3} parent=31 // pred_check_branch
        %2759 = sbr.rel (%p2757) target = $region36
      $region35: #{cnn_forward.3} parent=31 // pred_region
        %s2760 = smul.u32 8, %s14
      $region36: #{cnn_forward.3} parent=31 // pred_fallthru
        _
    $region32: #{cnn_forward.3} parent=5 // pred_fallthru
      _
    %p2761 = scmp.le.s32.totalorder 2, %s9
    // Predicated region
    $region37: #{cnn_forward.3} parent=5 // pred_check
      %p2762 = pneg %p2761
    $region38: #{cnn_forward.3} parent=5 // pred_check_branch
      %2764 = sbr.rel (%p2762) target = $region40
    $region39: #{cnn_forward.3} parent=5 // pred_region
      %s2765 = ssub.s32 %s9, 2
      // Predicated region
      $region41: #{cnn_forward.3} parent=39 // pred_check
        %p2766 = pneg %p106
      $region42: #{cnn_forward.3} parent=39 // pred_check_branch
        %2768 = sbr.rel (%p2766) target = $region44
      $region43: #{cnn_forward.3} parent=39 // pred_region
        %s2769 = smul.u32 8, %s15
        %p2770 = scmp.lt.s32.totalorder %s2769, 15
        %s2771 = scalar_select %p2770, %s2769, 15
        %s2772 = smul.addr %s2771, 8
        %s2773 = scalar_lea.vmem %s3, %s2772
      $region44: #{cnn_forward.3} parent=39 // pred_fallthru
        _
    $region40: #{cnn_forward.3} parent=5 // pred_fallthru
      _
  $region6: #{cnn_forward.3} parent=0 // loop_footer
    %s13 = sadd.s32 1, %s9
  $region7: #{cnn_forward.3} parent=0 // loop_footer_branch
    %8 = sbr.rel target = $region3
  $region8: #{cnn_forward.3} parent=0 // loop_exit
    _

// kernel: cnn_forward.5
$region0: #{cnn_forward.5}
  #allocation0 [shape = 'u32[]', space=smem, size = 0x4, offset = 0x4, fixed_abs, tag = 'smem constant byte address 0x4 - core index']
  #allocation1 [shape = 'u32[144,128]{1,0:T(1,128)}', space=vmem, size = 0x12000, scoped, tag = 'internal scratch']
  %s0 = inlined_call_operand.vmem [shape: f32[8,640], index: 0, kind: input, shape index: {}]
  %s1 = inlined_call_operand.vmem [shape: f32[640,120], index: 1, kind: input, shape index: {}]
  %s2 = inlined_call_operand.vmem [shape: f32[1,120], index: 2, kind: input, shape index: {}]
  %s3 = inlined_call_operand.vmem [shape: f32[120,84], index: 3, kind: input, shape index: {}]
  %s4 = inlined_call_operand.vmem [shape: f32[1,84], index: 4, kind: input, shape index: {}]
  %s5 = inlined_call_operand.vmem [shape: f32[84,10], index: 5, kind: input, shape index: {}]
  %s6 = inlined_call_operand.vmem [shape: f32[1,10], index: 6, kind: input, shape index: {}]
  %s7 = inlined_call_operand.vmem [shape: f32[8,128], index: 7, kind: output, shape index: {}]
  %s8 = sld [smem:[#allocation0]]
  $region38: #{cnn_forward.5} parent=0
    _
  %s10 = ssub.s32 1, %s8
  %s11 = scalar_select 0, %s10, %s8
  // Predicated region
  $region2: #{cnn_forward.5} parent=0 // pred_check
    _
  $region3: #{cnn_forward.5} parent=0 // pred_check_branch
    %13 = sbr.rel (0) target = $region5
  $region4: #{cnn_forward.5} parent=0 // pred_region
    _
  $region5: #{cnn_forward.5} parent=0 // pred_fallthru
    _
  // Predicated region
  $region6: #{cnn_forward.5} parent=0 // pred_check
    _
  $region7: #{cnn_forward.5} parent=0 // pred_check_branch
    %15 = sbr.rel (0) target = $region9
  $region8: #{cnn_forward.5} parent=0 // pred_region
    _
  $region9: #{cnn_forward.5} parent=0 // pred_fallthru
    _
  // Predicated region
  $region10: #{cnn_forward.5} parent=0 // pred_check
    _
  $region11: #{cnn_forward.5} parent=0 // pred_check_branch
    %17 = sbr.rel (0) target = $region13
  $region12: #{cnn_forward.5} parent=0 // pred_region
    _
  $region13: #{cnn_forward.5} parent=0 // pred_fallthru
    _
  // Predicated region
  $region14: #{cnn_forward.5} parent=0 // pred_check
    _
  $region15: #{cnn_forward.5} parent=0 // pred_check_branch
    %19 = sbr.rel (0) target = $region17
  $region16: #{cnn_forward.5} parent=0 // pred_region
    _
  $region17: #{cnn_forward.5} parent=0 // pred_fallthru
    _
  // Predicated region
  $region18: #{cnn_forward.5} parent=0 // pred_check
    _
  $region19: #{cnn_forward.5} parent=0 // pred_check_branch
    %21 = sbr.rel (0) target = $region21
  $region20: #{cnn_forward.5} parent=0 // pred_region
    _
  $region21: #{cnn_forward.5} parent=0 // pred_fallthru
    _
  // Predicated region
  $region22: #{cnn_forward.5} parent=0 // pred_check
    _
  $region23: #{cnn_forward.5} parent=0 // pred_check_branch
    %23 = sbr.rel (0) target = $region25
  $region24: #{cnn_forward.5} parent=0 // pred_region
    _
  $region25: #{cnn_forward.5} parent=0 // pred_fallthru
    _
  // Predicated region
  $region26: #{cnn_forward.5} parent=0 // pred_check
    _
  $region27: #{cnn_forward.5} parent=0 // pred_check_branch
    %25 = sbr.rel (0) target = $region29
  $region28: #{cnn_forward.5} parent=0 // pred_region
    _
  $region29: #{cnn_forward.5} parent=0 // pred_fallthru
    _
  %v26 = vld [vmem:[%s0] sm:$0xff]
  %v27 = vld [vmem:[%s0 + $0x8] sm:$0xff]
  %v28 = vld [vmem:[%s0 + $0x10] sm:$0xff]
  %v29 = vld [vmem:[%s0 + $0x18] sm:$0xff]
  %v30 = vld [vmem:[%s0 + $0x20] sm:$0xff]
  %v31 = vld [vmem:[%s1] sm:$0xff]
  %v32 = vld [vmem:[%s1 + $0x8] sm:$0xff]
  %v33 = vld [vmem:[%s1 + $0x10] sm:$0xff]
  %v34 = vld [vmem:[%s1 + $0x18] sm:$0xff]
  %v35 = vld [vmem:[%s1 + $0x20] sm:$0xff]
  %v36 = vld [vmem:[%s1 + $0x28] sm:$0xff]
  %v37 = vld [vmem:[%s1 + $0x30] sm:$0xff]
  %v38 = vld [vmem:[%s1 + $0x38] sm:$0xff]
  %v39 = vld [vmem:[%s1 + $0x40] sm:$0xff]
  %v40 = vld [vmem:[%s1 + $0x48] sm:$0xff]
  %v41 = vld [vmem:[%s1 + $0x50] sm:$0xff]
  %v42 = vld [vmem:[%s1 + $0x58] sm:$0xff]
  %v43 = vld [vmem:[%s1 + $0x60] sm:$0xff]
  %v44 = vld [vmem:[%s1 + $0x68] sm:$0xff]
  %v45 = vld [vmem:[%s1 + $0x70] sm:$0xff]
  %v46 = vld [vmem:[%s1 + $0x78] sm:$0xff]
  %v47 = vld [vmem:[%s1 + $0x80] sm:$0xff]
  %v48 = vld [vmem:[%s1 + $0x88] sm:$0xff]
  %v49 = vld [vmem:[%s1 + $0x90] sm:$0xff]
  %v50 = vld [vmem:[%s1 + $0x98] sm:$0xff]
  %v51 = vld [vmem:[%s1 + $0xa0] sm:$0xff]
  %v52 = vld [vmem:[%s1 + $0xa8] sm:$0xff]
  %v53 = vld [vmem:[%s1 + $0xb0] sm:$0xff]
  %v54 = vld [vmem:[%s1 + $0xb8] sm:$0xff]
  %v55 = vld [vmem:[%s1 + $0xc0] sm:$0xff]
  %v56 = vld [vmem:[%s1 + $0xc8] sm:$0xff]
  %v57 = vld [vmem:[%s1 + $0xd0] sm:$0xff]
  %v58 = vld [vmem:[%s1 + $0xd8] sm:$0xff]
  %v59 = vld [vmem:[%s1 + $0xe0] sm:$0xff]
  %v60 = vld [vmem:[%s1 + $0xe8] sm:$0xff]
  %v61 = vld [vmem:[%s1 + $0xf0] sm:$0xff]
  %v62 = vld [vmem:[%s1 + $0xf8] sm:$0xff]
  %v63 = vld [vmem:[%s1 + $0x100] sm:$0xff]
  %v64 = vld [vmem:[%s1 + $0x108] sm:$0xff]
  %v65 = vld [vmem:[%s1 + $0x110] sm:$0xff]
  %v66 = vld [vmem:[%s1 + $0x118] sm:$0xff]
  %v67 = vld [vmem:[%s1 + $0x120] sm:$0xff]
  %v68 = vld [vmem:[%s1 + $0x128] sm:$0xff]
  %v69 = vld [vmem:[%s1 + $0x130] sm:$0xff]
  %v70 = vld [vmem:[%s1 + $0x138] sm:$0xff]
  %v71 = vld [vmem:[%s1 + $0x140] sm:$0xff]
  %v72 = vld [vmem:[%s1 + $0x148] sm:$0xff]
  %v73 = vld [vmem:[%s1 + $0x150] sm:$0xff]
  %v74 = vld [vmem:[%s1 + $0x158] sm:$0xff]
  %v75 = vld [vmem:[%s1 + $0x160] sm:$0xff]
  %v76 = vld [vmem:[%s1 + $0x168] sm:$0xff]
  %v77 = vld [vmem:[%s1 + $0x170] sm:$0xff]
  %v78 = vld [vmem:[%s1 + $0x178] sm:$0xff]
  %v79 = vld [vmem:[%s1 + $0x180] sm:$0xff]
  %v80 = vld [vmem:[%s1 + $0x188] sm:$0xff]
  %v81 = vld [vmem:[%s1 + $0x190] sm:$0xff]
  %v82 = vld [vmem:[%s1 + $0x198] sm:$0xff]
  %v83 = vld [vmem:[%s1 + $0x1a0] sm:$0xff]
  %v84 = vld [vmem:[%s1 + $0x1a8] sm:$0xff]
  %v85 = vld [vmem:[%s1 + $0x1b0] sm:$0xff]
  %v86 = vld [vmem:[%s1 + $0x1b8] sm:$0xff]
  %v87 = vld [vmem:[%s1 + $0x1c0] sm:$0xff]
  %v88 = vld [vmem:[%s1 + $0x1c8] sm:$0xff]
  %v89 = vld [vmem:[%s1 + $0x1d0] sm:$0xff]
  %v90 = vld [vmem:[%s1 + $0x1d8] sm:$0xff]
  %v91 = vld [vmem:[%s1 + $0x1e0] sm:$0xff]
  %v92 = vld [vmem:[%s1 + $0x1e8] sm:$0xff]
  %v93 = vld [vmem:[%s1 + $0x1f0] sm:$0xff]
  %v94 = vld [vmem:[%s1 + $0x1f8] sm:$0xff]
  %v95 = vld [vmem:[%s1 + $0x200] sm:$0xff]
  %v96 = vld [vmem:[%s1 + $0x208] sm:$0xff]
  %v97 = vld [vmem:[%s1 + $0x210] sm:$0xff]
  %v98 = vld [vmem:[%s1 + $0x218] sm:$0xff]
  %v99 = vld [vmem:[%s1 + $0x220] sm:$0xff]
  %v100 = vld [vmem:[%s1 + $0x228] sm:$0xff]
  %v101 = vld [vmem:[%s1 + $0x230] sm:$0xff]
  %v102 = vld [vmem:[%s1 + $0x238] sm:$0xff]
  %v103 = vld [vmem:[%s1 + $0x240] sm:$0xff]
  %v104 = vld [vmem:[%s1 + $0x248] sm:$0xff]
  %v105 = vld [vmem:[%s1 + $0x250] sm:$0xff]
  %v106 = vld [vmem:[%s1 + $0x258] sm:$0xff]
  %v107 = vld [vmem:[%s1 + $0x260] sm:$0xff]
  %v108 = vld [vmem:[%s1 + $0x268] sm:$0xff]
  %v109 = vld [vmem:[%s1 + $0x270] sm:$0xff]
  %v110 = vld [vmem:[%s1 + $0x278] sm:$0xff]
  %v111 = vld [vmem:[%s2] sm:$0x1]
  %v113 = vlaneseq
  %v114 = vshrl.u32 %v113, 7
  %v115 = vsub.s32 0, %v114
  %v116 = vrot.slane %v111, %v115
  %118 = vmatprep.subr.mxu0 0.0
  %119 = vmatpush1.msra.mxu0 %v46
  %120 = vmatprep.subr.mxu0 0.0
  %121 = vmatpush1.msra.mxu0 %v45
  %122 = vmatprep.subr.mxu0 0.0
  %123 = vmatpush1.msra.mxu0 %v44
  %124 = vmatprep.subr.mxu0 0.0
  %125 = vmatpush1.msra.mxu0 %v43
  %126 = vmatprep.subr.mxu0 0.0
  %127 = vmatpush1.msra.mxu0 %v42
  %128 = vmatprep.subr.mxu0 0.0
  %129 = vmatpush1.msra.mxu0 %v41
  %130 = vmatprep.subr.mxu0 0.0
  %131 = vmatpush1.msra.mxu0 %v40
  %132 = vmatprep.subr.mxu0 0.0
  %133 = vmatpush1.msra.mxu0 %v39
  %134 = vmatprep.subr.mxu0 0.0
  %135 = vmatpush1.msra.mxu0 %v38
  %136 = vmatprep.subr.mxu0 0.0
  %137 = vmatpush1.msra.mxu0 %v37
  %138 = vmatprep.subr.mxu0 0.0
  %139 = vmatpush1.msra.mxu0 %v36
  %140 = vmatprep.subr.mxu0 0.0
  %141 = vmatpush1.msra.mxu0 %v35
  %142 = vmatprep.subr.mxu0 0.0
  %143 = vmatpush1.msra.mxu0 %v34
  %144 = vmatprep.subr.mxu0 0.0
  %145 = vmatpush1.msra.mxu0 %v33
  %146 = vmatprep.subr.mxu0 0.0
  %147 = vmatpush1.msra.mxu0 %v32
  %148 = vmatprep.subr.mxu0 0.0
  %149 = vmatpush1.msra.mxu0 %v31
  %150 = vmatprep.subr.mxu0 0.0
  %151 = vmatpush2.msra.mxu0 %v62
  %152 = vmatprep.subr.mxu0 0.0
  %153 = vmatpush2.msra.mxu0 %v61
  %154 = vmatprep.subr.mxu0 0.0
  %155 = vmatpush2.msra.mxu0 %v60
  %156 = vmatprep.subr.mxu0 0.0
  %157 = vmatpush2.msra.mxu0 %v59
  %158 = vmatprep.subr.mxu0 0.0
  %159 = vmatpush2.msra.mxu0 %v58
  %160 = vmatprep.subr.mxu0 0.0
  %161 = vmatpush2.msra.mxu0 %v57
  %162 = vmatprep.subr.mxu0 0.0
  %163 = vmatpush2.msra.mxu0 %v56
  %164 = vmatprep.subr.mxu0 0.0
  %165 = vmatpush2.msra.mxu0 %v55
  %166 = vmatprep.subr.mxu0 0.0
  %167 = vmatpush2.msra.mxu0 %v54
  %168 = vmatprep.subr.mxu0 0.0
  %169 = vmatpush2.msra.mxu0 %v53
  %170 = vmatprep.subr.mxu0 0.0
  %171 = vmatpush2.msra.mxu0 %v52
  %172 = vmatprep.subr.mxu0 0.0
  %173 = vmatpush2.msra.mxu0 %v51
  %174 = vmatprep.subr.mxu0 0.0
  %175 = vmatpush2.msra.mxu0 %v50
  %176 = vmatprep.subr.mxu0 0.0
  %177 = vmatpush2.msra.mxu0 %v49
  %178 = vmatprep.subr.mxu0 0.0
  %179 = vmatpush2.msra.mxu0 %v48
  %180 = vmatprep.subr.mxu0 0.0
  %181 = vmatpush2.msra.mxu0 %v47
  %182 = vmatprep.mubr.f32.mxu0 %v27
  %183 = vmatmul.mubr.f32.gmra.mxu0 %v26
  %v184 = vpop.f32.mrf.mxu0
  %v185 = vadd.f32 %v116, %v184
  %v186 = vpop.f32.mrf.mxu0
  %187 = vdwg.mxu0
  %188 = vmatprep.subr.mxu0 0.0
  %189 = vmatpush1.msra.mxu0 %v78
  %190 = vmatprep.subr.mxu0 0.0
  %191 = vmatpush1.msra.mxu0 %v77
  %192 = vmatprep.subr.mxu0 0.0
  %193 = vmatpush1.msra.mxu0 %v76
  %194 = vmatprep.subr.mxu0 0.0
  %195 = vmatpush1.msra.mxu0 %v75
  %196 = vmatprep.subr.mxu0 0.0
  %197 = vmatpush1.msra.mxu0 %v74
  %198 = vmatprep.subr.mxu0 0.0
  %199 = vmatpush1.msra.mxu0 %v73
  %200 = vmatprep.subr.mxu0 0.0
  %201 = vmatpush1.msra.mxu0 %v72
  %202 = vmatprep.subr.mxu0 0.0
  %203 = vmatpush1.msra.mxu0 %v71
  %204 = vmatprep.subr.mxu0 0.0
  %205 = vmatpush1.msra.mxu0 %v70
  %206 = vmatprep.subr.mxu0 0.0
  %207 = vmatpush1.msra.mxu0 %v69
  %208 = vmatprep.subr.mxu0 0.0
  %209 = vmatpush1.msra.mxu0 %v68
  %210 = vmatprep.subr.mxu0 0.0
  %211 = vmatpush1.msra.mxu0 %v67
  %212 = vmatprep.subr.mxu0 0.0
  %213 = vmatpush1.msra.mxu0 %v66
  %214 = vmatprep.subr.mxu0 0.0
  %215 = vmatpush1.msra.mxu0 %v65
  %216 = vmatprep.subr.mxu0 0.0
  %217 = vmatpush1.msra.mxu0 %v64
  %218 = vmatprep.subr.mxu0 0.0
  %219 = vmatpush1.msra.mxu0 %v63
  %220 = vmatprep.subr.mxu0 0.0
  %221 = vmatpush2.msra.mxu0 %v94
  %222 = vmatprep.subr.mxu0 0.0
  %223 = vmatpush2.msra.mxu0 %v93
  %224 = vmatprep.subr.mxu0 0.0
  %225 = vmatpush2.msra.mxu0 %v92
  %226 = vmatprep.subr.mxu0 0.0
  %227 = vmatpush2.msra.mxu0 %v91
  %228 = vmatprep.subr.mxu0 0.0
  %229 = vmatpush2.msra.mxu0 %v90
  %230 = vmatprep.subr.mxu0 0.0
  %231 = vmatpush2.msra.mxu0 %v89
  %232 = vmatprep.subr.mxu0 0.0
  %233 = vmatpush2.msra.mxu0 %v88
  %234 = vmatprep.subr.mxu0 0.0
  %235 = vmatpush2.msra.mxu0 %v87
  %236 = vmatprep.subr.mxu0 0.0
  %237 = vmatpush2.msra.mxu0 %v86
  %238 = vmatprep.subr.mxu0 0.0
  %239 = vmatpush2.msra.mxu0 %v85
  %240 = vmatprep.subr.mxu0 0.0
  %241 = vmatpush2.msra.mxu0 %v84
  %242 = vmatprep.subr.mxu0 0.0
  %243 = vmatpush2.msra.mxu0 %v83
  %244 = vmatprep.subr.mxu0 0.0
  %245 = vmatpush2.msra.mxu0 %v82
  %246 = vmatprep.subr.mxu0 0.0
  %247 = vmatpush2.msra.mxu0 %v81
  %248 = vmatprep.subr.mxu0 0.0
  %249 = vmatpush2.msra.mxu0 %v80
  %250 = vmatprep.subr.mxu0 0.0
  %251 = vmatpush2.msra.mxu0 %v79
  %252 = vmatprep.mubr.f32.mxu0 %v29
  %253 = vmatmul.mubr.f32.gmra.mxu0 %v28
  %v254 = vpop.f32.mrf.mxu0
  %v255 = vadd.f32 %v185, %v254
  %v256 = vpop.f32.mrf.mxu0
  %257 = vdwg.mxu0
  %258 = vmatprep.subr.mxu0 0.0
  %259 = vmatpush1.msra.mxu0 %v110
  %260 = vmatprep.subr.mxu0 0.0
  %261 = vmatpush1.msra.mxu0 %v109
  %262 = vmatprep.subr.mxu0 0.0
  %263 = vmatpush1.msra.mxu0 %v108
  %264 = vmatprep.subr.mxu0 0.0
  %265 = vmatpush1.msra.mxu0 %v107
  %266 = vmatprep.subr.mxu0 0.0
  %267 = vmatpush1.msra.mxu0 %v106
  %268 = vmatprep.subr.mxu0 0.0
  %269 = vmatpush1.msra.mxu0 %v105
  %270 = vmatprep.subr.mxu0 0.0
  %271 = vmatpush1.msra.mxu0 %v104
  %272 = vmatprep.subr.mxu0 0.0
  %273 = vmatpush1.msra.mxu0 %v103
  %274 = vmatprep.subr.mxu0 0.0
  %275 = vmatpush1.msra.mxu0 %v102
  %276 = vmatprep.subr.mxu0 0.0
  %277 = vmatpush1.msra.mxu0 %v101
  %278 = vmatprep.subr.mxu0 0.0
  %279 = vmatpush1.msra.mxu0 %v100
  %280 = vmatprep.subr.mxu0 0.0
  %281 = vmatpush1.msra.mxu0 %v99
  %282 = vmatprep.subr.mxu0 0.0
  %283 = vmatpush1.msra.mxu0 %v98
  %284 = vmatprep.subr.mxu0 0.0
  %285 = vmatpush1.msra.mxu0 %v97
  %286 = vmatprep.subr.mxu0 0.0
  %287 = vmatpush1.msra.mxu0 %v96
  %288 = vmatprep.subr.mxu0 0.0
  %289 = vmatpush1.msra.mxu0 %v95
  %290 = vmatprep.subr.mxu0 0.0
  %291 = vmatpush2.msra.mxu0 0.0
  %292 = vmatprep.subr.mxu0 0.0
  %293 = vmatpush2.msra.mxu0 0.0
  %294 = vmatprep.subr.mxu0 0.0
  %295 = vmatpush2.msra.mxu0 0.0
  %296 = vmatprep.subr.mxu0 0.0
  %297 = vmatpush2.msra.mxu0 0.0
  %298 = vmatprep.subr.mxu0 0.0
  %299 = vmatpush2.msra.mxu0 0.0
  %300 = vmatprep.subr.mxu0 0.0
  %301 = vmatpush2.msra.mxu0 0.0
  %302 = vmatprep.subr.mxu0 0.0
  %303 = vmatpush2.msra.mxu0 0.0
  %304 = vmatprep.subr.mxu0 0.0
  %305 = vmatpush2.msra.mxu0 0.0
  %306 = vmatprep.subr.mxu0 0.0
  %307 = vmatpush2.msra.mxu0 0.0
  %308 = vmatprep.subr.mxu0 0.0
  %309 = vmatpush2.msra.mxu0 0.0
  %310 = vmatprep.subr.mxu0 0.0
  %311 = vmatpush2.msra.mxu0 0.0
  %312 = vmatprep.subr.mxu0 0.0
  %313 = vmatpush2.msra.mxu0 0.0
  %314 = vmatprep.subr.mxu0 0.0
  %315 = vmatpush2.msra.mxu0 0.0
  %316 = vmatprep.subr.mxu0 0.0
  %317 = vmatpush2.msra.mxu0 0.0
  %318 = vmatprep.subr.mxu0 0.0
  %319 = vmatpush2.msra.mxu0 0.0
  %320 = vmatprep.subr.mxu0 0.0
  %321 = vmatpush2.msra.mxu0 0.0
  %322 = vmatprep.mubr.f32.mxu0 0.0
  %323 = vmatmul.mubr.f32.gmra.mxu0 %v30
  %v324 = vpop.f32.mrf.mxu0
  %v325 = vadd.f32 %v255, %v324
  %v326 = vpop.f32.mrf.mxu0
  %327 = vdwg.mxu0
  %v328 = vmax.f32 %v325, 0.0
  %v329 = vld [vmem:[%s3] sm:$0xff]
  %v330 = vld [vmem:[%s3 + $0x8] sm:$0xff]
  %v331 = vld [vmem:[%s3 + $0x10] sm:$0xff]
  %v332 = vld [vmem:[%s3 + $0x18] sm:$0xff]
  %v333 = vld [vmem:[%s3 + $0x20] sm:$0xff]
  %v334 = vld [vmem:[%s3 + $0x28] sm:$0xff]
  %v335 = vld [vmem:[%s3 + $0x30] sm:$0xff]
  %v336 = vld [vmem:[%s3 + $0x38] sm:$0xff]
  %v337 = vld [vmem:[%s3 + $0x40] sm:$0xff]
  %v338 = vld [vmem:[%s3 + $0x48] sm:$0xff]
  %v339 = vld [vmem:[%s3 + $0x50] sm:$0xff]
  %v340 = vld [vmem:[%s3 + $0x58] sm:$0xff]
  %v341 = vld [vmem:[%s3 + $0x60] sm:$0xff]
  %v342 = vld [vmem:[%s3 + $0x68] sm:$0xff]
  %v343 = vld [vmem:[%s3 + $0x70] sm:$0xff]
  %v344 = vld [vmem:[%s4] sm:$0x1]
  %v346 = vlaneseq
  %v347 = vshrl.u32 %v346, 7
  %v348 = vsub.s32 0, %v347
  %v349 = vrot.slane %v344, %v348
  %vm351 = vcmask 982016
  %v353 = vsel %vm351, %v328, 0
  %355 = vmatprep.subr.mxu0 0.0
  %356 = vmatpush1.msra.mxu0 0.0
  %357 = vmatprep.subr.mxu0 0.0
  %358 = vmatpush1.msra.mxu0 %v343
  %359 = vmatprep.subr.mxu0 0.0
  %360 = vmatpush1.msra.mxu0 %v342
  %361 = vmatprep.subr.mxu0 0.0
  %362 = vmatpush1.msra.mxu0 %v341
  %363 = vmatprep.subr.mxu0 0.0
  %364 = vmatpush1.msra.mxu0 %v340
  %365 = vmatprep.subr.mxu0 0.0
  %366 = vmatpush1.msra.mxu0 %v339
  %367 = vmatprep.subr.mxu0 0.0
  %368 = vmatpush1.msra.mxu0 %v338
  %369 = vmatprep.subr.mxu0 0.0
  %370 = vmatpush1.msra.mxu0 %v337
  %371 = vmatprep.subr.mxu0 0.0
  %372 = vmatpush1.msra.mxu0 %v336
  %373 = vmatprep.subr.mxu0 0.0
  %374 = vmatpush1.msra.mxu0 %v335
  %375 = vmatprep.subr.mxu0 0.0
  %376 = vmatpush1.msra.mxu0 %v334
  %377 = vmatprep.subr.mxu0 0.0
  %378 = vmatpush1.msra.mxu0 %v333
  %379 = vmatprep.subr.mxu0 0.0
  %380 = vmatpush1.msra.mxu0 %v332
  %381 = vmatprep.subr.mxu0 0.0
  %382 = vmatpush1.msra.mxu0 %v331
  %383 = vmatprep.subr.mxu0 0.0
  %384 = vmatpush1.msra.mxu0 %v330
  %385 = vmatprep.subr.mxu0 0.0
  %386 = vmatpush1.msra.mxu0 %v329
  %387 = vmatprep.subr.mxu0 0.0
  %388 = vmatpush2.msra.mxu0 0.0
  %389 = vmatprep.subr.mxu0 0.0
  %390 = vmatpush2.msra.mxu0 0.0
  %391 = vmatprep.subr.mxu0 0.0
  %392 = vmatpush2.msra.mxu0 0.0
  %393 = vmatprep.subr.mxu0 0.0
  %394 = vmatpush2.msra.mxu0 0.0
  %395 = vmatprep.subr.mxu0 0.0
  %396 = vmatpush2.msra.mxu0 0.0
  %397 = vmatprep.subr.mxu0 0.0
  %398 = vmatpush2.msra.mxu0 0.0
  %399 = vmatprep.subr.mxu0 0.0
  %400 = vmatpush2.msra.mxu0 0.0
  %401 = vmatprep.subr.mxu0 0.0
  %402 = vmatpush2.msra.mxu0 0.0
  %403 = vmatprep.subr.mxu0 0.0
  %404 = vmatpush2.msra.mxu0 0.0
  %405 = vmatprep.subr.mxu0 0.0
  %406 = vmatpush2.msra.mxu0 0.0
  %407 = vmatprep.subr.mxu0 0.0
  %408 = vmatpush2.msra.mxu0 0.0
  %409 = vmatprep.subr.mxu0 0.0
  %410 = vmatpush2.msra.mxu0 0.0
  %411 = vmatprep.subr.mxu0 0.0
  %412 = vmatpush2.msra.mxu0 0.0
  %413 = vmatprep.subr.mxu0 0.0
  %414 = vmatpush2.msra.mxu0 0.0
  %415 = vmatprep.subr.mxu0 0.0
  %416 = vmatpush2.msra.mxu0 0.0
  %417 = vmatprep.subr.mxu0 0.0
  %418 = vmatpush2.msra.mxu0 0.0
  %419 = vmatprep.mubr.f32.mxu0 0.0
  %420 = vmatmul.mubr.f32.gmra.mxu0 %v353
  %v421 = vpop.f32.mrf.mxu0
  %v422 = vadd.f32 %v349, %v421
  %v423 = vpop.f32.mrf.mxu0
  %424 = vdwg.mxu0
  %v425 = vmax.f32 %v422, 0.0
  %v426 = vld [vmem:[%s5] sm:$0xff]
  %v427 = vld [vmem:[%s5 + $0x8] sm:$0xff]
  %v428 = vld [vmem:[%s5 + $0x10] sm:$0xff]
  %v429 = vld [vmem:[%s5 + $0x18] sm:$0xff]
  %v430 = vld [vmem:[%s5 + $0x20] sm:$0xff]
  %v431 = vld [vmem:[%s5 + $0x28] sm:$0xff]
  %v432 = vld [vmem:[%s5 + $0x30] sm:$0xff]
  %v433 = vld [vmem:[%s5 + $0x38] sm:$0xff]
  %v434 = vld [vmem:[%s5 + $0x40] sm:$0xff]
  %v435 = vld [vmem:[%s5 + $0x48] sm:$0xff]
  %v436 = vld [vmem:[%s5 + $0x50] sm:$0xf]
  %v437 = vld [vmem:[%s6] sm:$0x1]
  %v439 = vlaneseq
  %v440 = vshrl.u32 %v439, 7
  %v441 = vsub.s32 0, %v440
  %v442 = vrot.slane %v437, %v441
  %vm444 = vcmask 687104
  %v446 = vsel %vm444, %v425, 0
  %vm448 = vcmask 1043456
  %v450 = vsel %vm448, %v436, 0
  %452 = vmatprep.subr.mxu0 0.0
  %453 = vmatpush1.msra.mxu0 0.0
  %454 = vmatprep.subr.mxu0 0.0
  %455 = vmatpush1.msra.mxu0 0.0
  %456 = vmatprep.subr.mxu0 0.0
  %457 = vmatpush1.msra.mxu0 0.0
  %458 = vmatprep.subr.mxu0 0.0
  %459 = vmatpush1.msra.mxu0 0.0
  %460 = vmatprep.subr.mxu0 0.0
  %461 = vmatpush1.msra.mxu0 0.0
  %462 = vmatprep.subr.mxu0 0.0
  %463 = vmatpush1.msra.mxu0 %v450
  %464 = vmatprep.subr.mxu0 0.0
  %465 = vmatpush1.msra.mxu0 %v435
  %466 = vmatprep.subr.mxu0 0.0
  %467 = vmatpush1.msra.mxu0 %v434
  %468 = vmatprep.subr.mxu0 0.0
  %469 = vmatpush1.msra.mxu0 %v433
  %470 = vmatprep.subr.mxu0 0.0
  %471 = vmatpush1.msra.mxu0 %v432
  %472 = vmatprep.subr.mxu0 0.0
  %473 = vmatpush1.msra.mxu0 %v431
  %474 = vmatprep.subr.mxu0 0.0
  %475 = vmatpush1.msra.mxu0 %v430
  %476 = vmatprep.subr.mxu0 0.0
  %477 = vmatpush1.msra.mxu0 %v429
  %478 = vmatprep.subr.mxu0 0.0
  %479 = vmatpush1.msra.mxu0 %v428
  %480 = vmatprep.subr.mxu0 0.0
  %481 = vmatpush1.msra.mxu0 %v427
  %482 = vmatprep.subr.mxu0 0.0
  %483 = vmatpush1.msra.mxu0 %v426
  %484 = vmatprep.subr.mxu0 0.0
  %485 = vmatpush2.msra.mxu0 0.0
  %486 = vmatprep.subr.mxu0 0.0
  %487 = vmatpush2.msra.mxu0 0.0
  %488 = vmatprep.subr.mxu0 0.0
  %489 = vmatpush2.msra.mxu0 0.0
  %490 = vmatprep.subr.mxu0 0.0
  %491 = vmatpush2.msra.mxu0 0.0
  %492 = vmatprep.subr.mxu0 0.0
  %493 = vmatpush2.msra.mxu0 0.0
  %494 = vmatprep.subr.mxu0 0.0
  %495 = vmatpush2.msra.mxu0 0.0
  %496 = vmatprep.subr.mxu0 0.0
  %497 = vmatpush2.msra.mxu0 0.0
  %498 = vmatprep.subr.mxu0 0.0
  %499 = vmatpush2.msra.mxu0 0.0
  %500 = vmatprep.subr.mxu0 0.0
  %501 = vmatpush2.msra.mxu0 0.0
  %502 = vmatprep.subr.mxu0 0.0
  %503 = vmatpush2.msra.mxu0 0.0
  %504 = vmatprep.subr.mxu0 0.0
  %505 = vmatpush2.msra.mxu0 0.0
  %506 = vmatprep.subr.mxu0 0.0
  %507 = vmatpush2.msra.mxu0 0.0
  %508 = vmatprep.subr.mxu0 0.0
  %509 = vmatpush2.msra.mxu0 0.0
  %510 = vmatprep.subr.mxu0 0.0
  %511 = vmatpush2.msra.mxu0 0.0
  %512 = vmatprep.subr.mxu0 0.0
  %513 = vmatpush2.msra.mxu0 0.0
  %514 = vmatprep.subr.mxu0 0.0
  %515 = vmatpush2.msra.mxu0 0.0
  %516 = vmatprep.mubr.f32.mxu0 0.0
  %517 = vmatmul.mubr.f32.gmra.mxu0 %v446
  %v518 = vpop.f32.mrf.mxu0
  %v519 = vadd.f32 %v442, %v518
  %v520 = vpop.f32.mrf.mxu0
  %521 = vdwg.mxu0
  %522 = vrot.lane.b32.xlu0 %v425, 10
  %v523 = vpop.permute.xlu0 %522
  %vm525 = vcmask 80896
  %v526 = vsel %vm525, %v519, %v523
  %vm527 = vcmask 769024
  %v528 = vsel %vm527, %v526, 0.0
  %529 = vst [vmem:[%s7] sm:$0xff] %v528
  // Predicated region
  $region30: #{cnn_forward.5} parent=0 // pred_check
    _
  $region31: #{cnn_forward.5} parent=0 // pred_check_branch
    %531 = sbr.rel (0) target = $region33
  $region32: #{cnn_forward.5} parent=0 // pred_region
    _
  $region33: #{cnn_forward.5} parent=0 // pred_fallthru
    _
  // Predicated region
  $region34: #{cnn_forward.5} parent=0 // pred_check
    _
  $region35: #{cnn_forward.5} parent=0 // pred_check_branch
    %533 = sbr.rel (0) target = $region37
  $region36: #{cnn_forward.5} parent=0 // pred_region
    _
  $region37: #{cnn_forward.5} parent=0 // pred_fallthru
    _

</llo_original>
